<compile_context>
chip_gen: v7x
topology: tpu7x:2x2x1
jax: 0.10.0
libtpu: 0.0.40
codegen_flags: <defaults>
</compile_context>

<pallas_src>
import functools
import math

import jax
import jax.numpy as jnp
from jax.experimental import pallas as pl
from jax.experimental.pallas import tpu as pltpu


_NEG_INF = -1e30              # finite "minus infinity" keeps masked math NaN-free
_LANES = 128
_VMEM_LIMIT = 48 * 1024 * 1024


# ---------------------------------------------------------------------------
# Kernel 1: linear projection  (M, K) @ (K, N) -> (M, N)
#   bf16 operands, f32 MXU accumulation, weight VMEM-resident (constant block
#   index -> DMA'd from HBM exactly once per call).
# ---------------------------------------------------------------------------
def _linear_kernel(x_ref, w_ref, o_ref):
    o_ref[...] = jnp.dot(
        x_ref[...], w_ref[...], preferred_element_type=jnp.float32
    ).astype(o_ref.dtype)


def _pick_tile_m(m, target=256, min_programs=4):
    """Largest row tile <= target that still gives >= min_programs grid steps."""
    cands = [t for t in (1024, 512, 256, 128, 64, 32, 16, 8) if t <= m and m % t == 0]
    if not cands:
        return m
    for t in cands:
        if t <= target and m // t >= min_programs:
            return t
    return cands[-1]


def linear_pallas(x, w_t, *, out_dtype=None, tm=256):
    """x: (M, K); w_t: (K, N) = nn.Linear weight pre-transposed. Returns (M, N)."""
    M, K = x.shape
    Kw, N = w_t.shape
    assert K == Kw
    out_dtype = out_dtype if out_dtype is not None else x.dtype
    x = x.astype(jnp.bfloat16)
    w_t = w_t.astype(jnp.bfloat16)
    tile_m = _pick_tile_m(M, target=tm)

    # TODO(synk): single-buffer the VMEM-resident weight via
    # pipeline_mode=pl.Buffered(1) when targeting v7x with very large weights;
    # with bf16 weights the default double buffer already fits comfortably.
    return pl.pallas_call(
        _linear_kernel,
        out_shape=jax.ShapeDtypeStruct((M, N), out_dtype),
        grid_spec=pltpu.PrefetchScalarGridSpec(
            num_scalar_prefetch=0,
            grid=(M // tile_m,),
            in_specs=[
                pl.BlockSpec((tile_m, K), lambda i: (i, 0)),
                # constant block index -> weight fetched from HBM once
                pl.BlockSpec((K, N), lambda i: (0, 0)),
            ],
            out_specs=pl.BlockSpec((tile_m, N), lambda i: (i, 0)),
        ),
        compiler_params=pltpu.CompilerParams(
            dimension_semantics=("parallel",),
            vmem_limit_bytes=_VMEM_LIMIT,
        ),
    )(x, w_t)


# ---------------------------------------------------------------------------
# Kernel 2: flash attention with fused RoPE, segment-id block-diagonal mask,
#           two heads packed per 128-lane block, f32 online softmax.
# ---------------------------------------------------------------------------
def _rotate_half_packed(x, head_dim, n_packed):
    """HF rotate_half applied independently to each of the n_packed heads laid
    out side by side along the lane axis of x: (rows, n_packed * head_dim)."""
    h = head_dim // 2
    parts = []
    for i in range(n_packed):
        lo = i * head_dim
        parts.append(-x[:, lo + h: lo + head_dim])
        parts.append(x[:, lo: lo + h])
    return jnp.concatenate(parts, axis=-1)


def _flash_attn_kernel(qmm_ref, kmm_ref,                      # scalar prefetch (SMEM)
                       q_ref, k_ref, v_ref,                   # (1, t, 2*hd) bf16
                       qseg_ref, kvseg_ref,                   # (1,tq,128)/(1,8,tk) i32
                       cos_ref, sin_ref,                      # (P, 2*hd) f32, resident
                       o_ref,                                 # (1, tq, 2*hd) bf16
                       qrot_sc, m_sc, l_sc, acc_sc,           # VMEM scratch
                       *, scale, head_dim, n_packed, tq, tk):
    b = pl.program_id(0)
    qi = pl.program_id(2)
    ki = pl.program_id(3)
    nq = pl.num_programs(2)
    nk = pl.num_programs(3)

    # Tile-level block-diagonal sparsity: segments are contiguous id ranges, so
    # a (qi, ki) tile is live iff the [min, max] segment ranges overlap.
    q_row = b * nq + qi
    k_row = b * nk + ki
    live = jnp.logical_and(qmm_ref[q_row, 0] <= kmm_ref[k_row, 1],
                           kmm_ref[k_row, 0] <= qmm_ref[q_row, 1])

    @pl.when(ki == 0)
    def _init():
        m_sc[...] = jnp.full_like(m_sc, _NEG_INF)
        l_sc[...] = jnp.zeros_like(l_sc)
        acc_sc[...] = jnp.zeros_like(acc_sc)
        # RoPE + softmax scale on the q tile, once per (b, head-pair, qi).
        row0 = pl.multiple_of(qi * tq, tq)
        cos_q = cos_ref[pl.ds(row0, tq), :]
        sin_q = sin_ref[pl.ds(row0, tq), :]
        q = q_ref[0].astype(jnp.float32)
        q = (q * cos_q + _rotate_half_packed(q, head_dim, n_packed) * sin_q) * scale
        for h in range(n_packed):
            qrot_sc[h] = q[:, h * head_dim:(h + 1) * head_dim].astype(qrot_sc.dtype)

    @pl.when(live)
    def _compute():
        row0 = pl.multiple_of(ki * tk, tk)
        cos_k = cos_ref[pl.ds(row0, tk), :]
        sin_k = sin_ref[pl.ds(row0, tk), :]
        k = k_ref[0].astype(jnp.float32)
        k = k * cos_k + _rotate_half_packed(k, head_dim, n_packed) * sin_k
        k = k.astype(jnp.bfloat16)
        v = v_ref[0]                                          # (tk, 2*hd) bf16

        # (tq, 1) == (1, tk)  ->  (tq, tk) same-image mask, shared by both heads
        mask = qseg_ref[0][:, :1] == kvseg_ref[0][:1, :]

        for h in range(n_packed):
            sl = slice(h * head_dim, (h + 1) * head_dim)
            s = jax.lax.dot_general(
                qrot_sc[h], k[:, sl], (((1,), (1,)), ((), ())),
                preferred_element_type=jnp.float32)           # (tq, tk)
            s = jnp.where(mask, s, _NEG_INF)
            m_prev = m_sc[h]
            m_new = jnp.maximum(m_prev, jnp.max(s, axis=-1, keepdims=True))
            alpha = jnp.exp(m_prev - m_new)
            p = jnp.exp(s - m_new)
            l_sc[h] = alpha * l_sc[h] + jnp.sum(p, axis=-1, keepdims=True)
            acc_sc[h] = alpha * acc_sc[h] + jax.lax.dot_general(
                p.astype(v.dtype), v[:, sl], (((1,), (0,)), ((), ())),
                preferred_element_type=jnp.float32)
            m_sc[h] = m_new

    @pl.when(ki == nk - 1)
    def _finalize():
        outs = [acc_sc[h] * pl.reciprocal(l_sc[h], approx=True)
                for h in range(n_packed)]
        o_ref[0] = jnp.concatenate(outs, axis=-1).astype(o_ref.dtype)


def mha_pallas(qkv, segment_ids, cos, sin, *, num_heads, head_dim,
               tq=256, tk=512):
    """qkv: (B, P, 3*D) packed q|k|v projections.  segment_ids: (B, P) int32
    per-patch image ids (Pixtral's block-diagonal mask).  cos/sin: (P, hd)."""
    B, P, three_d = qkv.shape
    D = three_d // 3
    assert D == num_heads * head_dim

    n_packed = max(1, _LANES // head_dim)        # heads per grid step
    while n_packed > 1 and num_heads % n_packed:
        n_packed -= 1
    lw = n_packed * head_dim                     # lane width of one block
    assert lw % _LANES == 0, "head_dim * packed-heads must be a multiple of 128"

    tq = min(tq, P)
    tk = min(tk, P)
    assert P % tq == 0 and P % tk == 0, "patch count must divide the tiles"
    nq, nk = P // tq, P // tk
    scale = 1.0 / math.sqrt(head_dim)

    seg = segment_ids.astype(jnp.int32)
    q_seg = jnp.broadcast_to(seg[:, :, None], (B, P, _LANES))   # lane-replicated
    kv_seg = jnp.broadcast_to(seg[:, None, :], (B, 8, P))       # sublane-replicated

    seg_q = seg.reshape(B, nq, tq)
    seg_k = seg.reshape(B, nk, tk)
    qmm = jnp.stack([seg_q.min(-1), seg_q.max(-1)], axis=-1).reshape(B * nq, 2)
    kmm = jnp.stack([seg_k.min(-1), seg_k.max(-1)], axis=-1).reshape(B * nk, 2)

    cos_t = jnp.tile(cos.astype(jnp.float32), (1, n_packed))    # (P, lw)
    sin_t = jnp.tile(sin.astype(jnp.float32), (1, n_packed))

    qkv = qkv.astype(jnp.bfloat16)
    q_blk, k_blk, v_blk = 0, D // lw, 2 * (D // lw)

    kernel = functools.partial(
        _flash_attn_kernel, scale=scale, head_dim=head_dim,
        n_packed=n_packed, tq=tq, tk=tk)

    out = pl.pallas_call(
        kernel,
        out_shape=jax.ShapeDtypeStruct((B, P, D), jnp.bfloat16),
        grid_spec=pltpu.PrefetchScalarGridSpec(
            num_scalar_prefetch=2,
            grid=(B, num_heads // n_packed, nq, nk),
            in_specs=[
                pl.BlockSpec((1, tq, lw), lambda b, h, qi, ki, *_: (b, qi, q_blk + h)),
                pl.BlockSpec((1, tk, lw), lambda b, h, qi, ki, *_: (b, ki, k_blk + h)),
                pl.BlockSpec((1, tk, lw), lambda b, h, qi, ki, *_: (b, ki, v_blk + h)),
                pl.BlockSpec((1, tq, _LANES), lambda b, h, qi, ki, *_: (b, qi, 0)),
                pl.BlockSpec((1, 8, tk), lambda b, h, qi, ki, *_: (b, 0, ki)),
                pl.BlockSpec((P, lw), lambda b, h, qi, ki, *_: (0, 0)),
                pl.BlockSpec((P, lw), lambda b, h, qi, ki, *_: (0, 0)),
            ],
            out_specs=pl.BlockSpec((1, tq, lw), lambda b, h, qi, ki, *_: (b, qi, h)),
            scratch_shapes=[
                pltpu.VMEM((n_packed, tq, head_dim), jnp.bfloat16),  # RoPE'd+scaled q
                pltpu.VMEM((n_packed, tq, 1), jnp.float32),          # running max
                pltpu.VMEM((n_packed, tq, 1), jnp.float32),          # running denom
                pltpu.VMEM((n_packed, tq, head_dim), jnp.float32),   # out accumulator
            ],
        ),
        compiler_params=pltpu.CompilerParams(
            dimension_semantics=("parallel", "parallel", "parallel", "arbitrary"),
            vmem_limit_bytes=_VMEM_LIMIT,
        ),
    )(qmm, kmm, qkv, qkv, qkv, q_seg, kv_seg, cos_t, sin_t)
    return out


# ---------------------------------------------------------------------------
# Full forward (semantics of PixtralHFAttention.forward)
# ---------------------------------------------------------------------------
def pixtral_attention_forward(hidden_states, segment_ids, cos, sin,
                              w_qkv_t, w_o_t, *, num_heads):
    """
    hidden_states : (B, P, D)
    segment_ids   : (B, P) int32 image ids; Pixtral's additive attention_mask
                    is the block-diagonal mask built from per-image patch
                    counts, so segment ids are its compact representation.
    cos, sin      : (P, head_dim) rotary tables
    w_qkv_t       : (D, 3*D)  qkv_proj weight pre-transposed (= W_qkv.T)
    w_o_t         : (D, D)    o_proj  weight pre-transposed  (= W_o.T)
    """
    B, P, D = hidden_states.shape
    head_dim = D // num_heads

    qkv = linear_pallas(hidden_states.reshape(B * P, D), w_qkv_t,
                        out_dtype=jnp.bfloat16)
    qkv = qkv.reshape(B, P, 3 * D)

    o = mha_pallas(qkv, segment_ids, cos, sin,
                   num_heads=num_heads, head_dim=head_dim)     # (B, P, D) bf16

    out = linear_pallas(o.reshape(B * P, D), w_o_t,
                        out_dtype=hidden_states.dtype)
    return out.reshape(B, P, D)


# ---------------------------------------------------------------------------
# Pure-JAX f32 reference (same math as the torch module)
# ---------------------------------------------------------------------------
def _rotate_half(x):
    h = x.shape[-1] // 2
    return jnp.concatenate([-x[..., h:], x[..., :h]], axis=-1)


def _reference_forward(hidden_states, segment_ids, cos, sin, w_qkv, w_o,
                       num_heads):
    B, P, D = hidden_states.shape
    hd = D // num_heads
    qkv = hidden_states @ w_qkv.T
    q, k, v = jnp.split(qkv, 3, axis=-1)

    def heads(t):
        return t.reshape(B, P, num_heads, hd).transpose(0, 2, 1, 3)

    q, k, v = heads(q), heads(k), heads(v)
    c, s = cos[None, None], sin[None, None]
    q = q * c + _rotate_half(q) * s
    k = k * c + _rotate_half(k) * s
    mask = jnp.where(
        segment_ids[:, None, :, None] == segment_ids[:, None, None, :],
        0.0, -1e9)
    scores = jnp.einsum("bhqd,bhkd->bhqk", q, k) / math.sqrt(hd) + mask
    p = jax.nn.softmax(scores, axis=-1)
    o = jnp.einsum("bhqk,bhkd->bhqd", p, v)
    o = o.transpose(0, 2, 1, 3).reshape(B, P, D)
    return (o @ w_o.T).reshape(B, P, D)


# ---------------------------------------------------------------------------
if __name__ == "__main__":
    key = jax.random.PRNGKey(0)
    B, P, D, H = 2, 64, 256, 4            # batch, patches, hidden, heads
    hd = D // H                           # head_dim = 64

    k1, k2, k3 = jax.random.split(key, 3)
    hidden = jax.random.normal(k1, (B, P, D), jnp.float32)

    bound = 1.0 / math.sqrt(D)            # nn.Linear default init bound
    w_qkv = jax.random.uniform(k2, (3 * D, D), jnp.float32, -bound, bound)
    w_o = jax.random.uniform(k3, (D, D), jnp.float32, -bound, bound)

    # rotary position embeddings (cos, sin) of shape (P, head_dim)
    pos = jnp.arange(P, dtype=jnp.float32)
    inv_freq = 1.0 / (10000.0 ** (jnp.arange(0, hd, 2, dtype=jnp.float32) / hd))
    freqs = pos[:, None] * inv_freq[None, :]
    emb = jnp.concatenate([freqs, freqs], axis=-1)
    cos, sin = jnp.cos(emb), jnp.sin(emb)

    # two packed "images" per sequence -> block-diagonal attention
    seg0 = jnp.concatenate([jnp.zeros(40, jnp.int32), jnp.ones(24, jnp.int32)])
    seg1 = jnp.concatenate([jnp.zeros(16, jnp.int32), jnp.ones(48, jnp.int32)])
    segment_ids = jnp.stack([seg0, seg1])              # (B, P)

    fwd = jax.jit(functools.partial(pixtral_attention_forward, num_heads=H))
    out = fwd(hidden, segment_ids, cos, sin, w_qkv.T, w_o.T)
    out = jax.block_until_ready(out)

    ref = _reference_forward(hidden, segment_ids, cos, sin, w_qkv, w_o, H)
    assert out.shape == (B, P, D) and out.dtype == hidden.dtype
    err_max = float(jnp.max(jnp.abs(out - ref)))
    err_mean = float(jnp.mean(jnp.abs(out - ref)))
    # Tolerances account for bf16 operand rounding in the MXU matmuls
    # (accumulation and softmax statistics stay in f32).
    assert err_max < 5e-2 and err_mean < 5e-3, (err_max, err_mean)

    print("KERNEL_OK")
</pallas_src>

<mosaic_0001>
module attributes {stable_mosaic.version = 11 : i64} {
  func.func @_linear_kernel(%arg0: i32, %arg1: memref<32x256xbf16, #tpu.memory_space<vmem>>, %arg2: memref<256x768xbf16, #tpu.memory_space<vmem>>, %arg3: memref<32x768xbf16, #tpu.memory_space<vmem>>) attributes {dimension_semantics = [#tpu.dimension_semantics<parallel>], iteration_bounds = array<i64: 4>, scalar_prefetch = 0 : i64, scratch_operands = 0 : i64, tpu.core_type = #tpu.core_type<tc>, window_params = [{transform_indices = @transform_0, window_bounds = array<i64: 32, 256>}, {pipeline_mode = #tpu.pipeline_mode<synchronous>, transform_indices = @transform_1, window_bounds = array<i64: 256, 768>}, {transform_indices = @transform_2, window_bounds = array<i64: 32, 768>}]} {
    %c0 = arith.constant 0 : index
    %c0_0 = arith.constant 0 : index
    %0 = vector.load %arg1[%c0, %c0_0] : memref<32x256xbf16, #tpu.memory_space<vmem>>, vector<32x256xbf16>
    %c0_1 = arith.constant 0 : index
    %c0_2 = arith.constant 0 : index
    %1 = vector.load %arg2[%c0_1, %c0_2] : memref<256x768xbf16, #tpu.memory_space<vmem>>, vector<256x768xbf16>
    %cst = arith.constant dense<0.000000e+00> : vector<32x768xf32>
    %2 = tpu.matmul %0, %1, %cst {dimension_numbers = #tpu.dot_dimension_numbers<[1], [0], [0], [1], [0, 0, 1, 1], [], []>} : vector<32x256xbf16>, vector<256x768xbf16>, vector<32x768xf32> -> vector<32x768xf32>
    %3 = arith.truncf %2 : vector<32x768xf32> to vector<32x768xbf16>
    %c0_3 = arith.constant 0 : index
    %c0_4 = arith.constant 0 : index
    %4 = vector.load %arg3[%c0_3, %c0_4] : memref<32x768xbf16, #tpu.memory_space<vmem>>, vector<32x768xbf16>
    tpu.vector_store %arg3[%c0_3, %c0_4], %3 {strides = array<i32>} : memref<32x768xbf16, #tpu.memory_space<vmem>>, vector<32x768xbf16>,
    return
  }
  func.func @transform_0(%arg0: i32) -> (i32, i32) {
    %c0_i32 = arith.constant 0 : i32
    %c0_i32_0 = arith.constant 0 : i32
    return %arg0, %c0_i32 : i32, i32
  }
  func.func @transform_1(%arg0: i32) -> (i32, i32) {
    %c0_i32 = arith.constant 0 : i32
    %c0_i32_0 = arith.constant 0 : i32
    %c0_i32_1 = arith.constant 0 : i32
    return %c0_i32, %c0_i32_0 : i32, i32
  }
  func.func @transform_2(%arg0: i32) -> (i32, i32) {
    %c0_i32 = arith.constant 0 : i32
    %c0_i32_0 = arith.constant 0 : i32
    return %arg0, %c0_i32 : i32, i32
  }
}

module attributes {stable_mosaic.version = 11 : i64} {
  func.func @_linear_kernel(%arg0: i32, %arg1: memref<32x256xbf16, #tpu.memory_space<vmem>>, %arg2: memref<256x256xbf16, #tpu.memory_space<vmem>>, %arg3: memref<32x256xf32, #tpu.memory_space<vmem>>) attributes {dimension_semantics = [#tpu.dimension_semantics<parallel>], iteration_bounds = array<i64: 4>, scalar_prefetch = 0 : i64, scratch_operands = 0 : i64, tpu.core_type = #tpu.core_type<tc>, window_params = [{transform_indices = @transform_0, window_bounds = array<i64: 32, 256>}, {pipeline_mode = #tpu.pipeline_mode<synchronous>, transform_indices = @transform_1, window_bounds = array<i64: 256, 256>}, {transform_indices = @transform_2, window_bounds = array<i64: 32, 256>}]} {
    %c0 = arith.constant 0 : index
    %c0_0 = arith.constant 0 : index
    %0 = vector.load %arg1[%c0, %c0_0] : memref<32x256xbf16, #tpu.memory_space<vmem>>, vector<32x256xbf16>
    %c0_1 = arith.constant 0 : index
    %c0_2 = arith.constant 0 : index
    %1 = vector.load %arg2[%c0_1, %c0_2] : memref<256x256xbf16, #tpu.memory_space<vmem>>, vector<256x256xbf16>
    %cst = arith.constant dense<0.000000e+00> : vector<32x256xf32>
    %2 = tpu.matmul %0, %1, %cst {dimension_numbers = #tpu.dot_dimension_numbers<[1], [0], [0], [1], [0, 0, 1, 1], [], []>} : vector<32x256xbf16>, vector<256x256xbf16>, vector<32x256xf32> -> vector<32x256xf32>
    %c0_3 = arith.constant 0 : index
    %c0_4 = arith.constant 0 : index
    %3 = vector.load %arg3[%c0_3, %c0_4] : memref<32x256xf32, #tpu.memory_space<vmem>>, vector<32x256xf32>
    tpu.vector_store %arg3[%c0_3, %c0_4], %2 {strides = array<i32>} : memref<32x256xf32, #tpu.memory_space<vmem>>, vector<32x256xf32>,
    return
  }
  func.func @transform_0(%arg0: i32) -> (i32, i32) {
    %c0_i32 = arith.constant 0 : i32
    %c0_i32_0 = arith.constant 0 : i32
    return %arg0, %c0_i32 : i32, i32
  }
  func.func @transform_1(%arg0: i32) -> (i32, i32) {
    %c0_i32 = arith.constant 0 : i32
    %c0_i32_0 = arith.constant 0 : i32
    %c0_i32_1 = arith.constant 0 : i32
    return %c0_i32, %c0_i32_0 : i32, i32
  }
  func.func @transform_2(%arg0: i32) -> (i32, i32) {
    %c0_i32 = arith.constant 0 : i32
    %c0_i32_0 = arith.constant 0 : i32
    return %arg0, %c0_i32 : i32, i32
  }
}

module attributes {stable_mosaic.version = 11 : i64} {
  func.func @_flash_attn_kernel(%arg0: i32, %arg1: i32, %arg2: i32, %arg3: i32, %arg4: memref<2x2xi32, #tpu.memory_space<smem>>, %arg5: memref<2x2xi32, #tpu.memory_space<smem>>, %arg6: memref<1x64x128xbf16, #tpu.memory_space<vmem>>, %arg7: memref<1x64x128xbf16, #tpu.memory_space<vmem>>, %arg8: memref<1x64x128xbf16, #tpu.memory_space<vmem>>, %arg9: memref<1x64x128xi32, #tpu.memory_space<vmem>>, %arg10: memref<1x8x64xi32, #tpu.memory_space<vmem>>, %arg11: memref<64x128xf32, #tpu.memory_space<vmem>>, %arg12: memref<64x128xf32, #tpu.memory_space<vmem>>, %arg13: memref<1x64x128xbf16, #tpu.memory_space<vmem>>, %arg14: memref<2x64x64xbf16, #tpu.memory_space<vmem>>, %arg15: memref<2x64x1xf32, #tpu.memory_space<vmem>>, %arg16: memref<2x64x1xf32, #tpu.memory_space<vmem>>, %arg17: memref<2x64x64xf32, #tpu.memory_space<vmem>>) attributes {dimension_semantics = [#tpu.dimension_semantics<parallel>, #tpu.dimension_semantics<parallel>, #tpu.dimension_semantics<parallel>, #tpu.dimension_semantics<arbitrary>], iteration_bounds = array<i64: 2, 2, 1, 1>, scalar_prefetch = 2 : i64, scratch_operands = 4 : i64, tpu.core_type = #tpu.core_type<tc>, window_params = [{transform_indices = @transform_0, window_bounds = array<i64: 1, 64, 128>}, {transform_indices = @transform_1, window_bounds = array<i64: 1, 64, 128>}, {transform_indices = @transform_2, window_bounds = array<i64: 1, 64, 128>}, {transform_indices = @transform_3, window_bounds = array<i64: 1, 64, 128>}, {transform_indices = @transform_4, window_bounds = array<i64: 1, 8, 64>}, {pipeline_mode = #tpu.pipeline_mode<synchronous>, transform_indices = @transform_5, window_bounds = array<i64: 64, 128>}, {pipeline_mode = #tpu.pipeline_mode<synchronous>, transform_indices = @transform_6, window_bounds = array<i64: 64, 128>}, {transform_indices = @transform_7, window_bounds = array<i64: 1, 64, 128>}]} {
    %c1_i32 = arith.constant 1 : i32
    %0 = arith.muli %arg0, %c1_i32 : i32
    %1 = arith.addi %0, %arg2 : i32
    %c1_i32_0 = arith.constant 1 : i32
    %2 = arith.muli %arg0, %c1_i32_0 : i32
    %3 = arith.addi %2, %arg3 : i32
    %4 = arith.index_cast %1 : i32 to index
    %c0 = arith.constant 0 : index
    %5 = memref.load %arg4[%4, %c0] : memref<2x2xi32, #tpu.memory_space<smem>>
    %6 = arith.index_cast %3 : i32 to index
    %c1 = arith.constant 1 : index
    %7 = memref.load %arg5[%6, %c1] : memref<2x2xi32, #tpu.memory_space<smem>>
    %8 = arith.cmpi sle, %5, %7 : i32
    %9 = arith.index_cast %3 : i32 to index
    %c0_1 = arith.constant 0 : index
    %10 = memref.load %arg5[%9, %c0_1] : memref<2x2xi32, #tpu.memory_space<smem>>
    %11 = arith.index_cast %1 : i32 to index
    %c1_2 = arith.constant 1 : index
    %12 = memref.load %arg4[%11, %c1_2] : memref<2x2xi32, #tpu.memory_space<smem>>
    %13 = arith.cmpi sle, %10, %12 : i32
    %14 = arith.andi %8, %13 : i1
    %c0_i32 = arith.constant 0 : i32
    %15 = arith.cmpi eq, %arg3, %c0_i32 : i32
    %16 = arith.extui %15 : i1 to i32
    %c0_i32_3 = arith.constant 0 : i32
    %17 = arith.cmpi ne, %16, %c0_i32_3 : i32
    scf.if %17 {
      %cst = arith.constant -1.000000e+30 : f32
      %23 = vector.broadcast %cst : f32 to vector<2x64x1xf32>
      %c0_7 = arith.constant 0 : index
      %c0_8 = arith.constant 0 : index
      %c0_9 = arith.constant 0 : index
      %24 = vector.load %arg15[%c0_7, %c0_8, %c0_9] : memref<2x64x1xf32, #tpu.memory_space<vmem>>, vector<2x64x1xf32>
      tpu.vector_store %arg15[%c0_7, %c0_8, %c0_9], %23 {strides = array<i32>} : memref<2x64x1xf32, #tpu.memory_space<vmem>>, vector<2x64x1xf32>,
      %cst_10 = arith.constant 0.000000e+00 : f32
      %25 = vector.broadcast %cst_10 : f32 to vector<2x64x1xf32>
      %c0_11 = arith.constant 0 : index
      %c0_12 = arith.constant 0 : index
      %c0_13 = arith.constant 0 : index
      %26 = vector.load %arg16[%c0_11, %c0_12, %c0_13] : memref<2x64x1xf32, #tpu.memory_space<vmem>>, vector<2x64x1xf32>
      tpu.vector_store %arg16[%c0_11, %c0_12, %c0_13], %25 {strides = array<i32>} : memref<2x64x1xf32, #tpu.memory_space<vmem>>, vector<2x64x1xf32>,
      %cst_14 = arith.constant 0.000000e+00 : f32
      %27 = vector.broadcast %cst_14 : f32 to vector<2x64x64xf32>
      %c0_15 = arith.constant 0 : index
      %c0_16 = arith.constant 0 : index
      %c0_17 = arith.constant 0 : index
      %28 = vector.load %arg17[%c0_15, %c0_16, %c0_17] : memref<2x64x64xf32, #tpu.memory_space<vmem>>, vector<2x64x64xf32>
      tpu.vector_store %arg17[%c0_15, %c0_16, %c0_17], %27 {strides = array<i32>} : memref<2x64x64xf32, #tpu.memory_space<vmem>>, vector<2x64x64xf32>,
      %c64_i32 = arith.constant 64 : i32
      %29 = arith.muli %arg2, %c64_i32 : i32
      %30 = tpu.assume_multiple %29, 64 : i32
      %31 = arith.index_cast %30 : i32 to index
      %c0_18 = arith.constant 0 : index
      %32 = vector.load %arg11[%31, %c0_18] : memref<64x128xf32, #tpu.memory_space<vmem>>, vector<64x128xf32>
      %33 = arith.index_cast %30 : i32 to index
      %c0_19 = arith.constant 0 : index
      %34 = vector.load %arg12[%33, %c0_19] : memref<64x128xf32, #tpu.memory_space<vmem>>, vector<64x128xf32>
      %c0_20 = arith.constant 0 : index
      %c0_21 = arith.constant 0 : index
      %c0_22 = arith.constant 0 : index
      %35 = vector.load %arg6[%c0_20, %c0_21, %c0_22] : memref<1x64x128xbf16, #tpu.memory_space<vmem>>, vector<1x64x128xbf16>
      %36 = vector.shape_cast %35 : vector<1x64x128xbf16> to vector<64x128xbf16>
      %37 = arith.extf %36 : vector<64x128xbf16> to vector<64x128xf32>
      %38 = arith.mulf %37, %32 : vector<64x128xf32>
      %39 = vector.extract_strided_slice %37 {offsets = [0, 32], sizes = [64, 32], strides = [1, 1]} : vector<64x128xf32> to vector<64x32xf32>
      %cst_23 = arith.constant 0.000000e+00 : f32
      %40 = vector.broadcast %cst_23 : f32 to vector<64x32xf32>
      %41 = arith.subf %40, %39 : vector<64x32xf32>
      %42 = vector.extract_strided_slice %37 {offsets = [0, 0], sizes = [64, 32], strides = [1, 1]} : vector<64x128xf32> to vector<64x32xf32>
      %43 = vector.extract_strided_slice %37 {offsets = [0, 96], sizes = [64, 32], strides = [1, 1]} : vector<64x128xf32> to vector<64x32xf32>
      %cst_24 = arith.constant 0.000000e+00 : f32
      %44 = vector.broadcast %cst_24 : f32 to vector<64x32xf32>
      %45 = arith.subf %44, %43 : vector<64x32xf32>
      %46 = vector.extract_strided_slice %37 {offsets = [0, 64], sizes = [64, 32], strides = [1, 1]} : vector<64x128xf32> to vector<64x32xf32>
      %47 = tpu.concatenate %41, %42, %45, %46 in 1 : vector<64x32xf32>, vector<64x32xf32>, vector<64x32xf32>, vector<64x32xf32> -> vector<64x128xf32>
      %48 = arith.mulf %47, %34 : vector<64x128xf32>
      %49 = arith.addf %38, %48 : vector<64x128xf32>
      %cst_25 = arith.constant 1.250000e-01 : f32
      %50 = vector.broadcast %cst_25 : f32 to vector<64x128xf32>
      %51 = arith.mulf %49, %50 : vector<64x128xf32>
      %52 = vector.extract_strided_slice %51 {offsets = [0, 0], sizes = [64, 64], strides = [1, 1]} : vector<64x128xf32> to vector<64x64xf32>
      %53 = arith.truncf %52 : vector<64x64xf32> to vector<64x64xbf16>
      %c0_26 = arith.constant 0 : index
      %c0_27 = arith.constant 0 : index
      %c0_28 = arith.constant 0 : index
      %54 = vector.load %arg14[%c0_26, %c0_27, %c0_28] : memref<2x64x64xbf16, #tpu.memory_space<vmem>>, vector<1x64x64xbf16>
      %55 = vector.shape_cast %54 : vector<1x64x64xbf16> to vector<64x64xbf16>
      %56 = vector.shape_cast %53 : vector<64x64xbf16> to vector<1x64x64xbf16>
      tpu.vector_store %arg14[%c0_26, %c0_27, %c0_28], %56 {strides = array<i32>} : memref<2x64x64xbf16, #tpu.memory_space<vmem>>, vector<1x64x64xbf16>,
      %57 = vector.extract_strided_slice %51 {offsets = [0, 64], sizes = [64, 64], strides = [1, 1]} : vector<64x128xf32> to vector<64x64xf32>
      %58 = arith.truncf %57 : vector<64x64xf32> to vector<64x64xbf16>
      %c1_29 = arith.constant 1 : index
      %c0_30 = arith.constant 0 : index
      %c0_31 = arith.constant 0 : index
      %59 = vector.load %arg14[%c1_29, %c0_30, %c0_31] : memref<2x64x64xbf16, #tpu.memory_space<vmem>>, vector<1x64x64xbf16>
      %60 = vector.shape_cast %59 : vector<1x64x64xbf16> to vector<64x64xbf16>
      %61 = vector.shape_cast %58 : vector<64x64xbf16> to vector<1x64x64xbf16>
      tpu.vector_store %arg14[%c1_29, %c0_30, %c0_31], %61 {strides = array<i32>} : memref<2x64x64xbf16, #tpu.memory_space<vmem>>, vector<1x64x64xbf16>,
    } else {
    }
    %18 = arith.extui %14 : i1 to i32
    %c0_i32_4 = arith.constant 0 : i32
    %19 = arith.cmpi ne, %18, %c0_i32_4 : i32
    scf.if %19 {
      %c64_i32 = arith.constant 64 : i32
      %23 = arith.muli %arg3, %c64_i32 : i32
      %24 = tpu.assume_multiple %23, 64 : i32
      %25 = arith.index_cast %24 : i32 to index
      %c0_7 = arith.constant 0 : index
      %26 = vector.load %arg11[%25, %c0_7] : memref<64x128xf32, #tpu.memory_space<vmem>>, vector<64x128xf32>
      %27 = arith.index_cast %24 : i32 to index
      %c0_8 = arith.constant 0 : index
      %28 = vector.load %arg12[%27, %c0_8] : memref<64x128xf32, #tpu.memory_space<vmem>>, vector<64x128xf32>
      %c0_9 = arith.constant 0 : index
      %c0_10 = arith.constant 0 : index
      %c0_11 = arith.constant 0 : index
      %29 = vector.load %arg7[%c0_9, %c0_10, %c0_11] : memref<1x64x128xbf16, #tpu.memory_space<vmem>>, vector<1x64x128xbf16>
      %30 = vector.shape_cast %29 : vector<1x64x128xbf16> to vector<64x128xbf16>
      %31 = arith.extf %30 : vector<64x128xbf16> to vector<64x128xf32>
      %32 = arith.mulf %31, %26 : vector<64x128xf32>
      %33 = vector.extract_strided_slice %31 {offsets = [0, 32], sizes = [64, 32], strides = [1, 1]} : vector<64x128xf32> to vector<64x32xf32>
      %cst = arith.constant 0.000000e+00 : f32
      %34 = vector.broadcast %cst : f32 to vector<64x32xf32>
      %35 = arith.subf %34, %33 : vector<64x32xf32>
      %36 = vector.extract_strided_slice %31 {offsets = [0, 0], sizes = [64, 32], strides = [1, 1]} : vector<64x128xf32> to vector<64x32xf32>
      %37 = vector.extract_strided_slice %31 {offsets = [0, 96], sizes = [64, 32], strides = [1, 1]} : vector<64x128xf32> to vector<64x32xf32>
      %cst_12 = arith.constant 0.000000e+00 : f32
      %38 = vector.broadcast %cst_12 : f32 to vector<64x32xf32>
      %39 = arith.subf %38, %37 : vector<64x32xf32>
      %40 = vector.extract_strided_slice %31 {offsets = [0, 64], sizes = [64, 32], strides = [1, 1]} : vector<64x128xf32> to vector<64x32xf32>
      %41 = tpu.concatenate %35, %36, %39, %40 in 1 : vector<64x32xf32>, vector<64x32xf32>, vector<64x32xf32>, vector<64x32xf32> -> vector<64x128xf32>
      %42 = arith.mulf %41, %28 : vector<64x128xf32>
      %43 = arith.addf %32, %42 : vector<64x128xf32>
      %44 = arith.truncf %43 : vector<64x128xf32> to vector<64x128xbf16>
      %c0_13 = arith.constant 0 : index
      %c0_14 = arith.constant 0 : index
      %c0_15 = arith.constant 0 : index
      %45 = vector.load %arg8[%c0_13, %c0_14, %c0_15] : memref<1x64x128xbf16, #tpu.memory_space<vmem>>, vector<1x64x128xbf16>
      %46 = vector.shape_cast %45 : vector<1x64x128xbf16> to vector<64x128xbf16>
      %c0_16 = arith.constant 0 : index
      %c0_17 = arith.constant 0 : index
      %c0_18 = arith.constant 0 : index
      %47 = vector.load %arg9[%c0_16, %c0_17, %c0_18] : memref<1x64x128xi32, #tpu.memory_space<vmem>>, vector<1x64x128xi32>
      %48 = vector.shape_cast %47 : vector<1x64x128xi32> to vector<64x128xi32>
      %49 = vector.extract_strided_slice %48 {offsets = [0, 0], sizes = [64, 1], strides = [1, 1]} : vector<64x128xi32> to vector<64x1xi32>
      %c0_19 = arith.constant 0 : index
      %c0_20 = arith.constant 0 : index
      %c0_21 = arith.constant 0 : index
      %50 = vector.load %arg10[%c0_19, %c0_20, %c0_21] : memref<1x8x64xi32, #tpu.memory_space<vmem>>, vector<1x8x64xi32>
      %51 = vector.shape_cast %50 : vector<1x8x64xi32> to vector<8x64xi32>
      %52 = vector.extract_strided_slice %51 {offsets = [0, 0], sizes = [1, 64], strides = [1, 1]} : vector<8x64xi32> to vector<1x64xi32>
      %53 = vector.broadcast %49 : vector<64x1xi32> to vector<64x64xi32>
      %54 = vector.broadcast %52 : vector<1x64xi32> to vector<64x64xi32>
      %55 = arith.cmpi eq, %53, %54 : vector<64x64xi32>
      %c0_22 = arith.constant 0 : index
      %c0_23 = arith.constant 0 : index
      %c0_24 = arith.constant 0 : index
      %56 = vector.load %arg14[%c0_22, %c0_23, %c0_24] : memref<2x64x64xbf16, #tpu.memory_space<vmem>>, vector<1x64x64xbf16>
      %57 = vector.shape_cast %56 : vector<1x64x64xbf16> to vector<64x64xbf16>
      %58 = vector.extract_strided_slice %44 {offsets = [0, 0], sizes = [64, 64], strides = [1, 1]} : vector<64x128xbf16> to vector<64x64xbf16>
      %cst_25 = arith.constant dense<0.000000e+00> : vector<64x64xf32>
      %59 = tpu.matmul %57, %58, %cst_25 {dimension_numbers = #tpu.dot_dimension_numbers<[1], [1], [0], [0], [0, 0, 1, 0], [], []>} : vector<64x64xbf16>, vector<64x64xbf16>, vector<64x64xf32> -> vector<64x64xf32>
      %cst_26 = arith.constant -1.000000e+30 : f32
      %60 = vector.broadcast %cst_26 : f32 to vector<64x64xf32>
      %61 = arith.select %55, %59, %60 : vector<64x64xi1>, vector<64x64xf32>
      %c0_27 = arith.constant 0 : index
      %c0_28 = arith.constant 0 : index
      %c0_29 = arith.constant 0 : index
      %62 = vector.load %arg15[%c0_27, %c0_28, %c0_29] : memref<2x64x1xf32, #tpu.memory_space<vmem>>, vector<1x64x1xf32>
      %63 = vector.shape_cast %62 : vector<1x64x1xf32> to vector<64x1xf32>
      %cst_30 = arith.constant dense<0xFF800000> : vector<64xf32>
      %64 = vector.multi_reduction <maximumf>, %61, %cst_30 [1] : vector<64x64xf32> to vector<64xf32>
      %65 = vector.shape_cast %64 : vector<64xf32> to vector<64x1xf32>
      %66 = arith.maximumf %63, %65 : vector<64x1xf32>
      %67 = arith.subf %63, %66 : vector<64x1xf32>
      %68 = math.exp %67 : vector<64x1xf32>
      %69 = vector.broadcast %66 : vector<64x1xf32> to vector<64x64xf32>
      %70 = arith.subf %61, %69 : vector<64x64xf32>
      %71 = math.exp %70 : vector<64x64xf32>
      %c0_31 = arith.constant 0 : index
      %c0_32 = arith.constant 0 : index
      %c0_33 = arith.constant 0 : index
      %72 = vector.load %arg16[%c0_31, %c0_32, %c0_33] : memref<2x64x1xf32, #tpu.memory_space<vmem>>, vector<1x64x1xf32>
      %73 = vector.shape_cast %72 : vector<1x64x1xf32> to vector<64x1xf32>
      %74 = arith.mulf %68, %73 : vector<64x1xf32>
      %cst_34 = arith.constant dense<0.000000e+00> : vector<64xf32>
      %75 = vector.multi_reduction <add>, %71, %cst_34 [1] : vector<64x64xf32> to vector<64xf32>
      %76 = vector.shape_cast %75 : vector<64xf32> to vector<64x1xf32>
      %77 = arith.addf %74, %76 : vector<64x1xf32>
      %c0_35 = arith.constant 0 : index
      %c0_36 = arith.constant 0 : index
      %c0_37 = arith.constant 0 : index
      %78 = vector.load %arg16[%c0_35, %c0_36, %c0_37] : memref<2x64x1xf32, #tpu.memory_space<vmem>>, vector<1x64x1xf32>
      %79 = vector.shape_cast %78 : vector<1x64x1xf32> to vector<64x1xf32>
      %80 = vector.shape_cast %77 : vector<64x1xf32> to vector<1x64x1xf32>
      tpu.vector_store %arg16[%c0_35, %c0_36, %c0_37], %80 {strides = array<i32>} : memref<2x64x1xf32, #tpu.memory_space<vmem>>, vector<1x64x1xf32>,
      %c0_38 = arith.constant 0 : index
      %c0_39 = arith.constant 0 : index
      %c0_40 = arith.constant 0 : index
      %81 = vector.load %arg17[%c0_38, %c0_39, %c0_40] : memref<2x64x64xf32, #tpu.memory_space<vmem>>, vector<1x64x64xf32>
      %82 = vector.shape_cast %81 : vector<1x64x64xf32> to vector<64x64xf32>
      %83 = vector.broadcast %68 : vector<64x1xf32> to vector<64x64xf32>
      %84 = arith.mulf %83, %82 : vector<64x64xf32>
      %85 = arith.truncf %71 : vector<64x64xf32> to vector<64x64xbf16>
      %86 = vector.extract_strided_slice %46 {offsets = [0, 0], sizes = [64, 64], strides = [1, 1]} : vector<64x128xbf16> to vector<64x64xbf16>
      %cst_41 = arith.constant dense<0.000000e+00> : vector<64x64xf32>
      %87 = tpu.matmul %85, %86, %cst_41 {dimension_numbers = #tpu.dot_dimension_numbers<[1], [0], [0], [1], [0, 0, 1, 1], [], []>} : vector<64x64xbf16>, vector<64x64xbf16>, vector<64x64xf32> -> vector<64x64xf32>
      %88 = arith.addf %84, %87 : vector<64x64xf32>
      %c0_42 = arith.constant 0 : index
      %c0_43 = arith.constant 0 : index
      %c0_44 = arith.constant 0 : index
      %89 = vector.load %arg17[%c0_42, %c0_43, %c0_44] : memref<2x64x64xf32, #tpu.memory_space<vmem>>, vector<1x64x64xf32>
      %90 = vector.shape_cast %89 : vector<1x64x64xf32> to vector<64x64xf32>
      %91 = vector.shape_cast %88 : vector<64x64xf32> to vector<1x64x64xf32>
      tpu.vector_store %arg17[%c0_42, %c0_43, %c0_44], %91 {strides = array<i32>} : memref<2x64x64xf32, #tpu.memory_space<vmem>>, vector<1x64x64xf32>,
      %c0_45 = arith.constant 0 : index
      %c0_46 = arith.constant 0 : index
      %c0_47 = arith.constant 0 : index
      %92 = vector.load %arg15[%c0_45, %c0_46, %c0_47] : memref<2x64x1xf32, #tpu.memory_space<vmem>>, vector<1x64x1xf32>
      %93 = vector.shape_cast %92 : vector<1x64x1xf32> to vector<64x1xf32>
      %94 = vector.shape_cast %66 : vector<64x1xf32> to vector<1x64x1xf32>
      tpu.vector_store %arg15[%c0_45, %c0_46, %c0_47], %94 {strides = array<i32>} : memref<2x64x1xf32, #tpu.memory_space<vmem>>, vector<1x64x1xf32>,
      %c1_48 = arith.constant 1 : index
      %c0_49 = arith.constant 0 : index
      %c0_50 = arith.constant 0 : index
      %95 = vector.load %arg14[%c1_48, %c0_49, %c0_50] : memref<2x64x64xbf16, #tpu.memory_space<vmem>>, vector<1x64x64xbf16>
      %96 = vector.shape_cast %95 : vector<1x64x64xbf16> to vector<64x64xbf16>
      %97 = vector.extract_strided_slice %44 {offsets = [0, 64], sizes = [64, 64], strides = [1, 1]} : vector<64x128xbf16> to vector<64x64xbf16>
      %cst_51 = arith.constant dense<0.000000e+00> : vector<64x64xf32>
      %98 = tpu.matmul %96, %97, %cst_51 {dimension_numbers = #tpu.dot_dimension_numbers<[1], [1], [0], [0], [0, 0, 1, 0], [], []>} : vector<64x64xbf16>, vector<64x64xbf16>, vector<64x64xf32> -> vector<64x64xf32>
      %cst_52 = arith.constant -1.000000e+30 : f32
      %99 = vector.broadcast %cst_52 : f32 to vector<64x64xf32>
      %100 = arith.select %55, %98, %99 : vector<64x64xi1>, vector<64x64xf32>
      %c1_53 = arith.constant 1 : index
      %c0_54 = arith.constant 0 : index
      %c0_55 = arith.constant 0 : index
      %101 = vector.load %arg15[%c1_53, %c0_54, %c0_55] : memref<2x64x1xf32, #tpu.memory_space<vmem>>, vector<1x64x1xf32>
      %102 = vector.shape_cast %101 : vector<1x64x1xf32> to vector<64x1xf32>
      %cst_56 = arith.constant dense<0xFF800000> : vector<64xf32>
      %103 = vector.multi_reduction <maximumf>, %100, %cst_56 [1] : vector<64x64xf32> to vector<64xf32>
      %104 = vector.shape_cast %103 : vector<64xf32> to vector<64x1xf32>
      %105 = arith.maximumf %102, %104 : vector<64x1xf32>
      %106 = arith.subf %102, %105 : vector<64x1xf32>
      %107 = math.exp %106 : vector<64x1xf32>
      %108 = vector.broadcast %105 : vector<64x1xf32> to vector<64x64xf32>
      %109 = arith.subf %100, %108 : vector<64x64xf32>
      %110 = math.exp %109 : vector<64x64xf32>
      %c1_57 = arith.constant 1 : index
      %c0_58 = arith.constant 0 : index
      %c0_59 = arith.constant 0 : index
      %111 = vector.load %arg16[%c1_57, %c0_58, %c0_59] : memref<2x64x1xf32, #tpu.memory_space<vmem>>, vector<1x64x1xf32>
      %112 = vector.shape_cast %111 : vector<1x64x1xf32> to vector<64x1xf32>
      %113 = arith.mulf %107, %112 : vector<64x1xf32>
      %cst_60 = arith.constant dense<0.000000e+00> : vector<64xf32>
      %114 = vector.multi_reduction <add>, %110, %cst_60 [1] : vector<64x64xf32> to vector<64xf32>
      %115 = vector.shape_cast %114 : vector<64xf32> to vector<64x1xf32>
      %116 = arith.addf %113, %115 : vector<64x1xf32>
      %c1_61 = arith.constant 1 : index
      %c0_62 = arith.constant 0 : index
      %c0_63 = arith.constant 0 : index
      %117 = vector.load %arg16[%c1_61, %c0_62, %c0_63] : memref<2x64x1xf32, #tpu.memory_space<vmem>>, vector<1x64x1xf32>
      %118 = vector.shape_cast %117 : vector<1x64x1xf32> to vector<64x1xf32>
      %119 = vector.shape_cast %116 : vector<64x1xf32> to vector<1x64x1xf32>
      tpu.vector_store %arg16[%c1_61, %c0_62, %c0_63], %119 {strides = array<i32>} : memref<2x64x1xf32, #tpu.memory_space<vmem>>, vector<1x64x1xf32>,
      %c1_64 = arith.constant 1 : index
      %c0_65 = arith.constant 0 : index
      %c0_66 = arith.constant 0 : index
      %120 = vector.load %arg17[%c1_64, %c0_65, %c0_66] : memref<2x64x64xf32, #tpu.memory_space<vmem>>, vector<1x64x64xf32>
      %121 = vector.shape_cast %120 : vector<1x64x64xf32> to vector<64x64xf32>
      %122 = vector.broadcast %107 : vector<64x1xf32> to vector<64x64xf32>
      %123 = arith.mulf %122, %121 : vector<64x64xf32>
      %124 = arith.truncf %110 : vector<64x64xf32> to vector<64x64xbf16>
      %125 = vector.extract_strided_slice %46 {offsets = [0, 64], sizes = [64, 64], strides = [1, 1]} : vector<64x128xbf16> to vector<64x64xbf16>
      %cst_67 = arith.constant dense<0.000000e+00> : vector<64x64xf32>
      %126 = tpu.matmul %124, %125, %cst_67 {dimension_numbers = #tpu.dot_dimension_numbers<[1], [0], [0], [1], [0, 0, 1, 1], [], []>} : vector<64x64xbf16>, vector<64x64xbf16>, vector<64x64xf32> -> vector<64x64xf32>
      %127 = arith.addf %123, %126 : vector<64x64xf32>
      %c1_68 = arith.constant 1 : index
      %c0_69 = arith.constant 0 : index
      %c0_70 = arith.constant 0 : index
      %128 = vector.load %arg17[%c1_68, %c0_69, %c0_70] : memref<2x64x64xf32, #tpu.memory_space<vmem>>, vector<1x64x64xf32>
      %129 = vector.shape_cast %128 : vector<1x64x64xf32> to vector<64x64xf32>
      %130 = vector.shape_cast %127 : vector<64x64xf32> to vector<1x64x64xf32>
      tpu.vector_store %arg17[%c1_68, %c0_69, %c0_70], %130 {strides = array<i32>} : memref<2x64x64xf32, #tpu.memory_space<vmem>>, vector<1x64x64xf32>,
      %c1_71 = arith.constant 1 : index
      %c0_72 = arith.constant 0 : index
      %c0_73 = arith.constant 0 : index
      %131 = vector.load %arg15[%c1_71, %c0_72, %c0_73] : memref<2x64x1xf32, #tpu.memory_space<vmem>>, vector<1x64x1xf32>
      %132 = vector.shape_cast %131 : vector<1x64x1xf32> to vector<64x1xf32>
      %133 = vector.shape_cast %105 : vector<64x1xf32> to vector<1x64x1xf32>
      tpu.vector_store %arg15[%c1_71, %c0_72, %c0_73], %133 {strides = array<i32>} : memref<2x64x1xf32, #tpu.memory_space<vmem>>, vector<1x64x1xf32>,
    } else {
    }
    %c0_i32_5 = arith.constant 0 : i32
    %20 = arith.cmpi eq, %arg3, %c0_i32_5 : i32
    %21 = arith.extui %20 : i1 to i32
    %c0_i32_6 = arith.constant 0 : i32
    %22 = arith.cmpi ne, %21, %c0_i32_6 : i32
    scf.if %22 {
      %c0_7 = arith.constant 0 : index
      %c0_8 = arith.constant 0 : index
      %c0_9 = arith.constant 0 : index
      %23 = vector.load %arg17[%c0_7, %c0_8, %c0_9] : memref<2x64x64xf32, #tpu.memory_space<vmem>>, vector<1x64x64xf32>
      %24 = vector.shape_cast %23 : vector<1x64x64xf32> to vector<64x64xf32>
      %c0_10 = arith.constant 0 : index
      %c0_11 = arith.constant 0 : index
      %c0_12 = arith.constant 0 : index
      %25 = vector.load %arg16[%c0_10, %c0_11, %c0_12] : memref<2x64x1xf32, #tpu.memory_space<vmem>>, vector<1x64x1xf32>
      %26 = vector.shape_cast %25 : vector<1x64x1xf32> to vector<64x1xf32>
      %27 = tpu.reciprocal %26 {approx = true} : vector<64x1xf32> -> vector<64x1xf32>
      %28 = vector.broadcast %27 : vector<64x1xf32> to vector<64x64xf32>
      %29 = arith.mulf %24, %28 : vector<64x64xf32>
      %c1_13 = arith.constant 1 : index
      %c0_14 = arith.constant 0 : index
      %c0_15 = arith.constant 0 : index
      %30 = vector.load %arg17[%c1_13, %c0_14, %c0_15] : memref<2x64x64xf32, #tpu.memory_space<vmem>>, vector<1x64x64xf32>
      %31 = vector.shape_cast %30 : vector<1x64x64xf32> to vector<64x64xf32>
      %c1_16 = arith.constant 1 : index
      %c0_17 = arith.constant 0 : index
      %c0_18 = arith.constant 0 : index
      %32 = vector.load %arg16[%c1_16, %c0_17, %c0_18] : memref<2x64x1xf32, #tpu.memory_space<vmem>>, vector<1x64x1xf32>
      %33 = vector.shape_cast %32 : vector<1x64x1xf32> to vector<64x1xf32>
      %34 = tpu.reciprocal %33 {approx = true} : vector<64x1xf32> -> vector<64x1xf32>
      %35 = vector.broadcast %34 : vector<64x1xf32> to vector<64x64xf32>
      %36 = arith.mulf %31, %35 : vector<64x64xf32>
      %37 = tpu.concatenate %29, %36 in 1 : vector<64x64xf32>, vector<64x64xf32> -> vector<64x128xf32>
      %38 = arith.truncf %37 : vector<64x128xf32> to vector<64x128xbf16>
      %c0_19 = arith.constant 0 : index
      %c0_20 = arith.constant 0 : index
      %c0_21 = arith.constant 0 : index
      %39 = vector.load %arg13[%c0_19, %c0_20, %c0_21] : memref<1x64x128xbf16, #tpu.memory_space<vmem>>, vector<1x64x128xbf16>
      %40 = vector.shape_cast %39 : vector<1x64x128xbf16> to vector<64x128xbf16>
      %41 = vector.shape_cast %38 : vector<64x128xbf16> to vector<1x64x128xbf16>
      tpu.vector_store %arg13[%c0_19, %c0_20, %c0_21], %41 {strides = array<i32>} : memref<1x64x128xbf16, #tpu.memory_space<vmem>>, vector<1x64x128xbf16>,
    } else {
    }
    return
  }
  func.func @transform_0(%arg0: i32, %arg1: i32, %arg2: i32, %arg3: i32, %arg4: memref<2x2xi32, #tpu.memory_space<smem>>, %arg5: memref<2x2xi32, #tpu.memory_space<smem>>) -> (i32, i32, i32) {
    %c0_i32 = arith.constant 0 : i32
    %0 = arith.addi %c0_i32, %arg1 : i32
    %c0_i32_0 = arith.constant 0 : i32
    return %arg0, %arg2, %0 : i32, i32, i32
  }
  func.func @transform_1(%arg0: i32, %arg1: i32, %arg2: i32, %arg3: i32, %arg4: memref<2x2xi32, #tpu.memory_space<smem>>, %arg5: memref<2x2xi32, #tpu.memory_space<smem>>) -> (i32, i32, i32) {
    %c2_i32 = arith.constant 2 : i32
    %0 = arith.addi %c2_i32, %arg1 : i32
    %c0_i32 = arith.constant 0 : i32
    return %arg0, %arg3, %0 : i32, i32, i32
  }
  func.func @transform_2(%arg0: i32, %arg1: i32, %arg2: i32, %arg3: i32, %arg4: memref<2x2xi32, #tpu.memory_space<smem>>, %arg5: memref<2x2xi32, #tpu.memory_space<smem>>) -> (i32, i32, i32) {
    %c4_i32 = arith.constant 4 : i32
    %0 = arith.addi %c4_i32, %arg1 : i32
    %c0_i32 = arith.constant 0 : i32
    return %arg0, %arg3, %0 : i32, i32, i32
  }
  func.func @transform_3(%arg0: i32, %arg1: i32, %arg2: i32, %arg3: i32, %arg4: memref<2x2xi32, #tpu.memory_space<smem>>, %arg5: memref<2x2xi32, #tpu.memory_space<smem>>) -> (i32, i32, i32) {
    %c0_i32 = arith.constant 0 : i32
    %c0_i32_0 = arith.constant 0 : i32
    return %arg0, %arg2, %c0_i32 : i32, i32, i32
  }
  func.func @transform_4(%arg0: i32, %arg1: i32, %arg2: i32, %arg3: i32, %arg4: memref<2x2xi32, #tpu.memory_space<smem>>, %arg5: memref<2x2xi32, #tpu.memory_space<smem>>) -> (i32, i32, i32) {
    %c0_i32 = arith.constant 0 : i32
    %c0_i32_0 = arith.constant 0 : i32
    return %arg0, %c0_i32, %arg3 : i32, i32, i32
  }
  func.func @transform_5(%arg0: i32, %arg1: i32, %arg2: i32, %arg3: i32, %arg4: memref<2x2xi32, #tpu.memory_space<smem>>, %arg5: memref<2x2xi32, #tpu.memory_space<smem>>) -> (i32, i32) {
    %c0_i32 = arith.constant 0 : i32
    %c0_i32_0 = arith.constant 0 : i32
    %c0_i32_1 = arith.constant 0 : i32
    return %c0_i32, %c0_i32_0 : i32, i32
  }
  func.func @transform_6(%arg0: i32, %arg1: i32, %arg2: i32, %arg3: i32, %arg4: memref<2x2xi32, #tpu.memory_space<smem>>, %arg5: memref<2x2xi32, #tpu.memory_space<smem>>) -> (i32, i32) {
    %c0_i32 = arith.constant 0 : i32
    %c0_i32_0 = arith.constant 0 : i32
    %c0_i32_1 = arith.constant 0 : i32
    return %c0_i32, %c0_i32_0 : i32, i32
  }
  func.func @transform_7(%arg0: i32, %arg1: i32, %arg2: i32, %arg3: i32, %arg4: memref<2x2xi32, #tpu.memory_space<smem>>, %arg5: memref<2x2xi32, #tpu.memory_space<smem>>) -> (i32, i32, i32) {
    %c0_i32 = arith.constant 0 : i32
    return %arg0, %arg2, %arg1 : i32, i32, i32
  }
}

</mosaic_0001>

<llo_original>
// kernel: tile.14
$region0: #{tile.14}
  %s0 = inlined_call_operand.vmem [shape: f32[64,2,64], index: 0, kind: input, shape index: {}]
  %s1 = inlined_call_operand.vmem [shape: f32[64,128], index: 1, kind: output, shape index: {}]
  $region1: #{tile.14} parent=0
    #allocation0 [shape = 'u8[262144]{0}', space=vmem, size = 0x40000, scoped, tag = 'scoped mem for input reshape']
    %s3 = sshllo.u32 0, 2
    %s4 = smul.addr 2, 63
    %s5 = scalar_lea.vmem %s0, %s4
    %v6 = vld [vmem:[%s5] sm:%s3]
    %s7 = scalar_lea.vmem [#allocation0], 504
    %8 = vst [vmem:[%s7] sm:%s3] %v6
    %s9 = smul.addr 2, 62
    %s10 = scalar_lea.vmem %s0, %s9
    %v11 = vld [vmem:[%s10] sm:%s3]
    %s12 = scalar_lea.vmem [#allocation0], 496
    %13 = vst [vmem:[%s12] sm:%s3] %v11
    %s14 = smul.addr 2, 61
    %s15 = scalar_lea.vmem %s0, %s14
    %v16 = vld [vmem:[%s15] sm:%s3]
    %s17 = scalar_lea.vmem [#allocation0], 488
    %18 = vst [vmem:[%s17] sm:%s3] %v16
    %s19 = smul.addr 2, 60
    %s20 = scalar_lea.vmem %s0, %s19
    %v21 = vld [vmem:[%s20] sm:%s3]
    %s22 = scalar_lea.vmem [#allocation0], 480
    %23 = vst [vmem:[%s22] sm:%s3] %v21
    %s24 = smul.addr 2, 59
    %s25 = scalar_lea.vmem %s0, %s24
    %v26 = vld [vmem:[%s25] sm:%s3]
    %s27 = scalar_lea.vmem [#allocation0], 472
    %28 = vst [vmem:[%s27] sm:%s3] %v26
    %s29 = smul.addr 2, 58
    %s30 = scalar_lea.vmem %s0, %s29
    %v31 = vld [vmem:[%s30] sm:%s3]
    %s32 = scalar_lea.vmem [#allocation0], 464
    %33 = vst [vmem:[%s32] sm:%s3] %v31
    %s34 = smul.addr 2, 57
    %s35 = scalar_lea.vmem %s0, %s34
    %v36 = vld [vmem:[%s35] sm:%s3]
    %s37 = scalar_lea.vmem [#allocation0], 456
    %38 = vst [vmem:[%s37] sm:%s3] %v36
    %s39 = smul.addr 2, 56
    %s40 = scalar_lea.vmem %s0, %s39
    %v41 = vld [vmem:[%s40] sm:%s3]
    %s42 = scalar_lea.vmem [#allocation0], 448
    %43 = vst [vmem:[%s42] sm:%s3] %v41
    %s44 = smul.addr 2, 55
    %s45 = scalar_lea.vmem %s0, %s44
    %v46 = vld [vmem:[%s45] sm:%s3]
    %s47 = scalar_lea.vmem [#allocation0], 440
    %48 = vst [vmem:[%s47] sm:%s3] %v46
    %s49 = smul.addr 2, 54
    %s50 = scalar_lea.vmem %s0, %s49
    %v51 = vld [vmem:[%s50] sm:%s3]
    %s52 = scalar_lea.vmem [#allocation0], 432
    %53 = vst [vmem:[%s52] sm:%s3] %v51
    %s54 = smul.addr 2, 53
    %s55 = scalar_lea.vmem %s0, %s54
    %v56 = vld [vmem:[%s55] sm:%s3]
    %s57 = scalar_lea.vmem [#allocation0], 424
    %58 = vst [vmem:[%s57] sm:%s3] %v56
    %s59 = smul.addr 2, 52
    %s60 = scalar_lea.vmem %s0, %s59
    %v61 = vld [vmem:[%s60] sm:%s3]
    %s62 = scalar_lea.vmem [#allocation0], 416
    %63 = vst [vmem:[%s62] sm:%s3] %v61
    %s64 = smul.addr 2, 51
    %s65 = scalar_lea.vmem %s0, %s64
    %v66 = vld [vmem:[%s65] sm:%s3]
    %s67 = scalar_lea.vmem [#allocation0], 408
    %68 = vst [vmem:[%s67] sm:%s3] %v66
    %s69 = smul.addr 2, 50
    %s70 = scalar_lea.vmem %s0, %s69
    %v71 = vld [vmem:[%s70] sm:%s3]
    %s72 = scalar_lea.vmem [#allocation0], 400
    %73 = vst [vmem:[%s72] sm:%s3] %v71
    %s74 = smul.addr 2, 49
    %s75 = scalar_lea.vmem %s0, %s74
    %v76 = vld [vmem:[%s75] sm:%s3]
    %s77 = scalar_lea.vmem [#allocation0], 392
    %78 = vst [vmem:[%s77] sm:%s3] %v76
    %s79 = smul.addr 2, 48
    %s80 = scalar_lea.vmem %s0, %s79
    %v81 = vld [vmem:[%s80] sm:%s3]
    %s82 = scalar_lea.vmem [#allocation0], 384
    %83 = vst [vmem:[%s82] sm:%s3] %v81
    %s84 = smul.addr 2, 47
    %s85 = scalar_lea.vmem %s0, %s84
    %v86 = vld [vmem:[%s85] sm:%s3]
    %s87 = scalar_lea.vmem [#allocation0], 376
    %88 = vst [vmem:[%s87] sm:%s3] %v86
    %s89 = smul.addr 2, 46
    %s90 = scalar_lea.vmem %s0, %s89
    %v91 = vld [vmem:[%s90] sm:%s3]
    %s92 = scalar_lea.vmem [#allocation0], 368
    %93 = vst [vmem:[%s92] sm:%s3] %v91
    %s94 = smul.addr 2, 45
    %s95 = scalar_lea.vmem %s0, %s94
    %v96 = vld [vmem:[%s95] sm:%s3]
    %s97 = scalar_lea.vmem [#allocation0], 360
    %98 = vst [vmem:[%s97] sm:%s3] %v96
    %s99 = smul.addr 2, 44
    %s100 = scalar_lea.vmem %s0, %s99
    %v101 = vld [vmem:[%s100] sm:%s3]
    %s102 = scalar_lea.vmem [#allocation0], 352
    %103 = vst [vmem:[%s102] sm:%s3] %v101
    %s104 = smul.addr 2, 43
    %s105 = scalar_lea.vmem %s0, %s104
    %v106 = vld [vmem:[%s105] sm:%s3]
    %s107 = scalar_lea.vmem [#allocation0], 344
    %108 = vst [vmem:[%s107] sm:%s3] %v106
    %s109 = smul.addr 2, 42
    %s110 = scalar_lea.vmem %s0, %s109
    %v111 = vld [vmem:[%s110] sm:%s3]
    %s112 = scalar_lea.vmem [#allocation0], 336
    %113 = vst [vmem:[%s112] sm:%s3] %v111
    %s114 = smul.addr 2, 41
    %s115 = scalar_lea.vmem %s0, %s114
    %v116 = vld [vmem:[%s115] sm:%s3]
    %s117 = scalar_lea.vmem [#allocation0], 328
    %118 = vst [vmem:[%s117] sm:%s3] %v116
    %s119 = smul.addr 2, 40
    %s120 = scalar_lea.vmem %s0, %s119
    %v121 = vld [vmem:[%s120] sm:%s3]
    %s122 = scalar_lea.vmem [#allocation0], 320
    %123 = vst [vmem:[%s122] sm:%s3] %v121
    %s124 = smul.addr 2, 39
    %s125 = scalar_lea.vmem %s0, %s124
    %v126 = vld [vmem:[%s125] sm:%s3]
    %s127 = scalar_lea.vmem [#allocation0], 312
    %128 = vst [vmem:[%s127] sm:%s3] %v126
    %s129 = smul.addr 2, 38
    %s130 = scalar_lea.vmem %s0, %s129
    %v131 = vld [vmem:[%s130] sm:%s3]
    %s132 = scalar_lea.vmem [#allocation0], 304
    %133 = vst [vmem:[%s132] sm:%s3] %v131
    %s134 = smul.addr 2, 37
    %s135 = scalar_lea.vmem %s0, %s134
    %v136 = vld [vmem:[%s135] sm:%s3]
    %s137 = scalar_lea.vmem [#allocation0], 296
    %138 = vst [vmem:[%s137] sm:%s3] %v136
    %s139 = smul.addr 2, 36
    %s140 = scalar_lea.vmem %s0, %s139
    %v141 = vld [vmem:[%s140] sm:%s3]
    %s142 = scalar_lea.vmem [#allocation0], 288
    %143 = vst [vmem:[%s142] sm:%s3] %v141
    %s144 = smul.addr 2, 35
    %s145 = scalar_lea.vmem %s0, %s144
    %v146 = vld [vmem:[%s145] sm:%s3]
    %s147 = scalar_lea.vmem [#allocation0], 280
    %148 = vst [vmem:[%s147] sm:%s3] %v146
    %s149 = smul.addr 2, 34
    %s150 = scalar_lea.vmem %s0, %s149
    %v151 = vld [vmem:[%s150] sm:%s3]
    %s152 = scalar_lea.vmem [#allocation0], 272
    %153 = vst [vmem:[%s152] sm:%s3] %v151
    %s154 = smul.addr 2, 33
    %s155 = scalar_lea.vmem %s0, %s154
    %v156 = vld [vmem:[%s155] sm:%s3]
    %s157 = scalar_lea.vmem [#allocation0], 264
    %158 = vst [vmem:[%s157] sm:%s3] %v156
    %s159 = smul.addr 2, 32
    %s160 = scalar_lea.vmem %s0, %s159
    %v161 = vld [vmem:[%s160] sm:%s3]
    %s162 = scalar_lea.vmem [#allocation0], 256
    %163 = vst [vmem:[%s162] sm:%s3] %v161
    %s164 = smul.addr 2, 31
    %s165 = scalar_lea.vmem %s0, %s164
    %v166 = vld [vmem:[%s165] sm:%s3]
    %s167 = scalar_lea.vmem [#allocation0], 248
    %168 = vst [vmem:[%s167] sm:%s3] %v166
    %s169 = smul.addr 2, 30
    %s170 = scalar_lea.vmem %s0, %s169
    %v171 = vld [vmem:[%s170] sm:%s3]
    %s172 = scalar_lea.vmem [#allocation0], 240
    %173 = vst [vmem:[%s172] sm:%s3] %v171
    %s174 = smul.addr 2, 29
    %s175 = scalar_lea.vmem %s0, %s174
    %v176 = vld [vmem:[%s175] sm:%s3]
    %s177 = scalar_lea.vmem [#allocation0], 232
    %178 = vst [vmem:[%s177] sm:%s3] %v176
    %s179 = smul.addr 2, 28
    %s180 = scalar_lea.vmem %s0, %s179
    %v181 = vld [vmem:[%s180] sm:%s3]
    %s182 = scalar_lea.vmem [#allocation0], 224
    %183 = vst [vmem:[%s182] sm:%s3] %v181
    %s184 = smul.addr 2, 27
    %s185 = scalar_lea.vmem %s0, %s184
    %v186 = vld [vmem:[%s185] sm:%s3]
    %s187 = scalar_lea.vmem [#allocation0], 216
    %188 = vst [vmem:[%s187] sm:%s3] %v186
    %s189 = smul.addr 2, 26
    %s190 = scalar_lea.vmem %s0, %s189
    %v191 = vld [vmem:[%s190] sm:%s3]
    %s192 = scalar_lea.vmem [#allocation0], 208
    %193 = vst [vmem:[%s192] sm:%s3] %v191
    %s194 = smul.addr 2, 25
    %s195 = scalar_lea.vmem %s0, %s194
    %v196 = vld [vmem:[%s195] sm:%s3]
    %s197 = scalar_lea.vmem [#allocation0], 200
    %198 = vst [vmem:[%s197] sm:%s3] %v196
    %s199 = smul.addr 2, 24
    %s200 = scalar_lea.vmem %s0, %s199
    %v201 = vld [vmem:[%s200] sm:%s3]
    %s202 = scalar_lea.vmem [#allocation0], 192
    %203 = vst [vmem:[%s202] sm:%s3] %v201
    %s204 = smul.addr 2, 23
    %s205 = scalar_lea.vmem %s0, %s204
    %v206 = vld [vmem:[%s205] sm:%s3]
    %s207 = scalar_lea.vmem [#allocation0], 184
    %208 = vst [vmem:[%s207] sm:%s3] %v206
    %s209 = smul.addr 2, 22
    %s210 = scalar_lea.vmem %s0, %s209
    %v211 = vld [vmem:[%s210] sm:%s3]
    %s212 = scalar_lea.vmem [#allocation0], 176
    %213 = vst [vmem:[%s212] sm:%s3] %v211
    %s214 = smul.addr 2, 21
    %s215 = scalar_lea.vmem %s0, %s214
    %v216 = vld [vmem:[%s215] sm:%s3]
    %s217 = scalar_lea.vmem [#allocation0], 168
    %218 = vst [vmem:[%s217] sm:%s3] %v216
    %s219 = smul.addr 2, 20
    %s220 = scalar_lea.vmem %s0, %s219
    %v221 = vld [vmem:[%s220] sm:%s3]
    %s222 = scalar_lea.vmem [#allocation0], 160
    %223 = vst [vmem:[%s222] sm:%s3] %v221
    %s224 = smul.addr 2, 19
    %s225 = scalar_lea.vmem %s0, %s224
    %v226 = vld [vmem:[%s225] sm:%s3]
    %s227 = scalar_lea.vmem [#allocation0], 152
    %228 = vst [vmem:[%s227] sm:%s3] %v226
    %s229 = smul.addr 2, 18
    %s230 = scalar_lea.vmem %s0, %s229
    %v231 = vld [vmem:[%s230] sm:%s3]
    %s232 = scalar_lea.vmem [#allocation0], 144
    %233 = vst [vmem:[%s232] sm:%s3] %v231
    %s234 = smul.addr 2, 17
    %s235 = scalar_lea.vmem %s0, %s234
    %v236 = vld [vmem:[%s235] sm:%s3]
    %s237 = scalar_lea.vmem [#allocation0], 136
    %238 = vst [vmem:[%s237] sm:%s3] %v236
    %s239 = smul.addr 2, 16
    %s240 = scalar_lea.vmem %s0, %s239
    %v241 = vld [vmem:[%s240] sm:%s3]
    %s242 = scalar_lea.vmem [#allocation0], 128
    %243 = vst [vmem:[%s242] sm:%s3] %v241
    %s244 = smul.addr 2, 15
    %s245 = scalar_lea.vmem %s0, %s244
    %v246 = vld [vmem:[%s245] sm:%s3]
    %s247 = scalar_lea.vmem [#allocation0], 120
    %248 = vst [vmem:[%s247] sm:%s3] %v246
    %s249 = smul.addr 2, 14
    %s250 = scalar_lea.vmem %s0, %s249
    %v251 = vld [vmem:[%s250] sm:%s3]
    %s252 = scalar_lea.vmem [#allocation0], 112
    %253 = vst [vmem:[%s252] sm:%s3] %v251
    %s254 = smul.addr 2, 13
    %s255 = scalar_lea.vmem %s0, %s254
    %v256 = vld [vmem:[%s255] sm:%s3]
    %s257 = scalar_lea.vmem [#allocation0], 104
    %258 = vst [vmem:[%s257] sm:%s3] %v256
    %s259 = smul.addr 2, 12
    %s260 = scalar_lea.vmem %s0, %s259
    %v261 = vld [vmem:[%s260] sm:%s3]
    %s262 = scalar_lea.vmem [#allocation0], 96
    %263 = vst [vmem:[%s262] sm:%s3] %v261
    %s264 = smul.addr 2, 11
    %s265 = scalar_lea.vmem %s0, %s264
    %v266 = vld [vmem:[%s265] sm:%s3]
    %s267 = scalar_lea.vmem [#allocation0], 88
    %268 = vst [vmem:[%s267] sm:%s3] %v266
    %s269 = smul.addr 2, 10
    %s270 = scalar_lea.vmem %s0, %s269
    %v271 = vld [vmem:[%s270] sm:%s3]
    %s272 = scalar_lea.vmem [#allocation0], 80
    %273 = vst [vmem:[%s272] sm:%s3] %v271
    %s274 = smul.addr 2, 9
    %s275 = scalar_lea.vmem %s0, %s274
    %v276 = vld [vmem:[%s275] sm:%s3]
    %s277 = scalar_lea.vmem [#allocation0], 72
    %278 = vst [vmem:[%s277] sm:%s3] %v276
    %s279 = smul.addr 2, 8
    %s280 = scalar_lea.vmem %s0, %s279
    %v281 = vld [vmem:[%s280] sm:%s3]
    %s282 = scalar_lea.vmem [#allocation0], 64
    %283 = vst [vmem:[%s282] sm:%s3] %v281
    %s284 = smul.addr 2, 7
    %s285 = scalar_lea.vmem %s0, %s284
    %v286 = vld [vmem:[%s285] sm:%s3]
    %s287 = scalar_lea.vmem [#allocation0], 56
    %288 = vst [vmem:[%s287] sm:%s3] %v286
    %s289 = smul.addr 2, 6
    %s290 = scalar_lea.vmem %s0, %s289
    %v291 = vld [vmem:[%s290] sm:%s3]
    %s292 = scalar_lea.vmem [#allocation0], 48
    %293 = vst [vmem:[%s292] sm:%s3] %v291
    %s294 = smul.addr 2, 5
    %s295 = scalar_lea.vmem %s0, %s294
    %v296 = vld [vmem:[%s295] sm:%s3]
    %s297 = scalar_lea.vmem [#allocation0], 40
    %298 = vst [vmem:[%s297] sm:%s3] %v296
    %s299 = smul.addr 2, 4
    %s300 = scalar_lea.vmem %s0, %s299
    %v301 = vld [vmem:[%s300] sm:%s3]
    %s302 = scalar_lea.vmem [#allocation0], 32
    %303 = vst [vmem:[%s302] sm:%s3] %v301
    %s304 = smul.addr 2, 3
    %s305 = scalar_lea.vmem %s0, %s304
    %v306 = vld [vmem:[%s305] sm:%s3]
    %s307 = scalar_lea.vmem [#allocation0], 24
    %308 = vst [vmem:[%s307] sm:%s3] %v306
    %s309 = smul.addr 2, 2
    %s310 = scalar_lea.vmem %s0, %s309
    %v311 = vld [vmem:[%s310] sm:%s3]
    %s312 = scalar_lea.vmem [#allocation0], 16
    %313 = vst [vmem:[%s312] sm:%s3] %v311
    %s314 = scalar_lea.vmem %s0, 2
    %v315 = vld [vmem:[%s314] sm:%s3]
    %s316 = scalar_lea.vmem [#allocation0], 8
    %317 = vst [vmem:[%s316] sm:%s3] %v315
    %v318 = vld [vmem:[%s0] sm:%s3]
    %319 = vst [vmem:[#allocation0] sm:%s3] %v318
    %v320 = vld [vmem:[#allocation0] ss:$8 sm:$0xf]
    %v321 = vld [vmem:[#allocation0] ss:$8 sm:$0xf0]
    %vm322 = vcmask 1047556
    %v323 = vsel %vm322, %v321, %v320
    %vm324 = vcmask 523264
    %325 = vst.msk [vmem:[%s1] sm:$0xff] %vm324, %v323
    %s326 = scalar_lea.vmem [#allocation0], 64
    %v327 = vld [vmem:[%s326] ss:$8 sm:$0xf]
    %s328 = scalar_lea.vmem [#allocation0], 64
    %v329 = vld [vmem:[%s328] ss:$8 sm:$0xf0]
    %vm330 = vcmask 1047556
    %v331 = vsel %vm330, %v329, %v327
    %vm332 = vcmask 523264
    %s333 = scalar_lea.vmem %s1, 8
    %334 = vst.msk [vmem:[%s333] sm:$0xff] %vm332, %v331
    %s335 = scalar_lea.vmem [#allocation0], 128
    %v336 = vld [vmem:[%s335] ss:$8 sm:$0xf]
    %s337 = scalar_lea.vmem [#allocation0], 128
    %v338 = vld [vmem:[%s337] ss:$8 sm:$0xf0]
    %vm339 = vcmask 1047556
    %v340 = vsel %vm339, %v338, %v336
    %vm341 = vcmask 523264
    %s342 = scalar_lea.vmem %s1, 16
    %343 = vst.msk [vmem:[%s342] sm:$0xff] %vm341, %v340
    %s344 = scalar_lea.vmem [#allocation0], 192
    %v345 = vld [vmem:[%s344] ss:$8 sm:$0xf]
    %s346 = scalar_lea.vmem [#allocation0], 192
    %v347 = vld [vmem:[%s346] ss:$8 sm:$0xf0]
    %vm348 = vcmask 1047556
    %v349 = vsel %vm348, %v347, %v345
    %vm350 = vcmask 523264
    %s351 = scalar_lea.vmem %s1, 24
    %352 = vst.msk [vmem:[%s351] sm:$0xff] %vm350, %v349
    %s353 = scalar_lea.vmem [#allocation0], 256
    %v354 = vld [vmem:[%s353] ss:$8 sm:$0xf]
    %s355 = scalar_lea.vmem [#allocation0], 256
    %v356 = vld [vmem:[%s355] ss:$8 sm:$0xf0]
    %vm357 = vcmask 1047556
    %v358 = vsel %vm357, %v356, %v354
    %vm359 = vcmask 523264
    %s360 = scalar_lea.vmem %s1, 32
    %361 = vst.msk [vmem:[%s360] sm:$0xff] %vm359, %v358
    %s362 = scalar_lea.vmem [#allocation0], 320
    %v363 = vld [vmem:[%s362] ss:$8 sm:$0xf]
    %s364 = scalar_lea.vmem [#allocation0], 320
    %v365 = vld [vmem:[%s364] ss:$8 sm:$0xf0]
    %vm366 = vcmask 1047556
    %v367 = vsel %vm366, %v365, %v363
    %vm368 = vcmask 523264
    %s369 = scalar_lea.vmem %s1, 40
    %370 = vst.msk [vmem:[%s369] sm:$0xff] %vm368, %v367
    %s371 = scalar_lea.vmem [#allocation0], 384
    %v372 = vld [vmem:[%s371] ss:$8 sm:$0xf]
    %s373 = scalar_lea.vmem [#allocation0], 384
    %v374 = vld [vmem:[%s373] ss:$8 sm:$0xf0]
    %vm375 = vcmask 1047556
    %v376 = vsel %vm375, %v374, %v372
    %vm377 = vcmask 523264
    %s378 = scalar_lea.vmem %s1, 48
    %379 = vst.msk [vmem:[%s378] sm:$0xff] %vm377, %v376
    %s380 = scalar_lea.vmem [#allocation0], 448
    %v381 = vld [vmem:[%s380] ss:$8 sm:$0xf]
    %s382 = scalar_lea.vmem [#allocation0], 448
    %v383 = vld [vmem:[%s382] ss:$8 sm:$0xf0]
    %vm384 = vcmask 1047556
    %v385 = vsel %vm384, %v383, %v381
    %vm386 = vcmask 523264
    %s387 = scalar_lea.vmem %s1, 56
    %388 = vst.msk [vmem:[%s387] sm:$0xff] %vm386, %v385
    %s389 = scalar_lea.vmem [#allocation0], 1
    %v390 = vld [vmem:[%s389] ss:$8 sm:$0xf]
    %s391 = scalar_lea.vmem [#allocation0], 1
    %v392 = vld [vmem:[%s391] ss:$8 sm:$0xf0]
    %vm393 = vcmask 1047556
    %v394 = vsel %vm393, %v392, %v390
    %395 = vrot.lane.b32.xlu0 %v394, 64
    %v396 = vpop.permute.xlu0 %395
    %vm397 = vcmask 1048064
    %398 = vst.msk [vmem:[%s1] sm:$0xff] %vm397, %v396
    %s399 = scalar_lea.vmem [#allocation0], 257
    %v400 = vld [vmem:[%s399] ss:$8 sm:$0xf]
    %s401 = scalar_lea.vmem [#allocation0], 257
    %v402 = vld [vmem:[%s401] ss:$8 sm:$0xf0]
    %vm403 = vcmask 1047556
    %v404 = vsel %vm403, %v402, %v400
    %405 = vrot.lane.b32.xlu0 %v404, 64
    %v406 = vpop.permute.xlu0 %405
    %vm407 = vcmask 1048064
    %s408 = scalar_lea.vmem %s1, 32
    %409 = vst.msk [vmem:[%s408] sm:$0xff] %vm407, %v406
    %s410 = scalar_lea.vmem [#allocation0], 65
    %v411 = vld [vmem:[%s410] ss:$8 sm:$0xf]
    %s412 = scalar_lea.vmem [#allocation0], 65
    %v413 = vld [vmem:[%s412] ss:$8 sm:$0xf0]
    %vm414 = vcmask 1047556
    %v415 = vsel %vm414, %v413, %v411
    %416 = vrot.lane.b32.xlu0 %v415, 64
    %v417 = vpop.permute.xlu0 %416
    %vm418 = vcmask 1048064
    %s419 = scalar_lea.vmem %s1, 8
    %420 = vst.msk [vmem:[%s419] sm:$0xff] %vm418, %v417
    %s421 = scalar_lea.vmem [#allocation0], 321
    %v422 = vld [vmem:[%s421] ss:$8 sm:$0xf]
    %s423 = scalar_lea.vmem [#allocation0], 321
    %v424 = vld [vmem:[%s423] ss:$8 sm:$0xf0]
    %vm425 = vcmask 1047556
    %v426 = vsel %vm425, %v424, %v422
    %427 = vrot.lane.b32.xlu0 %v426, 64
    %v428 = vpop.permute.xlu0 %427
    %vm429 = vcmask 1048064
    %s430 = scalar_lea.vmem %s1, 40
    %431 = vst.msk [vmem:[%s430] sm:$0xff] %vm429, %v428
    %s432 = scalar_lea.vmem [#allocation0], 129
    %v433 = vld [vmem:[%s432] ss:$8 sm:$0xf]
    %s434 = scalar_lea.vmem [#allocation0], 129
    %v435 = vld [vmem:[%s434] ss:$8 sm:$0xf0]
    %vm436 = vcmask 1047556
    %v437 = vsel %vm436, %v435, %v433
    %438 = vrot.lane.b32.xlu0 %v437, 64
    %v439 = vpop.permute.xlu0 %438
    %vm440 = vcmask 1048064
    %s441 = scalar_lea.vmem %s1, 16
    %442 = vst.msk [vmem:[%s441] sm:$0xff] %vm440, %v439
    %s443 = scalar_lea.vmem [#allocation0], 385
    %v444 = vld [vmem:[%s443] ss:$8 sm:$0xf]
    %s445 = scalar_lea.vmem [#allocation0], 385
    %v446 = vld [vmem:[%s445] ss:$8 sm:$0xf0]
    %vm447 = vcmask 1047556
    %v448 = vsel %vm447, %v446, %v444
    %449 = vrot.lane.b32.xlu0 %v448, 64
    %v450 = vpop.permute.xlu0 %449
    %vm451 = vcmask 1048064
    %s452 = scalar_lea.vmem %s1, 48
    %453 = vst.msk [vmem:[%s452] sm:$0xff] %vm451, %v450
    %s454 = scalar_lea.vmem [#allocation0], 193
    %v455 = vld [vmem:[%s454] ss:$8 sm:$0xf]
    %s456 = scalar_lea.vmem [#allocation0], 193
    %v457 = vld [vmem:[%s456] ss:$8 sm:$0xf0]
    %vm458 = vcmask 1047556
    %v459 = vsel %vm458, %v457, %v455
    %460 = vrot.lane.b32.xlu0 %v459, 64
    %v461 = vpop.permute.xlu0 %460
    %vm462 = vcmask 1048064
    %s463 = scalar_lea.vmem %s1, 24
    %464 = vst.msk [vmem:[%s463] sm:$0xff] %vm462, %v461
    %s465 = scalar_lea.vmem [#allocation0], 449
    %v466 = vld [vmem:[%s465] ss:$8 sm:$0xf]
    %s467 = scalar_lea.vmem [#allocation0], 449
    %v468 = vld [vmem:[%s467] ss:$8 sm:$0xf0]
    %vm469 = vcmask 1047556
    %v470 = vsel %vm469, %v468, %v466
    %471 = vrot.lane.b32.xlu0 %v470, 64
    %v472 = vpop.permute.xlu0 %471
    %vm473 = vcmask 1048064
    %s474 = scalar_lea.vmem %s1, 56
    %475 = vst.msk [vmem:[%s474] sm:$0xff] %vm473, %v472

// kernel: pixtral_attention_forward.5
$region0: #{pixtral_attention_forward.5}
  #allocation0 [shape = 'u32[]', space=smem, size = 0x4, offset = 0x4, fixed_abs, tag = 'smem constant byte address 0x4 - core index']
  #allocation1 [shape = 'u32[144,128]{1,0:T(1,128)}', space=vmem, size = 0x12000, scoped, tag = 'internal scratch']
  %s0 = inlined_call_operand.vmem [shape: bf16[128,256], index: 0, kind: input, shape index: {}]
  %s1 = inlined_call_operand.vmem [shape: bf16[256,256], index: 1, kind: input, shape index: {}]
  %s2 = inlined_call_operand.hbm [shape: f32[128,256], index: 2, kind: output, shape index: {}]
  %s3 = sld [smem:[#allocation0]]
  $region41: #{pixtral_attention_forward.5} parent=0
    _
  %s5 = ssub.s32 1, %s3
  %s6 = scalar_select 0, %s5, %s3
  $region1: #{pixtral_attention_forward.5} parent=0
    #allocation2 [shape = 'u8[65536]{0}', space=vmem, size = 0x10000, scoped, tag = 'output window, operand 0']
    #allocation3 [shape = 's32[2]{0}', space=sflag, size = 0x8, scoped, tag = 'scoped memory for pixtral_attention_forward.5']
    %7 = vsyncpa [#allocation3], 0
    %s8 = scalar_lea.sflag [#allocation3], 1
    %9 = vsyncpa %s8, 0
    loop: start=0, step=1, limit=6
    $region2: #{pixtral_attention_forward.5} parent=1 // loop_pre_header
      _
    $region3: #{pixtral_attention_forward.5} parent=1 // loop_header
      %s11 = sphi 0, %s15
      %p12 = scmp.ge.s32.totalorder %s11, 6
      %s21 = sphi 0, %s23
      %s24 = sphi 0, %s21
      %s25 = sphi 0, %s24
      %s41 = sphi 0, %s25
      %s45 = sphi 0, %s45
      %s47 = sphi 0, %s45
      %s48 = sphi 0, %s47
      %s62 = sphi 0, %s48
      %s68 = sphi 0, %s70
      %s71 = sphi 0, %s68
      %s72 = sphi 0, %s71
      %s88 = sphi 0, %s72
    $region4: #{pixtral_attention_forward.5} parent=1 // loop_header_branch
      %14 = sbr.rel (%p12) target = $region8
    $region5: #{pixtral_attention_forward.5} parent=1 // loop_body
      %s16 = ssub.s32 %s11, 1
      %s17 = ssub.s32 %s11, 2
      %s18 = sadd.s32 %s11, 1
      %s19 = ssub.s32 %s11, %s18
      %p20 = scmp.eq.s32.totalorder %s19, 0
      %s22 = sadd.s32 %s21, 1
      %s23 = scalar_select %p20, %s21, %s22
      %p26 = pneg %p20
      %p27 = scmp.eq.s32.totalorder %s11, 3
      %p28 = por %p26, %p27
      %p29 = scmp.ne.s32.totalorder %s21, %s24
      %p30 = scmp.eq.s32.totalorder %s11, 0
      %p31 = por %p29, %p30
      %p32 = scmp.ne.s32.totalorder %s21, %s24
      %p33 = scmp.eq.s32.totalorder %s16, 3
      %p34 = por %p32, %p33
      %p35 = scmp.ne.s32.totalorder %s24, %s25
      %p36 = scmp.eq.s32.totalorder %s16, 0
      %p37 = por %p35, %p36
      %p38 = scmp.ne.s32.totalorder %s24, %s25
      %p39 = scmp.eq.s32.totalorder %s17, 3
      %p40 = por %p38, %p39
      %p42 = scmp.ne.s32.totalorder %s25, %s41
      %p43 = scmp.eq.s32.totalorder %s17, 0
      %p44 = por %p42, %p43
      %s46 = sadd.s32 %s45, 1
      %p49 = scmp.eq.s32.totalorder %s11, 3
      %p50 = scmp.ne.s32.totalorder %s45, %s47
      %p51 = scmp.eq.s32.totalorder %s11, 0
      %p52 = por %p50, %p51
      %p53 = scmp.ne.s32.totalorder %s45, %s47
      %p54 = scmp.eq.s32.totalorder %s16, 3
      %p55 = por %p53, %p54
      %p56 = scmp.ne.s32.totalorder %s47, %s48
      %p57 = scmp.eq.s32.totalorder %s16, 0
      %p58 = por %p56, %p57
      %p59 = scmp.ne.s32.totalorder %s47, %s48
      %p60 = scmp.eq.s32.totalorder %s17, 3
      %p61 = por %p59, %p60
      %p63 = scmp.ne.s32.totalorder %s48, %s62
      %p64 = scmp.eq.s32.totalorder %s17, 0
      %p65 = por %p63, %p64
      %s66 = ssub.s32 %s11, %s18
      %p67 = scmp.eq.s32.totalorder %s66, 0
      %s69 = sadd.s32 %s68, 1
      %s70 = scalar_select %p67, %s68, %s69
      %p73 = pneg %p67
      %p74 = scmp.eq.s32.totalorder %s11, 3
      %p75 = por %p73, %p74
      %p76 = scmp.ne.s32.totalorder %s68, %s71
      %p77 = scmp.eq.s32.totalorder %s11, 0
      %p78 = por %p76, %p77
      %p79 = scmp.ne.s32.totalorder %s68, %s71
      %p80 = scmp.eq.s32.totalorder %s16, 3
      %p81 = por %p79, %p80
      %p82 = scmp.ne.s32.totalorder %s71, %s72
      %p83 = scmp.eq.s32.totalorder %s16, 0
      %p84 = por %p82, %p83
      %p85 = scmp.ne.s32.totalorder %s71, %s72
      %p86 = scmp.eq.s32.totalorder %s17, 3
      %p87 = por %p85, %p86
      %p89 = scmp.ne.s32.totalorder %s72, %s88
      %p90 = scmp.eq.s32.totalorder %s17, 0
      %p91 = por %p89, %p90
      %p92 = scmp.le.s32.totalorder 1, %s11
      %p93 = scmp.lt.s32.totalorder %s11, 5
      %p94 = pnand %p92, %p93
      %p95 = pneg %p94
      // Predicated region
      $region9: #{pixtral_attention_forward.5} parent=5 // pred_check
        _
      $region10: #{pixtral_attention_forward.5} parent=5 // pred_check_branch
        %97 = sbr.rel (%p94) target = $region12
      $region11: #{pixtral_attention_forward.5} parent=5 // pred_region
        %s98 = ssub.s32 %s11, 1
        // Predicated region
        $region13: #{pixtral_attention_forward.5} parent=11 // pred_check
          %p99 = pneg %p58
        $region14: #{pixtral_attention_forward.5} parent=11 // pred_check_branch
          %101 = sbr.rel (%p99) target = $region16
        $region15: #{pixtral_attention_forward.5} parent=11 // pred_region
          _
        $region16: #{pixtral_attention_forward.5} parent=11 // pred_fallthru
          _
      $region12: #{pixtral_attention_forward.5} parent=5 // pred_fallthru
        _
      %p102 = scmp.lt.s32.totalorder %s11, 4
      // Predicated region
      $region17: #{pixtral_attention_forward.5} parent=5 // pred_check
        %p103 = pneg %p102
      $region18: #{pixtral_attention_forward.5} parent=5 // pred_check_branch
        %105 = sbr.rel (%p103) target = $region20
      $region19: #{pixtral_attention_forward.5} parent=5 // pred_region
        // Predicated region
        $region21: #{pixtral_attention_forward.5} parent=19 // pred_check
          %p106 = pneg %p31
        $region22: #{pixtral_attention_forward.5} parent=19 // pred_check_branch
          %108 = sbr.rel (%p106) target = $region24
        $region23: #{pixtral_attention_forward.5} parent=19 // pred_region
          %s109 = smul.u32 4, %s11
          %p110 = scmp.lt.s32.totalorder %s109, 15
          %s111 = scalar_select %p110, %s109, 15
          %s112 = smul.addr %s111, 2
          %s113 = smul.addr %s112, 4
          %s114 = scalar_lea.vmem %s0, %s113
          %s115 = smul.u32 4, %s11
        $region24: #{pixtral_attention_forward.5} parent=19 // pred_fallthru
          _
      $region20: #{pixtral_attention_forward.5} parent=5 // pred_fallthru
        _
      %p116 = scmp.le.s32.totalorder 1, %s11
      %p117 = scmp.lt.s32.totalorder %s11, 5
      %p118 = pnand %p116, %p117
      %p119 = pneg %p118
      // Predicated region
      $region25: #{pixtral_attention_forward.5} parent=5 // pred_check
        _
      $region26: #{pixtral_attention_forward.5} parent=5 // pred_check_branch
        %121 = sbr.rel (%p118) target = $region28
      $region27: #{pixtral_attention_forward.5} parent=5 // pred_region
        %s122 = ssub.s32 %s11, 1
        %s123 = smul.u32 4, %s16
        %p124 = scmp.lt.s32.totalorder %s123, 15
        %s125 = scalar_select %p124, %s123, 15
        %s126 = smul.addr %s125, 2
        %s127 = smul.addr %s126, 4
        %s128 = scalar_lea.vmem %s0, %s127
        %p129 = pneg %p37
        %p130 = pneg %p34
        %p131 = pneg %p58
        %p132 = pneg %p55
        %p133 = pneg %p84
        %p134 = pneg %p81
        %s135 = sand.u32 %s71, 1
        %s136 = scalar_lea.sflag [#allocation3], %s135
        %s137 = sand.u32 %s71, 1
        %s138 = smul.addr %s137, 64
        %s139 = scalar_lea.vmem [#allocation2], %s138
        %s140 = smul.u32 4, %s16
        %p141 = scmp.lt.s32.totalorder %s140, 15
        %s142 = scalar_select %p141, %s140, 15
        %s143 = smul.addr %s142, 2
        %s144 = smul.addr %s143, 4
        %s145 = scalar_lea.vmem %s0, %s144
        %s146 = smul.u32 4, %s16
        %s147 = smul.u32 4, %s16
        %v148 = vld [vmem:[%s145] sm:$0xff]
        %v149 = vld [vmem:[%s145 + $0x8] sm:$0xff]
        %v150 = vld [vmem:[%s145 + $0x10] sm:$0xff]
        %v151 = vld [vmem:[%s145 + $0x18] sm:$0xff]
        %v152 = vld [vmem:[%s1] sm:$0xff]
        %v153 = vld [vmem:[%s1 + $0x8] sm:$0xff]
        %v154 = vld [vmem:[%s1 + $0x10] sm:$0xff]
        %v155 = vld [vmem:[%s1 + $0x18] sm:$0xff]
        %v156 = vld [vmem:[%s1 + $0x20] sm:$0xff]
        %v157 = vld [vmem:[%s1 + $0x28] sm:$0xff]
        %v158 = vld [vmem:[%s1 + $0x30] sm:$0xff]
        %v159 = vld [vmem:[%s1 + $0x38] sm:$0xff]
        %v160 = vld [vmem:[%s1 + $0x40] sm:$0xff]
        %v161 = vld [vmem:[%s1 + $0x48] sm:$0xff]
        %v162 = vld [vmem:[%s1 + $0x50] sm:$0xff]
        %v163 = vld [vmem:[%s1 + $0x58] sm:$0xff]
        %v164 = vld [vmem:[%s1 + $0x60] sm:$0xff]
        %v165 = vld [vmem:[%s1 + $0x68] sm:$0xff]
        %v166 = vld [vmem:[%s1 + $0x70] sm:$0xff]
        %v167 = vld [vmem:[%s1 + $0x78] sm:$0xff]
        %v168 = vld [vmem:[%s1 + $0x80] sm:$0xff]
        %v169 = vld [vmem:[%s1 + $0x88] sm:$0xff]
        %v170 = vld [vmem:[%s1 + $0x90] sm:$0xff]
        %v171 = vld [vmem:[%s1 + $0x98] sm:$0xff]
        %v172 = vld [vmem:[%s1 + $0xa0] sm:$0xff]
        %v173 = vld [vmem:[%s1 + $0xa8] sm:$0xff]
        %v174 = vld [vmem:[%s1 + $0xb0] sm:$0xff]
        %v175 = vld [vmem:[%s1 + $0xb8] sm:$0xff]
        %v176 = vld [vmem:[%s1 + $0xc0] sm:$0xff]
        %v177 = vld [vmem:[%s1 + $0xc8] sm:$0xff]
        %v178 = vld [vmem:[%s1 + $0xd0] sm:$0xff]
        %v179 = vld [vmem:[%s1 + $0xd8] sm:$0xff]
        %v180 = vld [vmem:[%s1 + $0xe0] sm:$0xff]
        %v181 = vld [vmem:[%s1 + $0xe8] sm:$0xff]
        %v182 = vld [vmem:[%s1 + $0xf0] sm:$0xff]
        %v183 = vld [vmem:[%s1 + $0xf8] sm:$0xff]
        %v188 = vunpack.c.l.b16 %v148
        %v189 = vunpack.c.h.b16 %v148
        %v190 = vunpack.c.l.b16 %v149
        %v191 = vunpack.c.h.b16 %v149
        %v192 = vunpack.c.l.b16 %v150
        %v193 = vunpack.c.h.b16 %v150
        %v194 = vunpack.c.l.b16 %v151
        %v195 = vunpack.c.h.b16 %v151
        %v196 = vpack.c.b16 %v190, %v188
        %v197 = vpack.c.b16 %v191, %v189
        %v198 = vpack.c.b16 %v194, %v192
        %v199 = vpack.c.b16 %v195, %v193
        %v236 = vunpack.c.l.b16 %v152
        %v237 = vunpack.c.h.b16 %v152
        %v238 = vunpack.c.l.b16 %v153
        %v239 = vunpack.c.h.b16 %v153
        %v240 = vunpack.c.l.b16 %v154
        %v241 = vunpack.c.h.b16 %v154
        %v242 = vunpack.c.l.b16 %v155
        %v243 = vunpack.c.h.b16 %v155
        %v244 = vunpack.c.l.b16 %v156
        %v245 = vunpack.c.h.b16 %v156
        %v246 = vunpack.c.l.b16 %v157
        %v247 = vunpack.c.h.b16 %v157
        %v248 = vunpack.c.l.b16 %v158
        %v249 = vunpack.c.h.b16 %v158
        %v250 = vunpack.c.l.b16 %v159
        %v251 = vunpack.c.h.b16 %v159
        %v252 = vunpack.c.l.b16 %v160
        %v253 = vunpack.c.h.b16 %v160
        %v254 = vunpack.c.l.b16 %v161
        %v255 = vunpack.c.h.b16 %v161
        %v256 = vunpack.c.l.b16 %v162
        %v257 = vunpack.c.h.b16 %v162
        %v258 = vunpack.c.l.b16 %v163
        %v259 = vunpack.c.h.b16 %v163
        %v260 = vunpack.c.l.b16 %v164
        %v261 = vunpack.c.h.b16 %v164
        %v262 = vunpack.c.l.b16 %v165
        %v263 = vunpack.c.h.b16 %v165
        %v264 = vunpack.c.l.b16 %v166
        %v265 = vunpack.c.h.b16 %v166
        %v266 = vunpack.c.l.b16 %v167
        %v267 = vunpack.c.h.b16 %v167
        %v268 = vunpack.c.l.b16 %v168
        %v269 = vunpack.c.h.b16 %v168
        %v270 = vunpack.c.l.b16 %v169
        %v271 = vunpack.c.h.b16 %v169
        %v272 = vunpack.c.l.b16 %v170
        %v273 = vunpack.c.h.b16 %v170
        %v274 = vunpack.c.l.b16 %v171
        %v275 = vunpack.c.h.b16 %v171
        %v276 = vunpack.c.l.b16 %v172
        %v277 = vunpack.c.h.b16 %v172
        %v278 = vunpack.c.l.b16 %v173
        %v279 = vunpack.c.h.b16 %v173
        %v280 = vunpack.c.l.b16 %v174
        %v281 = vunpack.c.h.b16 %v174
        %v282 = vunpack.c.l.b16 %v175
        %v283 = vunpack.c.h.b16 %v175
        %v284 = vunpack.c.l.b16 %v176
        %v285 = vunpack.c.h.b16 %v176
        %v286 = vunpack.c.l.b16 %v177
        %v287 = vunpack.c.h.b16 %v177
        %v288 = vunpack.c.l.b16 %v178
        %v289 = vunpack.c.h.b16 %v178
        %v290 = vunpack.c.l.b16 %v179
        %v291 = vunpack.c.h.b16 %v179
        %v292 = vunpack.c.l.b16 %v180
        %v293 = vunpack.c.h.b16 %v180
        %v294 = vunpack.c.l.b16 %v181
        %v295 = vunpack.c.h.b16 %v181
        %v296 = vunpack.c.l.b16 %v182
        %v297 = vunpack.c.h.b16 %v182
        %v298 = vunpack.c.l.b16 %v183
        %v299 = vunpack.c.h.b16 %v183
        %v300 = vpack.c.b16 %v238, %v236
        %v301 = vpack.c.b16 %v239, %v237
        %v302 = vpack.c.b16 %v242, %v240
        %v303 = vpack.c.b16 %v243, %v241
        %v304 = vpack.c.b16 %v246, %v244
        %v305 = vpack.c.b16 %v247, %v245
        %v306 = vpack.c.b16 %v250, %v248
        %v307 = vpack.c.b16 %v251, %v249
        %v308 = vpack.c.b16 %v254, %v252
        %v309 = vpack.c.b16 %v255, %v253
        %v310 = vpack.c.b16 %v258, %v256
        %v311 = vpack.c.b16 %v259, %v257
        %v312 = vpack.c.b16 %v262, %v260
        %v313 = vpack.c.b16 %v263, %v261
        %v314 = vpack.c.b16 %v266, %v264
        %v315 = vpack.c.b16 %v267, %v265
        %v316 = vpack.c.b16 %v270, %v268
        %v317 = vpack.c.b16 %v271, %v269
        %v318 = vpack.c.b16 %v274, %v272
        %v319 = vpack.c.b16 %v275, %v273
        %v320 = vpack.c.b16 %v278, %v276
        %v321 = vpack.c.b16 %v279, %v277
        %v322 = vpack.c.b16 %v282, %v280
        %v323 = vpack.c.b16 %v283, %v281
        %v324 = vpack.c.b16 %v286, %v284
        %v325 = vpack.c.b16 %v287, %v285
        %v326 = vpack.c.b16 %v290, %v288
        %v327 = vpack.c.b16 %v291, %v289
        %v328 = vpack.c.b16 %v294, %v292
        %v329 = vpack.c.b16 %v295, %v293
        %v330 = vpack.c.b16 %v298, %v296
        %v331 = vpack.c.b16 %v299, %v297
        %364 = vmatprep.subr.bf16.mxu0 %v301
        %365 = vmatpush1.bf16.msra.mxu0 %v300
        %366 = vmatprep.subr.bf16.mxu0 %v303
        %367 = vmatpush1.bf16.msra.mxu0 %v302
        %368 = vmatprep.subr.bf16.mxu0 %v305
        %369 = vmatpush1.bf16.msra.mxu0 %v304
        %370 = vmatprep.subr.bf16.mxu0 %v307
        %371 = vmatpush1.bf16.msra.mxu0 %v306
        %372 = vmatprep.subr.bf16.mxu0 %v309
        %373 = vmatpush1.bf16.msra.mxu0 %v308
        %374 = vmatprep.subr.bf16.mxu0 %v311
        %375 = vmatpush1.bf16.msra.mxu0 %v310
        %376 = vmatprep.subr.bf16.mxu0 %v313
        %377 = vmatpush1.bf16.msra.mxu0 %v312
        %378 = vmatprep.subr.bf16.mxu0 %v315
        %379 = vmatpush1.bf16.msra.mxu0 %v314
        %380 = vmatprep.subr.bf16.mxu0 %v317
        %381 = vmatpush1.bf16.msra.mxu0 %v316
        %382 = vmatprep.subr.bf16.mxu0 %v319
        %383 = vmatpush1.bf16.msra.mxu0 %v318
        %384 = vmatprep.subr.bf16.mxu0 %v321
        %385 = vmatpush1.bf16.msra.mxu0 %v320
        %386 = vmatprep.subr.bf16.mxu0 %v323
        %387 = vmatpush1.bf16.msra.mxu0 %v322
        %388 = vmatprep.subr.bf16.mxu0 %v325
        %389 = vmatpush1.bf16.msra.mxu0 %v324
        %390 = vmatprep.subr.bf16.mxu0 %v327
        %391 = vmatpush1.bf16.msra.mxu0 %v326
        %392 = vmatprep.subr.bf16.mxu0 %v329
        %393 = vmatpush1.bf16.msra.mxu0 %v328
        %394 = vmatprep.subr.bf16.mxu0 %v331
        %395 = vmatpush1.bf16.msra.mxu0 %v330
        %396 = vmatprep.mubr.bf16.mxu0 %v197
        %397 = vmatmul.mubr.bf16.gmra.mrb[0].mxu0 %v196
        %v398 = vpop.f32.mrb[0].mxu0
        %v399 = vadd.f32 0.0, %v398
        %v400 = vpop.f32.mrb[0].mxu0
        %v401 = vadd.f32 0.0, %v400
        %v402 = vpop.f32.mrb[0].mxu0
        %v403 = vadd.f32 0.0, %v402
        %v404 = vpop.f32.mrb[0].mxu0
        %v405 = vadd.f32 0.0, %v404
        %406 = vmatprep.mubr.bf16.mxu0 %v199
        %407 = vmatmul.mubr.bf16.gmra.mrb[0].mxu0 %v198
        %v408 = vpop.f32.mrb[0].mxu0
        %v409 = vadd.f32 0.0, %v408
        %v410 = vpop.f32.mrb[0].mxu0
        %v411 = vadd.f32 0.0, %v410
        %v412 = vpop.f32.mrb[0].mxu0
        %v413 = vadd.f32 0.0, %v412
        %v414 = vpop.f32.mrb[0].mxu0
        %v415 = vadd.f32 0.0, %v414
        %416 = vdwg.mxu0
        %417 = vst [vmem:[%s139] sm:$0xff] %v399
        %418 = vst [vmem:[%s139 + $0x8] sm:$0xff] %v401
        %419 = vst [vmem:[%s139 + $0x10] sm:$0xff] %v403
        %420 = vst [vmem:[%s139 + $0x18] sm:$0xff] %v405
        %421 = vst [vmem:[%s139 + $0x20] sm:$0xff] %v409
        %422 = vst [vmem:[%s139 + $0x28] sm:$0xff] %v411
        %423 = vst [vmem:[%s139 + $0x30] sm:$0xff] %v413
        %424 = vst [vmem:[%s139 + $0x38] sm:$0xff] %v415
        %s425 = sand.u32 %s71, 1
        %s426 = scalar_lea.sflag [#allocation3], %s425
        %s427 = sand.u32 %s71, 1
        %s428 = smul.addr %s427, 64
        %s429 = scalar_lea.vmem [#allocation2], %s428
        // Predicated region
        $region29: #{pixtral_attention_forward.5} parent=27 // pred_check
          %p430 = pneg %p81
        $region30: #{pixtral_attention_forward.5} parent=27 // pred_check_branch
          %432 = sbr.rel (%p430) target = $region32
        $region31: #{pixtral_attention_forward.5} parent=27 // pred_region
          %s433 = smul.u32 4, %s16
          %s435 = ssub.s32 1024, 1024
          %436 = vsyncadd %s426, %s435
          %s437 = smul.addr %s433, 2
          %s438 = smul.addr %s437, 128
          %s439 = scalar_lea.hbm %s2, %s438
          %s440 = sshll.u32 %s429, 4
          %s441 = int_to_ptr.vmem [resolvable:$true] %s440
          %446 = dma.vmem_to_hbm [thread:$0]  %s441, 1024, %s439, %s426, 256, 256, 16
        $region32: #{pixtral_attention_forward.5} parent=27 // pred_fallthru
          _
      $region28: #{pixtral_attention_forward.5} parent=5 // pred_fallthru
        _
      %p447 = scmp.le.s32.totalorder 2, %s11
      // Predicated region
      $region33: #{pixtral_attention_forward.5} parent=5 // pred_check
        %p448 = pneg %p447
      $region34: #{pixtral_attention_forward.5} parent=5 // pred_check_branch
        %450 = sbr.rel (%p448) target = $region36
      $region35: #{pixtral_attention_forward.5} parent=5 // pred_region
        %s451 = ssub.s32 %s11, 2
        // Predicated region
        $region37: #{pixtral_attention_forward.5} parent=35 // pred_check
          %p452 = pneg %p87
        $region38: #{pixtral_attention_forward.5} parent=35 // pred_check_branch
          %454 = sbr.rel (%p452) target = $region40
        $region39: #{pixtral_attention_forward.5} parent=35 // pred_region
          %s455 = sand.u32 %s72, 1
          %s456 = scalar_lea.sflag [#allocation3], %s455
          %s457 = sand.u32 %s72, 1
          %s458 = smul.addr %s457, 64
          %s459 = scalar_lea.vmem [#allocation2], %s458
          %460 = dma.done %s456, 1024
        $region40: #{pixtral_attention_forward.5} parent=35 // pred_fallthru
          _
      $region36: #{pixtral_attention_forward.5} parent=5 // pred_fallthru
        _
    $region6: #{pixtral_attention_forward.5} parent=1 // loop_footer
      %s15 = sadd.s32 1, %s11
    $region7: #{pixtral_attention_forward.5} parent=1 // loop_footer_branch
      %10 = sbr.rel target = $region3
    $region8: #{pixtral_attention_forward.5} parent=1 // loop_exit
      _
    %461 = vsyncpa [#allocation3], 1
    %s462 = scalar_lea.sflag [#allocation3], 1
    %463 = vsyncpa %s462, 1

// kernel: pixtral_attention_forward.3
$region0: #{pixtral_attention_forward.3}
  #allocation0 [shape = 'u32[]', space=smem, size = 0x4, offset = 0x4, fixed_abs, tag = 'smem constant byte address 0x4 - core index']
  #allocation1 [shape = 'u32[144,128]{1,0:T(1,128)}', space=vmem, size = 0x12000, scoped, tag = 'internal scratch']
  %s0 = inlined_call_operand.vmem [shape: bf16[128,256], index: 0, kind: input, shape index: {}]
  %s1 = inlined_call_operand.vmem [shape: bf16[256,768], index: 1, kind: input, shape index: {}]
  %s2 = inlined_call_operand.vmem [shape: bf16[128,768], index: 2, kind: output, shape index: {}]
  %s3 = sld [smem:[#allocation0]]
  $region41: #{pixtral_attention_forward.3} parent=0
    _
  %s5 = ssub.s32 1, %s3
  %s6 = scalar_select 0, %s5, %s3
  loop: start=0, step=1, limit=6
  $region2: #{pixtral_attention_forward.3} parent=0 // loop_pre_header
    _
  $region3: #{pixtral_attention_forward.3} parent=0 // loop_header
    %s8 = sphi 0, %s12
    %p9 = scmp.ge.s32.totalorder %s8, 6
    %s18 = sphi 0, %s20
    %s21 = sphi 0, %s18
    %s22 = sphi 0, %s21
    %s38 = sphi 0, %s22
    %s42 = sphi 0, %s42
    %s44 = sphi 0, %s42
    %s45 = sphi 0, %s44
    %s59 = sphi 0, %s45
    %s65 = sphi 0, %s67
    %s68 = sphi 0, %s65
    %s69 = sphi 0, %s68
    %s85 = sphi 0, %s69
  $region4: #{pixtral_attention_forward.3} parent=0 // loop_header_branch
    %11 = sbr.rel (%p9) target = $region8
  $region5: #{pixtral_attention_forward.3} parent=0 // loop_body
    %s13 = ssub.s32 %s8, 1
    %s14 = ssub.s32 %s8, 2
    %s15 = sadd.s32 %s8, 1
    %s16 = ssub.s32 %s8, %s15
    %p17 = scmp.eq.s32.totalorder %s16, 0
    %s19 = sadd.s32 %s18, 1
    %s20 = scalar_select %p17, %s18, %s19
    %p23 = pneg %p17
    %p24 = scmp.eq.s32.totalorder %s8, 3
    %p25 = por %p23, %p24
    %p26 = scmp.ne.s32.totalorder %s18, %s21
    %p27 = scmp.eq.s32.totalorder %s8, 0
    %p28 = por %p26, %p27
    %p29 = scmp.ne.s32.totalorder %s18, %s21
    %p30 = scmp.eq.s32.totalorder %s13, 3
    %p31 = por %p29, %p30
    %p32 = scmp.ne.s32.totalorder %s21, %s22
    %p33 = scmp.eq.s32.totalorder %s13, 0
    %p34 = por %p32, %p33
    %p35 = scmp.ne.s32.totalorder %s21, %s22
    %p36 = scmp.eq.s32.totalorder %s14, 3
    %p37 = por %p35, %p36
    %p39 = scmp.ne.s32.totalorder %s22, %s38
    %p40 = scmp.eq.s32.totalorder %s14, 0
    %p41 = por %p39, %p40
    %s43 = sadd.s32 %s42, 1
    %p46 = scmp.eq.s32.totalorder %s8, 3
    %p47 = scmp.ne.s32.totalorder %s42, %s44
    %p48 = scmp.eq.s32.totalorder %s8, 0
    %p49 = por %p47, %p48
    %p50 = scmp.ne.s32.totalorder %s42, %s44
    %p51 = scmp.eq.s32.totalorder %s13, 3
    %p52 = por %p50, %p51
    %p53 = scmp.ne.s32.totalorder %s44, %s45
    %p54 = scmp.eq.s32.totalorder %s13, 0
    %p55 = por %p53, %p54
    %p56 = scmp.ne.s32.totalorder %s44, %s45
    %p57 = scmp.eq.s32.totalorder %s14, 3
    %p58 = por %p56, %p57
    %p60 = scmp.ne.s32.totalorder %s45, %s59
    %p61 = scmp.eq.s32.totalorder %s14, 0
    %p62 = por %p60, %p61
    %s63 = ssub.s32 %s8, %s15
    %p64 = scmp.eq.s32.totalorder %s63, 0
    %s66 = sadd.s32 %s65, 1
    %s67 = scalar_select %p64, %s65, %s66
    %p70 = pneg %p64
    %p71 = scmp.eq.s32.totalorder %s8, 3
    %p72 = por %p70, %p71
    %p73 = scmp.ne.s32.totalorder %s65, %s68
    %p74 = scmp.eq.s32.totalorder %s8, 0
    %p75 = por %p73, %p74
    %p76 = scmp.ne.s32.totalorder %s65, %s68
    %p77 = scmp.eq.s32.totalorder %s13, 3
    %p78 = por %p76, %p77
    %p79 = scmp.ne.s32.totalorder %s68, %s69
    %p80 = scmp.eq.s32.totalorder %s13, 0
    %p81 = por %p79, %p80
    %p82 = scmp.ne.s32.totalorder %s68, %s69
    %p83 = scmp.eq.s32.totalorder %s14, 3
    %p84 = por %p82, %p83
    %p86 = scmp.ne.s32.totalorder %s69, %s85
    %p87 = scmp.eq.s32.totalorder %s14, 0
    %p88 = por %p86, %p87
    %p89 = scmp.le.s32.totalorder 1, %s8
    %p90 = scmp.lt.s32.totalorder %s8, 5
    %p91 = pnand %p89, %p90
    %p92 = pneg %p91
    // Predicated region
    $region9: #{pixtral_attention_forward.3} parent=5 // pred_check
      _
    $region10: #{pixtral_attention_forward.3} parent=5 // pred_check_branch
      %94 = sbr.rel (%p91) target = $region12
    $region11: #{pixtral_attention_forward.3} parent=5 // pred_region
      %s95 = ssub.s32 %s8, 1
      // Predicated region
      $region13: #{pixtral_attention_forward.3} parent=11 // pred_check
        %p96 = pneg %p55
      $region14: #{pixtral_attention_forward.3} parent=11 // pred_check_branch
        %98 = sbr.rel (%p96) target = $region16
      $region15: #{pixtral_attention_forward.3} parent=11 // pred_region
        _
      $region16: #{pixtral_attention_forward.3} parent=11 // pred_fallthru
        _
    $region12: #{pixtral_attention_forward.3} parent=5 // pred_fallthru
      _
    %p99 = scmp.lt.s32.totalorder %s8, 4
    // Predicated region
    $region17: #{pixtral_attention_forward.3} parent=5 // pred_check
      %p100 = pneg %p99
    $region18: #{pixtral_attention_forward.3} parent=5 // pred_check_branch
      %102 = sbr.rel (%p100) target = $region20
    $region19: #{pixtral_attention_forward.3} parent=5 // pred_region
      // Predicated region
      $region21: #{pixtral_attention_forward.3} parent=19 // pred_check
        %p103 = pneg %p28
      $region22: #{pixtral_attention_forward.3} parent=19 // pred_check_branch
        %105 = sbr.rel (%p103) target = $region24
      $region23: #{pixtral_attention_forward.3} parent=19 // pred_region
        %s106 = smul.u32 4, %s8
        %p107 = scmp.lt.s32.totalorder %s106, 15
        %s108 = scalar_select %p107, %s106, 15
        %s109 = smul.addr %s108, 2
        %s110 = smul.addr %s109, 4
        %s111 = scalar_lea.vmem %s0, %s110
        %s112 = smul.u32 4, %s8
      $region24: #{pixtral_attention_forward.3} parent=19 // pred_fallthru
        _
    $region20: #{pixtral_attention_forward.3} parent=5 // pred_fallthru
      _
    %p113 = scmp.le.s32.totalorder 1, %s8
    %p114 = scmp.lt.s32.totalorder %s8, 5
    %p115 = pnand %p113, %p114
    %p116 = pneg %p115
    // Predicated region
    $region25: #{pixtral_attention_forward.3} parent=5 // pred_check
      _
    $region26: #{pixtral_attention_forward.3} parent=5 // pred_check_branch
      %118 = sbr.rel (%p115) target = $region28
    $region27: #{pixtral_attention_forward.3} parent=5 // pred_region
      %s119 = ssub.s32 %s8, 1
      %s120 = smul.u32 4, %s13
      %p121 = scmp.lt.s32.totalorder %s120, 15
      %s122 = scalar_select %p121, %s120, 15
      %s123 = smul.addr %s122, 2
      %s124 = smul.addr %s123, 4
      %s125 = scalar_lea.vmem %s0, %s124
      %p126 = pneg %p34
      %p127 = pneg %p31
      %p128 = pneg %p55
      %p129 = pneg %p52
      %p130 = pneg %p81
      %p131 = pneg %p78
      %s132 = smul.u32 4, %s13
      %p133 = scmp.lt.s32.totalorder %s132, 15
      %s134 = scalar_select %p133, %s132, 15
      %s135 = smul.addr %s134, 6
      %s136 = smul.addr %s135, 4
      %s137 = scalar_lea.vmem %s2, %s136
      %s138 = smul.u32 4, %s13
      %p139 = scmp.lt.s32.totalorder %s138, 15
      %s140 = scalar_select %p139, %s138, 15
      %s141 = smul.addr %s140, 2
      %s142 = smul.addr %s141, 4
      %s143 = scalar_lea.vmem %s0, %s142
      %s144 = smul.u32 4, %s13
      %s145 = smul.u32 4, %s13
      %p146 = scmp.lt.s32.totalorder %s145, 15
      %s147 = scalar_select %p146, %s145, 15
      %s148 = smul.addr %s147, 6
      %s149 = smul.addr %s148, 4
      %s150 = scalar_lea.vmem %s2, %s149
      %s151 = smul.u32 4, %s13
      %v152 = vld [vmem:[%s143] sm:$0xff]
      %v153 = vld [vmem:[%s143 + $0x8] sm:$0xff]
      %v154 = vld [vmem:[%s143 + $0x10] sm:$0xff]
      %v155 = vld [vmem:[%s143 + $0x18] sm:$0xff]
      %v156 = vld [vmem:[%s1] sm:$0xff]
      %v157 = vld [vmem:[%s1 + $0x8] sm:$0xff]
      %v158 = vld [vmem:[%s1 + $0x10] sm:$0xff]
      %v159 = vld [vmem:[%s1 + $0x18] sm:$0xff]
      %v160 = vld [vmem:[%s1 + $0x20] sm:$0xff]
      %v161 = vld [vmem:[%s1 + $0x28] sm:$0xff]
      %v162 = vld [vmem:[%s1 + $0x30] sm:$0xff]
      %v163 = vld [vmem:[%s1 + $0x38] sm:$0xff]
      %v164 = vld [vmem:[%s1 + $0x40] sm:$0xff]
      %v165 = vld [vmem:[%s1 + $0x48] sm:$0xff]
      %v166 = vld [vmem:[%s1 + $0x50] sm:$0xff]
      %v167 = vld [vmem:[%s1 + $0x58] sm:$0xff]
      %v168 = vld [vmem:[%s1 + $0x60] sm:$0xff]
      %v169 = vld [vmem:[%s1 + $0x68] sm:$0xff]
      %v170 = vld [vmem:[%s1 + $0x70] sm:$0xff]
      %v171 = vld [vmem:[%s1 + $0x78] sm:$0xff]
      %v172 = vld [vmem:[%s1 + $0x80] sm:$0xff]
      %v173 = vld [vmem:[%s1 + $0x88] sm:$0xff]
      %v174 = vld [vmem:[%s1 + $0x90] sm:$0xff]
      %v175 = vld [vmem:[%s1 + $0x98] sm:$0xff]
      %v176 = vld [vmem:[%s1 + $0xa0] sm:$0xff]
      %v177 = vld [vmem:[%s1 + $0xa8] sm:$0xff]
      %v178 = vld [vmem:[%s1 + $0xb0] sm:$0xff]
      %v179 = vld [vmem:[%s1 + $0xb8] sm:$0xff]
      %v180 = vld [vmem:[%s1 + $0xc0] sm:$0xff]
      %v181 = vld [vmem:[%s1 + $0xc8] sm:$0xff]
      %v182 = vld [vmem:[%s1 + $0xd0] sm:$0xff]
      %v183 = vld [vmem:[%s1 + $0xd8] sm:$0xff]
      %v184 = vld [vmem:[%s1 + $0xe0] sm:$0xff]
      %v185 = vld [vmem:[%s1 + $0xe8] sm:$0xff]
      %v186 = vld [vmem:[%s1 + $0xf0] sm:$0xff]
      %v187 = vld [vmem:[%s1 + $0xf8] sm:$0xff]
      %v188 = vld [vmem:[%s1 + $0x100] sm:$0xff]
      %v189 = vld [vmem:[%s1 + $0x108] sm:$0xff]
      %v190 = vld [vmem:[%s1 + $0x110] sm:$0xff]
      %v191 = vld [vmem:[%s1 + $0x118] sm:$0xff]
      %v192 = vld [vmem:[%s1 + $0x120] sm:$0xff]
      %v193 = vld [vmem:[%s1 + $0x128] sm:$0xff]
      %v194 = vld [vmem:[%s1 + $0x130] sm:$0xff]
      %v195 = vld [vmem:[%s1 + $0x138] sm:$0xff]
      %v196 = vld [vmem:[%s1 + $0x140] sm:$0xff]
      %v197 = vld [vmem:[%s1 + $0x148] sm:$0xff]
      %v198 = vld [vmem:[%s1 + $0x150] sm:$0xff]
      %v199 = vld [vmem:[%s1 + $0x158] sm:$0xff]
      %v200 = vld [vmem:[%s1 + $0x160] sm:$0xff]
      %v201 = vld [vmem:[%s1 + $0x168] sm:$0xff]
      %v202 = vld [vmem:[%s1 + $0x170] sm:$0xff]
      %v203 = vld [vmem:[%s1 + $0x178] sm:$0xff]
      %v204 = vld [vmem:[%s1 + $0x180] sm:$0xff]
      %v205 = vld [vmem:[%s1 + $0x188] sm:$0xff]
      %v206 = vld [vmem:[%s1 + $0x190] sm:$0xff]
      %v207 = vld [vmem:[%s1 + $0x198] sm:$0xff]
      %v208 = vld [vmem:[%s1 + $0x1a0] sm:$0xff]
      %v209 = vld [vmem:[%s1 + $0x1a8] sm:$0xff]
      %v210 = vld [vmem:[%s1 + $0x1b0] sm:$0xff]
      %v211 = vld [vmem:[%s1 + $0x1b8] sm:$0xff]
      %v212 = vld [vmem:[%s1 + $0x1c0] sm:$0xff]
      %v213 = vld [vmem:[%s1 + $0x1c8] sm:$0xff]
      %v214 = vld [vmem:[%s1 + $0x1d0] sm:$0xff]
      %v215 = vld [vmem:[%s1 + $0x1d8] sm:$0xff]
      %v216 = vld [vmem:[%s1 + $0x1e0] sm:$0xff]
      %v217 = vld [vmem:[%s1 + $0x1e8] sm:$0xff]
      %v218 = vld [vmem:[%s1 + $0x1f0] sm:$0xff]
      %v219 = vld [vmem:[%s1 + $0x1f8] sm:$0xff]
      %v220 = vld [vmem:[%s1 + $0x200] sm:$0xff]
      %v221 = vld [vmem:[%s1 + $0x208] sm:$0xff]
      %v222 = vld [vmem:[%s1 + $0x210] sm:$0xff]
      %v223 = vld [vmem:[%s1 + $0x218] sm:$0xff]
      %v224 = vld [vmem:[%s1 + $0x220] sm:$0xff]
      %v225 = vld [vmem:[%s1 + $0x228] sm:$0xff]
      %v226 = vld [vmem:[%s1 + $0x230] sm:$0xff]
      %v227 = vld [vmem:[%s1 + $0x238] sm:$0xff]
      %v228 = vld [vmem:[%s1 + $0x240] sm:$0xff]
      %v229 = vld [vmem:[%s1 + $0x248] sm:$0xff]
      %v230 = vld [vmem:[%s1 + $0x250] sm:$0xff]
      %v231 = vld [vmem:[%s1 + $0x258] sm:$0xff]
      %v232 = vld [vmem:[%s1 + $0x260] sm:$0xff]
      %v233 = vld [vmem:[%s1 + $0x268] sm:$0xff]
      %v234 = vld [vmem:[%s1 + $0x270] sm:$0xff]
      %v235 = vld [vmem:[%s1 + $0x278] sm:$0xff]
      %v236 = vld [vmem:[%s1 + $0x280] sm:$0xff]
      %v237 = vld [vmem:[%s1 + $0x288] sm:$0xff]
      %v238 = vld [vmem:[%s1 + $0x290] sm:$0xff]
      %v239 = vld [vmem:[%s1 + $0x298] sm:$0xff]
      %v240 = vld [vmem:[%s1 + $0x2a0] sm:$0xff]
      %v241 = vld [vmem:[%s1 + $0x2a8] sm:$0xff]
      %v242 = vld [vmem:[%s1 + $0x2b0] sm:$0xff]
      %v243 = vld [vmem:[%s1 + $0x2b8] sm:$0xff]
      %v244 = vld [vmem:[%s1 + $0x2c0] sm:$0xff]
      %v245 = vld [vmem:[%s1 + $0x2c8] sm:$0xff]
      %v246 = vld [vmem:[%s1 + $0x2d0] sm:$0xff]
      %v247 = vld [vmem:[%s1 + $0x2d8] sm:$0xff]
      %v248 = vld [vmem:[%s1 + $0x2e0] sm:$0xff]
      %v249 = vld [vmem:[%s1 + $0x2e8] sm:$0xff]
      %v250 = vld [vmem:[%s1 + $0x2f0] sm:$0xff]
      %v251 = vld [vmem:[%s1 + $0x2f8] sm:$0xff]
      %v256 = vunpack.c.l.b16 %v152
      %v257 = vunpack.c.h.b16 %v152
      %v258 = vunpack.c.l.b16 %v153
      %v259 = vunpack.c.h.b16 %v153
      %v260 = vunpack.c.l.b16 %v154
      %v261 = vunpack.c.h.b16 %v154
      %v262 = vunpack.c.l.b16 %v155
      %v263 = vunpack.c.h.b16 %v155
      %v264 = vpack.c.b16 %v258, %v256
      %v265 = vpack.c.b16 %v259, %v257
      %v266 = vpack.c.b16 %v262, %v260
      %v267 = vpack.c.b16 %v263, %v261
      %v368 = vunpack.c.l.b16 %v156
      %v369 = vunpack.c.h.b16 %v156
      %v370 = vunpack.c.l.b16 %v157
      %v371 = vunpack.c.h.b16 %v157
      %v372 = vunpack.c.l.b16 %v158
      %v373 = vunpack.c.h.b16 %v158
      %v374 = vunpack.c.l.b16 %v159
      %v375 = vunpack.c.h.b16 %v159
      %v376 = vunpack.c.l.b16 %v160
      %v377 = vunpack.c.h.b16 %v160
      %v378 = vunpack.c.l.b16 %v161
      %v379 = vunpack.c.h.b16 %v161
      %v380 = vunpack.c.l.b16 %v162
      %v381 = vunpack.c.h.b16 %v162
      %v382 = vunpack.c.l.b16 %v163
      %v383 = vunpack.c.h.b16 %v163
      %v384 = vunpack.c.l.b16 %v164
      %v385 = vunpack.c.h.b16 %v164
      %v386 = vunpack.c.l.b16 %v165
      %v387 = vunpack.c.h.b16 %v165
      %v388 = vunpack.c.l.b16 %v166
      %v389 = vunpack.c.h.b16 %v166
      %v390 = vunpack.c.l.b16 %v167
      %v391 = vunpack.c.h.b16 %v167
      %v392 = vunpack.c.l.b16 %v168
      %v393 = vunpack.c.h.b16 %v168
      %v394 = vunpack.c.l.b16 %v169
      %v395 = vunpack.c.h.b16 %v169
      %v396 = vunpack.c.l.b16 %v170
      %v397 = vunpack.c.h.b16 %v170
      %v398 = vunpack.c.l.b16 %v171
      %v399 = vunpack.c.h.b16 %v171
      %v400 = vunpack.c.l.b16 %v172
      %v401 = vunpack.c.h.b16 %v172
      %v402 = vunpack.c.l.b16 %v173
      %v403 = vunpack.c.h.b16 %v173
      %v404 = vunpack.c.l.b16 %v174
      %v405 = vunpack.c.h.b16 %v174
      %v406 = vunpack.c.l.b16 %v175
      %v407 = vunpack.c.h.b16 %v175
      %v408 = vunpack.c.l.b16 %v176
      %v409 = vunpack.c.h.b16 %v176
      %v410 = vunpack.c.l.b16 %v177
      %v411 = vunpack.c.h.b16 %v177
      %v412 = vunpack.c.l.b16 %v178
      %v413 = vunpack.c.h.b16 %v178
      %v414 = vunpack.c.l.b16 %v179
      %v415 = vunpack.c.h.b16 %v179
      %v416 = vunpack.c.l.b16 %v180
      %v417 = vunpack.c.h.b16 %v180
      %v418 = vunpack.c.l.b16 %v181
      %v419 = vunpack.c.h.b16 %v181
      %v420 = vunpack.c.l.b16 %v182
      %v421 = vunpack.c.h.b16 %v182
      %v422 = vunpack.c.l.b16 %v183
      %v423 = vunpack.c.h.b16 %v183
      %v424 = vunpack.c.l.b16 %v184
      %v425 = vunpack.c.h.b16 %v184
      %v426 = vunpack.c.l.b16 %v185
      %v427 = vunpack.c.h.b16 %v185
      %v428 = vunpack.c.l.b16 %v186
      %v429 = vunpack.c.h.b16 %v186
      %v430 = vunpack.c.l.b16 %v187
      %v431 = vunpack.c.h.b16 %v187
      %v432 = vunpack.c.l.b16 %v188
      %v433 = vunpack.c.h.b16 %v188
      %v434 = vunpack.c.l.b16 %v189
      %v435 = vunpack.c.h.b16 %v189
      %v436 = vunpack.c.l.b16 %v190
      %v437 = vunpack.c.h.b16 %v190
      %v438 = vunpack.c.l.b16 %v191
      %v439 = vunpack.c.h.b16 %v191
      %v440 = vunpack.c.l.b16 %v192
      %v441 = vunpack.c.h.b16 %v192
      %v442 = vunpack.c.l.b16 %v193
      %v443 = vunpack.c.h.b16 %v193
      %v444 = vunpack.c.l.b16 %v194
      %v445 = vunpack.c.h.b16 %v194
      %v446 = vunpack.c.l.b16 %v195
      %v447 = vunpack.c.h.b16 %v195
      %v448 = vunpack.c.l.b16 %v196
      %v449 = vunpack.c.h.b16 %v196
      %v450 = vunpack.c.l.b16 %v197
      %v451 = vunpack.c.h.b16 %v197
      %v452 = vunpack.c.l.b16 %v198
      %v453 = vunpack.c.h.b16 %v198
      %v454 = vunpack.c.l.b16 %v199
      %v455 = vunpack.c.h.b16 %v199
      %v456 = vunpack.c.l.b16 %v200
      %v457 = vunpack.c.h.b16 %v200
      %v458 = vunpack.c.l.b16 %v201
      %v459 = vunpack.c.h.b16 %v201
      %v460 = vunpack.c.l.b16 %v202
      %v461 = vunpack.c.h.b16 %v202
      %v462 = vunpack.c.l.b16 %v203
      %v463 = vunpack.c.h.b16 %v203
      %v464 = vunpack.c.l.b16 %v204
      %v465 = vunpack.c.h.b16 %v204
      %v466 = vunpack.c.l.b16 %v205
      %v467 = vunpack.c.h.b16 %v205
      %v468 = vunpack.c.l.b16 %v206
      %v469 = vunpack.c.h.b16 %v206
      %v470 = vunpack.c.l.b16 %v207
      %v471 = vunpack.c.h.b16 %v207
      %v472 = vunpack.c.l.b16 %v208
      %v473 = vunpack.c.h.b16 %v208
      %v474 = vunpack.c.l.b16 %v209
      %v475 = vunpack.c.h.b16 %v209
      %v476 = vunpack.c.l.b16 %v210
      %v477 = vunpack.c.h.b16 %v210
      %v478 = vunpack.c.l.b16 %v211
      %v479 = vunpack.c.h.b16 %v211
      %v480 = vunpack.c.l.b16 %v212
      %v481 = vunpack.c.h.b16 %v212
      %v482 = vunpack.c.l.b16 %v213
      %v483 = vunpack.c.h.b16 %v213
      %v484 = vunpack.c.l.b16 %v214
      %v485 = vunpack.c.h.b16 %v214
      %v486 = vunpack.c.l.b16 %v215
      %v487 = vunpack.c.h.b16 %v215
      %v488 = vunpack.c.l.b16 %v216
      %v489 = vunpack.c.h.b16 %v216
      %v490 = vunpack.c.l.b16 %v217
      %v491 = vunpack.c.h.b16 %v217
      %v492 = vunpack.c.l.b16 %v218
      %v493 = vunpack.c.h.b16 %v218
      %v494 = vunpack.c.l.b16 %v219
      %v495 = vunpack.c.h.b16 %v219
      %v496 = vunpack.c.l.b16 %v220
      %v497 = vunpack.c.h.b16 %v220
      %v498 = vunpack.c.l.b16 %v221
      %v499 = vunpack.c.h.b16 %v221
      %v500 = vunpack.c.l.b16 %v222
      %v501 = vunpack.c.h.b16 %v222
      %v502 = vunpack.c.l.b16 %v223
      %v503 = vunpack.c.h.b16 %v223
      %v504 = vunpack.c.l.b16 %v224
      %v505 = vunpack.c.h.b16 %v224
      %v506 = vunpack.c.l.b16 %v225
      %v507 = vunpack.c.h.b16 %v225
      %v508 = vunpack.c.l.b16 %v226
      %v509 = vunpack.c.h.b16 %v226
      %v510 = vunpack.c.l.b16 %v227
      %v511 = vunpack.c.h.b16 %v227
      %v512 = vunpack.c.l.b16 %v228
      %v513 = vunpack.c.h.b16 %v228
      %v514 = vunpack.c.l.b16 %v229
      %v515 = vunpack.c.h.b16 %v229
      %v516 = vunpack.c.l.b16 %v230
      %v517 = vunpack.c.h.b16 %v230
      %v518 = vunpack.c.l.b16 %v231
      %v519 = vunpack.c.h.b16 %v231
      %v520 = vunpack.c.l.b16 %v232
      %v521 = vunpack.c.h.b16 %v232
      %v522 = vunpack.c.l.b16 %v233
      %v523 = vunpack.c.h.b16 %v233
      %v524 = vunpack.c.l.b16 %v234
      %v525 = vunpack.c.h.b16 %v234
      %v526 = vunpack.c.l.b16 %v235
      %v527 = vunpack.c.h.b16 %v235
      %v528 = vunpack.c.l.b16 %v236
      %v529 = vunpack.c.h.b16 %v236
      %v530 = vunpack.c.l.b16 %v237
      %v531 = vunpack.c.h.b16 %v237
      %v532 = vunpack.c.l.b16 %v238
      %v533 = vunpack.c.h.b16 %v238
      %v534 = vunpack.c.l.b16 %v239
      %v535 = vunpack.c.h.b16 %v239
      %v536 = vunpack.c.l.b16 %v240
      %v537 = vunpack.c.h.b16 %v240
      %v538 = vunpack.c.l.b16 %v241
      %v539 = vunpack.c.h.b16 %v241
      %v540 = vunpack.c.l.b16 %v242
      %v541 = vunpack.c.h.b16 %v242
      %v542 = vunpack.c.l.b16 %v243
      %v543 = vunpack.c.h.b16 %v243
      %v544 = vunpack.c.l.b16 %v244
      %v545 = vunpack.c.h.b16 %v244
      %v546 = vunpack.c.l.b16 %v245
      %v547 = vunpack.c.h.b16 %v245
      %v548 = vunpack.c.l.b16 %v246
      %v549 = vunpack.c.h.b16 %v246
      %v550 = vunpack.c.l.b16 %v247
      %v551 = vunpack.c.h.b16 %v247
      %v552 = vunpack.c.l.b16 %v248
      %v553 = vunpack.c.h.b16 %v248
      %v554 = vunpack.c.l.b16 %v249
      %v555 = vunpack.c.h.b16 %v249
      %v556 = vunpack.c.l.b16 %v250
      %v557 = vunpack.c.h.b16 %v250
      %v558 = vunpack.c.l.b16 %v251
      %v559 = vunpack.c.h.b16 %v251
      %v560 = vpack.c.b16 %v374, %v368
      %v561 = vpack.c.b16 %v375, %v369
      %v562 = vpack.c.b16 %v376, %v370
      %v563 = vpack.c.b16 %v377, %v371
      %v564 = vpack.c.b16 %v378, %v372
      %v565 = vpack.c.b16 %v379, %v373
      %v566 = vpack.c.b16 %v386, %v380
      %v567 = vpack.c.b16 %v387, %v381
      %v568 = vpack.c.b16 %v388, %v382
      %v569 = vpack.c.b16 %v389, %v383
      %v570 = vpack.c.b16 %v390, %v384
      %v571 = vpack.c.b16 %v391, %v385
      %v572 = vpack.c.b16 %v398, %v392
      %v573 = vpack.c.b16 %v399, %v393
      %v574 = vpack.c.b16 %v400, %v394
      %v575 = vpack.c.b16 %v401, %v395
      %v576 = vpack.c.b16 %v402, %v396
      %v577 = vpack.c.b16 %v403, %v397
      %v578 = vpack.c.b16 %v410, %v404
      %v579 = vpack.c.b16 %v411, %v405
      %v580 = vpack.c.b16 %v412, %v406
      %v581 = vpack.c.b16 %v413, %v407
      %v582 = vpack.c.b16 %v414, %v408
      %v583 = vpack.c.b16 %v415, %v409
      %v584 = vpack.c.b16 %v422, %v416
      %v585 = vpack.c.b16 %v423, %v417
      %v586 = vpack.c.b16 %v424, %v418
      %v587 = vpack.c.b16 %v425, %v419
      %v588 = vpack.c.b16 %v426, %v420
      %v589 = vpack.c.b16 %v427, %v421
      %v590 = vpack.c.b16 %v434, %v428
      %v591 = vpack.c.b16 %v435, %v429
      %v592 = vpack.c.b16 %v436, %v430
      %v593 = vpack.c.b16 %v437, %v431
      %v594 = vpack.c.b16 %v438, %v432
      %v595 = vpack.c.b16 %v439, %v433
      %v596 = vpack.c.b16 %v446, %v440
      %v597 = vpack.c.b16 %v447, %v441
      %v598 = vpack.c.b16 %v448, %v442
      %v599 = vpack.c.b16 %v449, %v443
      %v600 = vpack.c.b16 %v450, %v444
      %v601 = vpack.c.b16 %v451, %v445
      %v602 = vpack.c.b16 %v458, %v452
      %v603 = vpack.c.b16 %v459, %v453
      %v604 = vpack.c.b16 %v460, %v454
      %v605 = vpack.c.b16 %v461, %v455
      %v606 = vpack.c.b16 %v462, %v456
      %v607 = vpack.c.b16 %v463, %v457
      %v608 = vpack.c.b16 %v470, %v464
      %v609 = vpack.c.b16 %v471, %v465
      %v610 = vpack.c.b16 %v472, %v466
      %v611 = vpack.c.b16 %v473, %v467
      %v612 = vpack.c.b16 %v474, %v468
      %v613 = vpack.c.b16 %v475, %v469
      %v614 = vpack.c.b16 %v482, %v476
      %v615 = vpack.c.b16 %v483, %v477
      %v616 = vpack.c.b16 %v484, %v478
      %v617 = vpack.c.b16 %v485, %v479
      %v618 = vpack.c.b16 %v486, %v480
      %v619 = vpack.c.b16 %v487, %v481
      %v620 = vpack.c.b16 %v494, %v488
      %v621 = vpack.c.b16 %v495, %v489
      %v622 = vpack.c.b16 %v496, %v490
      %v623 = vpack.c.b16 %v497, %v491
      %v624 = vpack.c.b16 %v498, %v492
      %v625 = vpack.c.b16 %v499, %v493
      %v626 = vpack.c.b16 %v506, %v500
      %v627 = vpack.c.b16 %v507, %v501
      %v628 = vpack.c.b16 %v508, %v502
      %v629 = vpack.c.b16 %v509, %v503
      %v630 = vpack.c.b16 %v510, %v504
      %v631 = vpack.c.b16 %v511, %v505
      %v632 = vpack.c.b16 %v518, %v512
      %v633 = vpack.c.b16 %v519, %v513
      %v634 = vpack.c.b16 %v520, %v514
      %v635 = vpack.c.b16 %v521, %v515
      %v636 = vpack.c.b16 %v522, %v516
      %v637 = vpack.c.b16 %v523, %v517
      %v638 = vpack.c.b16 %v530, %v524
      %v639 = vpack.c.b16 %v531, %v525
      %v640 = vpack.c.b16 %v532, %v526
      %v641 = vpack.c.b16 %v533, %v527
      %v642 = vpack.c.b16 %v534, %v528
      %v643 = vpack.c.b16 %v535, %v529
      %v644 = vpack.c.b16 %v542, %v536
      %v645 = vpack.c.b16 %v543, %v537
      %v646 = vpack.c.b16 %v544, %v538
      %v647 = vpack.c.b16 %v545, %v539
      %v648 = vpack.c.b16 %v546, %v540
      %v649 = vpack.c.b16 %v547, %v541
      %v650 = vpack.c.b16 %v554, %v548
      %v651 = vpack.c.b16 %v555, %v549
      %v652 = vpack.c.b16 %v556, %v550
      %v653 = vpack.c.b16 %v557, %v551
      %v654 = vpack.c.b16 %v558, %v552
      %v655 = vpack.c.b16 %v559, %v553
      %752 = vmatprep.subr.bf16.mxu0 %v561
      %753 = vmatpush1.bf16.msra.mxu0 %v560
      %754 = vmatprep.subr.bf16.mxu0 %v567
      %755 = vmatpush1.bf16.msra.mxu0 %v566
      %756 = vmatprep.subr.bf16.mxu0 %v573
      %757 = vmatpush1.bf16.msra.mxu0 %v572
      %758 = vmatprep.subr.bf16.mxu0 %v579
      %759 = vmatpush1.bf16.msra.mxu0 %v578
      %760 = vmatprep.subr.bf16.mxu0 %v585
      %761 = vmatpush1.bf16.msra.mxu0 %v584
      %762 = vmatprep.subr.bf16.mxu0 %v591
      %763 = vmatpush1.bf16.msra.mxu0 %v590
      %764 = vmatprep.subr.bf16.mxu0 %v597
      %765 = vmatpush1.bf16.msra.mxu0 %v596
      %766 = vmatprep.subr.bf16.mxu0 %v603
      %767 = vmatpush1.bf16.msra.mxu0 %v602
      %768 = vmatprep.subr.bf16.mxu0 %v609
      %769 = vmatpush1.bf16.msra.mxu0 %v608
      %770 = vmatprep.subr.bf16.mxu0 %v615
      %771 = vmatpush1.bf16.msra.mxu0 %v614
      %772 = vmatprep.subr.bf16.mxu0 %v621
      %773 = vmatpush1.bf16.msra.mxu0 %v620
      %774 = vmatprep.subr.bf16.mxu0 %v627
      %775 = vmatpush1.bf16.msra.mxu0 %v626
      %776 = vmatprep.subr.bf16.mxu0 %v633
      %777 = vmatpush1.bf16.msra.mxu0 %v632
      %778 = vmatprep.subr.bf16.mxu0 %v639
      %779 = vmatpush1.bf16.msra.mxu0 %v638
      %780 = vmatprep.subr.bf16.mxu0 %v645
      %781 = vmatpush1.bf16.msra.mxu0 %v644
      %782 = vmatprep.subr.bf16.mxu0 %v651
      %783 = vmatpush1.bf16.msra.mxu0 %v650
      %784 = vmatprep.mubr.bf16.mxu0 %v265
      %785 = vmatmul.mubr.bf16.gmra.mrb[0].mxu0 %v264
      %v786 = vpop.f32.mrb[0].mxu0
      %v787 = vadd.f32 0.0, %v786
      %v788 = vpop.f32.mrb[0].mxu0
      %v789 = vadd.f32 0.0, %v788
      %v790 = vpop.f32.mrb[0].mxu0
      %v791 = vadd.f32 0.0, %v790
      %v792 = vpop.f32.mrb[0].mxu0
      %v793 = vadd.f32 0.0, %v792
      %794 = vmatprep.mubr.bf16.mxu0 %v267
      %795 = vmatmul.mubr.bf16.gmra.mrb[0].mxu0 %v266
      %v796 = vpop.f32.mrb[0].mxu0
      %v797 = vadd.f32 0.0, %v796
      %v798 = vpop.f32.mrb[0].mxu0
      %v799 = vadd.f32 0.0, %v798
      %v800 = vpop.f32.mrb[0].mxu0
      %v801 = vadd.f32 0.0, %v800
      %v802 = vpop.f32.mrb[0].mxu0
      %v803 = vadd.f32 0.0, %v802
      %804 = vdwg.mxu0
      %805 = vmatprep.subr.bf16.mxu0 %v563
      %806 = vmatpush1.bf16.msra.mxu0 %v562
      %807 = vmatprep.subr.bf16.mxu0 %v569
      %808 = vmatpush1.bf16.msra.mxu0 %v568
      %809 = vmatprep.subr.bf16.mxu0 %v575
      %810 = vmatpush1.bf16.msra.mxu0 %v574
      %811 = vmatprep.subr.bf16.mxu0 %v581
      %812 = vmatpush1.bf16.msra.mxu0 %v580
      %813 = vmatprep.subr.bf16.mxu0 %v587
      %814 = vmatpush1.bf16.msra.mxu0 %v586
      %815 = vmatprep.subr.bf16.mxu0 %v593
      %816 = vmatpush1.bf16.msra.mxu0 %v592
      %817 = vmatprep.subr.bf16.mxu0 %v599
      %818 = vmatpush1.bf16.msra.mxu0 %v598
      %819 = vmatprep.subr.bf16.mxu0 %v605
      %820 = vmatpush1.bf16.msra.mxu0 %v604
      %821 = vmatprep.subr.bf16.mxu0 %v611
      %822 = vmatpush1.bf16.msra.mxu0 %v610
      %823 = vmatprep.subr.bf16.mxu0 %v617
      %824 = vmatpush1.bf16.msra.mxu0 %v616
      %825 = vmatprep.subr.bf16.mxu0 %v623
      %826 = vmatpush1.bf16.msra.mxu0 %v622
      %827 = vmatprep.subr.bf16.mxu0 %v629
      %828 = vmatpush1.bf16.msra.mxu0 %v628
      %829 = vmatprep.subr.bf16.mxu0 %v635
      %830 = vmatpush1.bf16.msra.mxu0 %v634
      %831 = vmatprep.subr.bf16.mxu0 %v641
      %832 = vmatpush1.bf16.msra.mxu0 %v640
      %833 = vmatprep.subr.bf16.mxu0 %v647
      %834 = vmatpush1.bf16.msra.mxu0 %v646
      %835 = vmatprep.subr.bf16.mxu0 %v653
      %836 = vmatpush1.bf16.msra.mxu0 %v652
      %837 = vmatprep.mubr.bf16.mxu0 %v265
      %838 = vmatmul.mubr.bf16.gmra.mrb[0].mxu0 %v264
      %v839 = vpop.f32.mrb[0].mxu0
      %v840 = vadd.f32 0.0, %v839
      %v841 = vpop.f32.mrb[0].mxu0
      %v842 = vadd.f32 0.0, %v841
      %v843 = vpop.f32.mrb[0].mxu0
      %v844 = vadd.f32 0.0, %v843
      %v845 = vpop.f32.mrb[0].mxu0
      %v846 = vadd.f32 0.0, %v845
      %847 = vmatprep.mubr.bf16.mxu0 %v267
      %848 = vmatmul.mubr.bf16.gmra.mrb[0].mxu0 %v266
      %v849 = vpop.f32.mrb[0].mxu0
      %v850 = vadd.f32 0.0, %v849
      %v851 = vpop.f32.mrb[0].mxu0
      %v852 = vadd.f32 0.0, %v851
      %v853 = vpop.f32.mrb[0].mxu0
      %v854 = vadd.f32 0.0, %v853
      %v855 = vpop.f32.mrb[0].mxu0
      %v856 = vadd.f32 0.0, %v855
      %857 = vdwg.mxu0
      %858 = vmatprep.subr.bf16.mxu0 %v565
      %859 = vmatpush1.bf16.msra.mxu0 %v564
      %860 = vmatprep.subr.bf16.mxu0 %v571
      %861 = vmatpush1.bf16.msra.mxu0 %v570
      %862 = vmatprep.subr.bf16.mxu0 %v577
      %863 = vmatpush1.bf16.msra.mxu0 %v576
      %864 = vmatprep.subr.bf16.mxu0 %v583
      %865 = vmatpush1.bf16.msra.mxu0 %v582
      %866 = vmatprep.subr.bf16.mxu0 %v589
      %867 = vmatpush1.bf16.msra.mxu0 %v588
      %868 = vmatprep.subr.bf16.mxu0 %v595
      %869 = vmatpush1.bf16.msra.mxu0 %v594
      %870 = vmatprep.subr.bf16.mxu0 %v601
      %871 = vmatpush1.bf16.msra.mxu0 %v600
      %872 = vmatprep.subr.bf16.mxu0 %v607
      %873 = vmatpush1.bf16.msra.mxu0 %v606
      %874 = vmatprep.subr.bf16.mxu0 %v613
      %875 = vmatpush1.bf16.msra.mxu0 %v612
      %876 = vmatprep.subr.bf16.mxu0 %v619
      %877 = vmatpush1.bf16.msra.mxu0 %v618
      %878 = vmatprep.subr.bf16.mxu0 %v625
      %879 = vmatpush1.bf16.msra.mxu0 %v624
      %880 = vmatprep.subr.bf16.mxu0 %v631
      %881 = vmatpush1.bf16.msra.mxu0 %v630
      %882 = vmatprep.subr.bf16.mxu0 %v637
      %883 = vmatpush1.bf16.msra.mxu0 %v636
      %884 = vmatprep.subr.bf16.mxu0 %v643
      %885 = vmatpush1.bf16.msra.mxu0 %v642
      %886 = vmatprep.subr.bf16.mxu0 %v649
      %887 = vmatpush1.bf16.msra.mxu0 %v648
      %888 = vmatprep.subr.bf16.mxu0 %v655
      %889 = vmatpush1.bf16.msra.mxu0 %v654
      %890 = vmatprep.mubr.bf16.mxu0 %v265
      %891 = vmatmul.mubr.bf16.gmra.mrb[0].mxu0 %v264
      %v892 = vpop.f32.mrb[0].mxu0
      %v893 = vadd.f32 0.0, %v892
      %v894 = vpop.f32.mrb[0].mxu0
      %v895 = vadd.f32 0.0, %v894
      %v896 = vpop.f32.mrb[0].mxu0
      %v897 = vadd.f32 0.0, %v896
      %v898 = vpop.f32.mrb[0].mxu0
      %v899 = vadd.f32 0.0, %v898
      %900 = vmatprep.mubr.bf16.mxu0 %v267
      %901 = vmatmul.mubr.bf16.gmra.mrb[0].mxu0 %v266
      %v902 = vpop.f32.mrb[0].mxu0
      %v903 = vadd.f32 0.0, %v902
      %v904 = vpop.f32.mrb[0].mxu0
      %v905 = vadd.f32 0.0, %v904
      %v906 = vpop.f32.mrb[0].mxu0
      %v907 = vadd.f32 0.0, %v906
      %v908 = vpop.f32.mrb[0].mxu0
      %v909 = vadd.f32 0.0, %v908
      %910 = vdwg.mxu0
      %v911 = vpack.c.bf16 %v791, %v787
      %v912 = vpack.c.bf16 %v793, %v789
      %v913 = vpack.c.bf16 %v844, %v840
      %v914 = vpack.c.bf16 %v846, %v842
      %v915 = vpack.c.bf16 %v897, %v893
      %v916 = vpack.c.bf16 %v899, %v895
      %v917 = vpack.c.bf16 %v801, %v797
      %v918 = vpack.c.bf16 %v803, %v799
      %v919 = vpack.c.bf16 %v854, %v850
      %v920 = vpack.c.bf16 %v856, %v852
      %v921 = vpack.c.bf16 %v907, %v903
      %v922 = vpack.c.bf16 %v909, %v905
      %v935 = vunpack.c.l.b16 %v911
      %v936 = vunpack.c.l.b16 %v912
      %v937 = vunpack.c.l.b16 %v913
      %v938 = vunpack.c.l.b16 %v914
      %v939 = vunpack.c.l.b16 %v915
      %v940 = vunpack.c.l.b16 %v916
      %v941 = vunpack.c.h.b16 %v911
      %v942 = vunpack.c.h.b16 %v912
      %v943 = vunpack.c.h.b16 %v913
      %v944 = vunpack.c.h.b16 %v914
      %v945 = vunpack.c.h.b16 %v915
      %v946 = vunpack.c.h.b16 %v916
      %v947 = vunpack.c.l.b16 %v917
      %v948 = vunpack.c.l.b16 %v918
      %v949 = vunpack.c.l.b16 %v919
      %v950 = vunpack.c.l.b16 %v920
      %v951 = vunpack.c.l.b16 %v921
      %v952 = vunpack.c.l.b16 %v922
      %v953 = vunpack.c.h.b16 %v917
      %v954 = vunpack.c.h.b16 %v918
      %v955 = vunpack.c.h.b16 %v919
      %v956 = vunpack.c.h.b16 %v920
      %v957 = vunpack.c.h.b16 %v921
      %v958 = vunpack.c.h.b16 %v922
      %v959 = vpack.c.b16 %v936, %v935
      %v960 = vpack.c.b16 %v938, %v937
      %v961 = vpack.c.b16 %v940, %v939
      %v962 = vpack.c.b16 %v942, %v941
      %v963 = vpack.c.b16 %v944, %v943
      %v964 = vpack.c.b16 %v946, %v945
      %v965 = vpack.c.b16 %v948, %v947
      %v966 = vpack.c.b16 %v950, %v949
      %v967 = vpack.c.b16 %v952, %v951
      %v968 = vpack.c.b16 %v954, %v953
      %v969 = vpack.c.b16 %v956, %v955
      %v970 = vpack.c.b16 %v958, %v957
      %983 = vst [vmem:[%s150] sm:$0xff] %v959
      %984 = vst [vmem:[%s150 + $0x8] sm:$0xff] %v960
      %985 = vst [vmem:[%s150 + $0x10] sm:$0xff] %v961
      %986 = vst [vmem:[%s150 + $0x18] sm:$0xff] %v962
      %987 = vst [vmem:[%s150 + $0x20] sm:$0xff] %v963
      %988 = vst [vmem:[%s150 + $0x28] sm:$0xff] %v964
      %989 = vst [vmem:[%s150 + $0x30] sm:$0xff] %v965
      %990 = vst [vmem:[%s150 + $0x38] sm:$0xff] %v966
      %991 = vst [vmem:[%s150 + $0x40] sm:$0xff] %v967
      %992 = vst [vmem:[%s150 + $0x48] sm:$0xff] %v968
      %993 = vst [vmem:[%s150 + $0x50] sm:$0xff] %v969
      %994 = vst [vmem:[%s150 + $0x58] sm:$0xff] %v970
      %s995 = smul.u32 4, %s13
      %p996 = scmp.lt.s32.totalorder %s995, 15
      %s997 = scalar_select %p996, %s995, 15
      %s998 = smul.addr %s997, 6
      %s999 = smul.addr %s998, 4
      %s1000 = scalar_lea.vmem %s2, %s999
      // Predicated region
      $region29: #{pixtral_attention_forward.3} parent=27 // pred_check
        %p1001 = pneg %p78
      $region30: #{pixtral_attention_forward.3} parent=27 // pred_check_branch
        %1003 = sbr.rel (%p1001) target = $region32
      $region31: #{pixtral_attention_forward.3} parent=27 // pred_region
        %s1004 = smul.u32 4, %s13
      $region32: #{pixtral_attention_forward.3} parent=27 // pred_fallthru
        _
    $region28: #{pixtral_attention_forward.3} parent=5 // pred_fallthru
      _
    %p1005 = scmp.le.s32.totalorder 2, %s8
    // Predicated region
    $region33: #{pixtral_attention_forward.3} parent=5 // pred_check
      %p1006 = pneg %p1005
    $region34: #{pixtral_attention_forward.3} parent=5 // pred_check_branch
      %1008 = sbr.rel (%p1006) target = $region36
    $region35: #{pixtral_attention_forward.3} parent=5 // pred_region
      %s1009 = ssub.s32 %s8, 2
      // Predicated region
      $region37: #{pixtral_attention_forward.3} parent=35 // pred_check
        %p1010 = pneg %p84
      $region38: #{pixtral_attention_forward.3} parent=35 // pred_check_branch
        %1012 = sbr.rel (%p1010) target = $region40
      $region39: #{pixtral_attention_forward.3} parent=35 // pred_region
        %s1013 = smul.u32 4, %s14
        %p1014 = scmp.lt.s32.totalorder %s1013, 15
        %s1015 = scalar_select %p1014, %s1013, 15
        %s1016 = smul.addr %s1015, 6
        %s1017 = smul.addr %s1016, 4
        %s1018 = scalar_lea.vmem %s2, %s1017
      $region40: #{pixtral_attention_forward.3} parent=35 // pred_fallthru
        _
    $region36: #{pixtral_attention_forward.3} parent=5 // pred_fallthru
      _
  $region6: #{pixtral_attention_forward.3} parent=0 // loop_footer
    %s12 = sadd.s32 1, %s8
  $region7: #{pixtral_attention_forward.3} parent=0 // loop_footer_branch
    %7 = sbr.rel target = $region3
  $region8: #{pixtral_attention_forward.3} parent=0 // loop_exit
    _

// kernel: pixtral_attention_forward.4
$region0: #{pixtral_attention_forward.4}
  #allocation0 [shape = 'u32[]', space=smem, size = 0x4, offset = 0x4, fixed_abs, tag = 'smem constant byte address 0x4 - core index']
  #allocation1 [shape = 'u32[144,128]{1,0:T(1,128)}', space=vmem, size = 0x12000, scoped, tag = 'internal scratch']
  #allocation2 [shape = 'bf16[2,64,64]{2,1,0:T(16,128)(2,1)}', space=vmem, size = 0x8000, scoped, tag = 'scratch operand']
  #allocation3 [shape = 'f32[2,64,1]{2,1,0:T(8,128)}', space=vmem, size = 0x10000, scoped, tag = 'scratch operand']
  #allocation4 [shape = 'f32[2,64,1]{2,1,0:T(8,128)}', space=vmem, size = 0x10000, scoped, tag = 'scratch operand']
  #allocation5 [shape = 'f32[2,64,64]{2,1,0:T(8,128)}', space=vmem, size = 0x10000, scoped, tag = 'scratch operand']
  #allocation6 [shape = 's32[1]{0}', space=sflag, size = 0x4, scoped, tag = 'scoped memory for pixtral_attention_forward.4']
  #allocation7 [shape = 'u8[1024]{0}', space=smem, size = 0x400, scoped, tag = 'prefetched SMEM operand 0']
  #allocation8 [shape = 'u8[1024]{0}', space=smem, size = 0x400, scoped, tag = 'prefetched SMEM operand 1']
  %s0 = inlined_call_operand.vmem [shape: s32[2,2], index: 0, kind: input, shape index: {}, may-alias: {0,1}]
  %s1 = inlined_call_operand.vmem [shape: s32[2,2], index: 1, kind: input, shape index: {}, may-alias: {0,1}]
  %s2 = inlined_call_operand.vmem [shape: bf16[2,64,768], index: 2, kind: input, shape index: {}, may-alias: {2,3,4}]
  %s3 = inlined_call_operand.vmem [shape: bf16[2,64,768], index: 3, kind: input, shape index: {}, may-alias: {2,3,4}]
  %s4 = inlined_call_operand.vmem [shape: bf16[2,64,768], index: 4, kind: input, shape index: {}, may-alias: {2,3,4}]
  %s5 = inlined_call_operand.vmem [shape: s32[2,64,128], index: 5, kind: input, shape index: {}]
  %s6 = inlined_call_operand.vmem [shape: s32[2,8,64], index: 6, kind: input, shape index: {}]
  %s7 = inlined_call_operand.vmem [shape: f32[64,128], index: 7, kind: input, shape index: {}]
  %s8 = inlined_call_operand.vmem [shape: f32[64,128], index: 8, kind: input, shape index: {}]
  %s9 = inlined_call_operand.vmem [shape: bf16[2,64,256], index: 9, kind: output, shape index: {}]
  %s10 = sld [smem:[#allocation0]]
  $region233: #{pixtral_attention_forward.4} parent=0
    _
  %s12 = ssub.s32 1, %s10
  %s13 = scalar_select 0, %s12, %s10
  %s14 = sshll.u32 %s0, 4
  %s15 = int_to_ptr.vmem [resolvable:$true] %s14
  %17 = dma.vmem_to_smem %s15, 32, [#allocation7], [#allocation6]
  %s18 = sshll.u32 %s1, 4
  %s19 = int_to_ptr.vmem [resolvable:$true] %s18
  %21 = dma.vmem_to_smem %s19, 32, [#allocation8], [#allocation6]
  %22 = dma.done [#allocation6], 64
  %23 = sfence
  $region1: #{pixtral_attention_forward.4} parent=0
    #allocation9 [shape = 'u8[32768]{0}', space=vmem, size = 0x8000, scoped, tag = 'input window, operand 2']
    #allocation10 [shape = 'u8[32768]{0}', space=vmem, size = 0x8000, scoped, tag = 'input window, operand 3']
    #allocation11 [shape = 'u8[32768]{0}', space=vmem, size = 0x8000, scoped, tag = 'input window, operand 4']
    #allocation12 [shape = 'u8[32768]{0}', space=vmem, size = 0x8000, scoped, tag = 'output window, operand 0']
    loop: start=0, step=1, limit=6
    $region2: #{pixtral_attention_forward.4} parent=1 // loop_pre_header
      _
    $region3: #{pixtral_attention_forward.4} parent=1 // loop_header
      %s25 = sphi 0, %s29
      %p26 = scmp.ge.s32.totalorder %s25, 6
      %s32 = sphi 0, %s58
      %s33 = sphi 0, %s54
      %s34 = sphi 0, %s50
      %s35 = sphi 0, %s46
      %s36 = sphi 0, %s32
      %s37 = sphi 0, %s33
      %s38 = sphi 0, %s34
      %s39 = sphi 0, %s35
      %s40 = sphi 0, %s36
      %s41 = sphi 0, %s37
      %s42 = sphi 0, %s38
      %s43 = sphi 0, %s39
      %s65 = sphi 0, %s67
      %s68 = sphi 0, %s65
      %s69 = sphi 0, %s68
      %s85 = sphi 0, %s69
      %s97 = sphi 0, %s99
      %s100 = sphi 0, %s97
      %s101 = sphi 0, %s100
      %s117 = sphi 0, %s101
      %s129 = sphi 0, %s131
      %s132 = sphi 0, %s129
      %s133 = sphi 0, %s132
      %s149 = sphi 0, %s133
      %s157 = sphi 0, %s159
      %s160 = sphi 0, %s157
      %s161 = sphi 0, %s160
      %s177 = sphi 0, %s161
      %s185 = sphi 0, %s187
      %s188 = sphi 0, %s185
      %s189 = sphi 0, %s188
      %s205 = sphi 0, %s189
      %s209 = sphi 0, %s209
      %s211 = sphi 0, %s209
      %s212 = sphi 0, %s211
      %s226 = sphi 0, %s212
      %s230 = sphi 0, %s230
      %s232 = sphi 0, %s230
      %s233 = sphi 0, %s232
      %s247 = sphi 0, %s233
      %s257 = sphi 0, %s259
      %s260 = sphi 0, %s257
      %s261 = sphi 0, %s260
      %s277 = sphi 0, %s261
    $region4: #{pixtral_attention_forward.4} parent=1 // loop_header_branch
      %28 = sbr.rel (%p26) target = $region8
    $region5: #{pixtral_attention_forward.4} parent=1 // loop_body
      %s30 = ssub.s32 %s25, 1
      %s31 = ssub.s32 %s25, 2
      %s44 = sadd.s32 1, %s35
      %p45 = scmp.ge.s32.totalorder %s44, 1
      %s46 = scalar_select %p45, 0, %s44
      %s47 = sadd.s32 1, %s34
      %s48 = scalar_select %p45, %s47, %s34
      %p49 = scmp.ge.s32.totalorder %s48, 1
      %s50 = scalar_select %p49, 0, %s48
      %s51 = sadd.s32 1, %s33
      %s52 = scalar_select %p49, %s51, %s33
      %p53 = scmp.ge.s32.totalorder %s52, 2
      %s54 = scalar_select %p53, 0, %s52
      %s55 = sadd.s32 1, %s32
      %s56 = scalar_select %p53, %s55, %s32
      %p57 = scmp.ge.s32.totalorder %s56, 2
      %s58 = scalar_select %p57, 0, %s56
      %s59 = ssub.s32 %s32, %s58
      %s60 = ssub.s32 %s34, %s50
      %s61 = sor.u32 %s59, %s60
      %s62 = ssub.s32 %s33, %s54
      %s63 = sor.u32 %s61, %s62
      %p64 = scmp.eq.s32.totalorder %s63, 0
      %s66 = sadd.s32 %s65, 1
      %s67 = scalar_select %p64, %s65, %s66
      %p70 = pneg %p64
      %p71 = scmp.eq.s32.totalorder %s25, 3
      %p72 = por %p70, %p71
      %p73 = scmp.ne.s32.totalorder %s65, %s68
      %p74 = scmp.eq.s32.totalorder %s25, 0
      %p75 = por %p73, %p74
      %p76 = scmp.ne.s32.totalorder %s65, %s68
      %p77 = scmp.eq.s32.totalorder %s30, 3
      %p78 = por %p76, %p77
      %p79 = scmp.ne.s32.totalorder %s68, %s69
      %p80 = scmp.eq.s32.totalorder %s30, 0
      %p81 = por %p79, %p80
      %p82 = scmp.ne.s32.totalorder %s68, %s69
      %p83 = scmp.eq.s32.totalorder %s31, 3
      %p84 = por %p82, %p83
      %p86 = scmp.ne.s32.totalorder %s69, %s85
      %p87 = scmp.eq.s32.totalorder %s31, 0
      %p88 = por %p86, %p87
      %s89 = sadd.s32 %s33, 2
      %s90 = sadd.s32 %s54, 2
      %s91 = ssub.s32 %s32, %s58
      %s92 = ssub.s32 %s35, %s46
      %s93 = sor.u32 %s91, %s92
      %s94 = ssub.s32 %s89, %s90
      %s95 = sor.u32 %s93, %s94
      %p96 = scmp.eq.s32.totalorder %s95, 0
      %s98 = sadd.s32 %s97, 1
      %s99 = scalar_select %p96, %s97, %s98
      %p102 = pneg %p96
      %p103 = scmp.eq.s32.totalorder %s25, 3
      %p104 = por %p102, %p103
      %p105 = scmp.ne.s32.totalorder %s97, %s100
      %p106 = scmp.eq.s32.totalorder %s25, 0
      %p107 = por %p105, %p106
      %p108 = scmp.ne.s32.totalorder %s97, %s100
      %p109 = scmp.eq.s32.totalorder %s30, 3
      %p110 = por %p108, %p109
      %p111 = scmp.ne.s32.totalorder %s100, %s101
      %p112 = scmp.eq.s32.totalorder %s30, 0
      %p113 = por %p111, %p112
      %p114 = scmp.ne.s32.totalorder %s100, %s101
      %p115 = scmp.eq.s32.totalorder %s31, 3
      %p116 = por %p114, %p115
      %p118 = scmp.ne.s32.totalorder %s101, %s117
      %p119 = scmp.eq.s32.totalorder %s31, 0
      %p120 = por %p118, %p119
      %s121 = sadd.s32 %s33, 4
      %s122 = sadd.s32 %s54, 4
      %s123 = ssub.s32 %s32, %s58
      %s124 = ssub.s32 %s35, %s46
      %s125 = sor.u32 %s123, %s124
      %s126 = ssub.s32 %s121, %s122
      %s127 = sor.u32 %s125, %s126
      %p128 = scmp.eq.s32.totalorder %s127, 0
      %s130 = sadd.s32 %s129, 1
      %s131 = scalar_select %p128, %s129, %s130
      %p134 = pneg %p128
      %p135 = scmp.eq.s32.totalorder %s25, 3
      %p136 = por %p134, %p135
      %p137 = scmp.ne.s32.totalorder %s129, %s132
      %p138 = scmp.eq.s32.totalorder %s25, 0
      %p139 = por %p137, %p138
      %p140 = scmp.ne.s32.totalorder %s129, %s132
      %p141 = scmp.eq.s32.totalorder %s30, 3
      %p142 = por %p140, %p141
      %p143 = scmp.ne.s32.totalorder %s132, %s133
      %p144 = scmp.eq.s32.totalorder %s30, 0
      %p145 = por %p143, %p144
      %p146 = scmp.ne.s32.totalorder %s132, %s133
      %p147 = scmp.eq.s32.totalorder %s31, 3
      %p148 = por %p146, %p147
      %p150 = scmp.ne.s32.totalorder %s133, %s149
      %p151 = scmp.eq.s32.totalorder %s31, 0
      %p152 = por %p150, %p151
      %s153 = ssub.s32 %s32, %s58
      %s154 = ssub.s32 %s34, %s50
      %s155 = sor.u32 %s153, %s154
      %p156 = scmp.eq.s32.totalorder %s155, 0
      %s158 = sadd.s32 %s157, 1
      %s159 = scalar_select %p156, %s157, %s158
      %p162 = pneg %p156
      %p163 = scmp.eq.s32.totalorder %s25, 3
      %p164 = por %p162, %p163
      %p165 = scmp.ne.s32.totalorder %s157, %s160
      %p166 = scmp.eq.s32.totalorder %s25, 0
      %p167 = por %p165, %p166
      %p168 = scmp.ne.s32.totalorder %s157, %s160
      %p169 = scmp.eq.s32.totalorder %s30, 3
      %p170 = por %p168, %p169
      %p171 = scmp.ne.s32.totalorder %s160, %s161
      %p172 = scmp.eq.s32.totalorder %s30, 0
      %p173 = por %p171, %p172
      %p174 = scmp.ne.s32.totalorder %s160, %s161
      %p175 = scmp.eq.s32.totalorder %s31, 3
      %p176 = por %p174, %p175
      %p178 = scmp.ne.s32.totalorder %s161, %s177
      %p179 = scmp.eq.s32.totalorder %s31, 0
      %p180 = por %p178, %p179
      %s181 = ssub.s32 %s32, %s58
      %s182 = ssub.s32 %s35, %s46
      %s183 = sor.u32 %s181, %s182
      %p184 = scmp.eq.s32.totalorder %s183, 0
      %s186 = sadd.s32 %s185, 1
      %s187 = scalar_select %p184, %s185, %s186
      %p190 = pneg %p184
      %p191 = scmp.eq.s32.totalorder %s25, 3
      %p192 = por %p190, %p191
      %p193 = scmp.ne.s32.totalorder %s185, %s188
      %p194 = scmp.eq.s32.totalorder %s25, 0
      %p195 = por %p193, %p194
      %p196 = scmp.ne.s32.totalorder %s185, %s188
      %p197 = scmp.eq.s32.totalorder %s30, 3
      %p198 = por %p196, %p197
      %p199 = scmp.ne.s32.totalorder %s188, %s189
      %p200 = scmp.eq.s32.totalorder %s30, 0
      %p201 = por %p199, %p200
      %p202 = scmp.ne.s32.totalorder %s188, %s189
      %p203 = scmp.eq.s32.totalorder %s31, 3
      %p204 = por %p202, %p203
      %p206 = scmp.ne.s32.totalorder %s189, %s205
      %p207 = scmp.eq.s32.totalorder %s31, 0
      %p208 = por %p206, %p207
      %s210 = sadd.s32 %s209, 1
      %p213 = scmp.eq.s32.totalorder %s25, 3
      %p214 = scmp.ne.s32.totalorder %s209, %s211
      %p215 = scmp.eq.s32.totalorder %s25, 0
      %p216 = por %p214, %p215
      %p217 = scmp.ne.s32.totalorder %s209, %s211
      %p218 = scmp.eq.s32.totalorder %s30, 3
      %p219 = por %p217, %p218
      %p220 = scmp.ne.s32.totalorder %s211, %s212
      %p221 = scmp.eq.s32.totalorder %s30, 0
      %p222 = por %p220, %p221
      %p223 = scmp.ne.s32.totalorder %s211, %s212
      %p224 = scmp.eq.s32.totalorder %s31, 3
      %p225 = por %p223, %p224
      %p227 = scmp.ne.s32.totalorder %s212, %s226
      %p228 = scmp.eq.s32.totalorder %s31, 0
      %p229 = por %p227, %p228
      %s231 = sadd.s32 %s230, 1
      %p234 = scmp.eq.s32.totalorder %s25, 3
      %p235 = scmp.ne.s32.totalorder %s230, %s232
      %p236 = scmp.eq.s32.totalorder %s25, 0
      %p237 = por %p235, %p236
      %p238 = scmp.ne.s32.totalorder %s230, %s232
      %p239 = scmp.eq.s32.totalorder %s30, 3
      %p240 = por %p238, %p239
      %p241 = scmp.ne.s32.totalorder %s232, %s233
      %p242 = scmp.eq.s32.totalorder %s30, 0
      %p243 = por %p241, %p242
      %p244 = scmp.ne.s32.totalorder %s232, %s233
      %p245 = scmp.eq.s32.totalorder %s31, 3
      %p246 = por %p244, %p245
      %p248 = scmp.ne.s32.totalorder %s233, %s247
      %p249 = scmp.eq.s32.totalorder %s31, 0
      %p250 = por %p248, %p249
      %s251 = ssub.s32 %s32, %s58
      %s252 = ssub.s32 %s34, %s50
      %s253 = sor.u32 %s251, %s252
      %s254 = ssub.s32 %s33, %s54
      %s255 = sor.u32 %s253, %s254
      %p256 = scmp.eq.s32.totalorder %s255, 0
      %s258 = sadd.s32 %s257, 1
      %s259 = scalar_select %p256, %s257, %s258
      %p262 = pneg %p256
      %p263 = scmp.eq.s32.totalorder %s25, 3
      %p264 = por %p262, %p263
      %p265 = scmp.ne.s32.totalorder %s257, %s260
      %p266 = scmp.eq.s32.totalorder %s25, 0
      %p267 = por %p265, %p266
      %p268 = scmp.ne.s32.totalorder %s257, %s260
      %p269 = scmp.eq.s32.totalorder %s30, 3
      %p270 = por %p268, %p269
      %p271 = scmp.ne.s32.totalorder %s260, %s261
      %p272 = scmp.eq.s32.totalorder %s30, 0
      %p273 = por %p271, %p272
      %p274 = scmp.ne.s32.totalorder %s260, %s261
      %p275 = scmp.eq.s32.totalorder %s31, 3
      %p276 = por %p274, %p275
      %p278 = scmp.ne.s32.totalorder %s261, %s277
      %p279 = scmp.eq.s32.totalorder %s31, 0
      %p280 = por %p278, %p279
      %p281 = scmp.le.s32.totalorder 1, %s25
      %p282 = scmp.lt.s32.totalorder %s25, 5
      %p283 = pnand %p281, %p282
      %p284 = pneg %p283
      // Predicated region
      $region9: #{pixtral_attention_forward.4} parent=5 // pred_check
        _
      $region10: #{pixtral_attention_forward.4} parent=5 // pred_check_branch
        %286 = sbr.rel (%p283) target = $region12
      $region11: #{pixtral_attention_forward.4} parent=5 // pred_region
        %s287 = ssub.s32 %s25, 1
        // Predicated region
        $region13: #{pixtral_attention_forward.4} parent=11 // pred_check
          %p288 = pneg %p222
        $region14: #{pixtral_attention_forward.4} parent=11 // pred_check_branch
          %290 = sbr.rel (%p288) target = $region16
        $region15: #{pixtral_attention_forward.4} parent=11 // pred_region
          _
        $region16: #{pixtral_attention_forward.4} parent=11 // pred_fallthru
          _
        // Predicated region
        $region17: #{pixtral_attention_forward.4} parent=11 // pred_check
          %p291 = pneg %p243
        $region18: #{pixtral_attention_forward.4} parent=11 // pred_check_branch
          %293 = sbr.rel (%p291) target = $region20
        $region19: #{pixtral_attention_forward.4} parent=11 // pred_region
          _
        $region20: #{pixtral_attention_forward.4} parent=11 // pred_fallthru
          _
      $region12: #{pixtral_attention_forward.4} parent=5 // pred_fallthru
        _
      %p294 = scmp.lt.s32.totalorder %s25, 4
      // Predicated region
      $region21: #{pixtral_attention_forward.4} parent=5 // pred_check
        %p295 = pneg %p294
      $region22: #{pixtral_attention_forward.4} parent=5 // pred_check_branch
        %297 = sbr.rel (%p295) target = $region24
      $region23: #{pixtral_attention_forward.4} parent=5 // pred_region
        // Predicated region
        $region25: #{pixtral_attention_forward.4} parent=23 // pred_check
          %p298 = pneg %p75
        $region26: #{pixtral_attention_forward.4} parent=23 // pred_check_branch
          %300 = sbr.rel (%p298) target = $region28
        $region27: #{pixtral_attention_forward.4} parent=23 // pred_region
          %s301 = sand.u32 %s65, 1
          %s302 = sand.u32 %s65, 1
          %s303 = smul.addr %s302, 32
          %s304 = scalar_lea.vmem [#allocation9], %s303
          %s305 = smul.u32 8, %s34
          %s306 = smul.addr %s305, 6
          %s307 = sadd.s32 %s33, %s306
          %s308 = smul.addr %s32, 48
          %s309 = sadd.s32 %s307, %s308
          %s310 = smul.addr %s309, 4
          %s311 = scalar_lea.vmem %s2, %s310
          // Predicated region
          $region29: #{pixtral_attention_forward.4} parent=27 // pred_check
            _
          $region30: #{pixtral_attention_forward.4} parent=27 // pred_check_branch
            %313 = sbr.rel (0) target = $region32
          $region31: #{pixtral_attention_forward.4} parent=27 // pred_region
            // Predicated region
            $region33: #{pixtral_attention_forward.4} parent=31 // pred_check
              _
            $region34: #{pixtral_attention_forward.4} parent=31 // pred_check_branch
              %315 = sbr.rel target = $region36
            $region35: #{pixtral_attention_forward.4} parent=31 // pred_region
              // Predicated region
              $region48: #{pixtral_attention_forward.4} parent=35 // pred_check
                _
              $region49: #{pixtral_attention_forward.4} parent=35 // pred_check_branch
                %344 = sbr.rel (0) target = $region51
              $region50: #{pixtral_attention_forward.4} parent=35 // pred_region
                loop: start=0, step=1, limit=1
                $region52: #{pixtral_attention_forward.4} parent=50 // loop_pre_header
                  _
                $region53: #{pixtral_attention_forward.4} parent=50 // loop_header
                  %s346 = sphi 0, %s350
                  %p347 = scmp.ge.s32.totalorder %s346, 1
                  %s351 = sphi %s311, %s311
                  %s352 = sphi %s304, %s304
                $region54: #{pixtral_attention_forward.4} parent=50 // loop_header_branch
                  %349 = sbr.rel (%p347) target = $region58
                $region55: #{pixtral_attention_forward.4} parent=50 // loop_body
                  _
                $region56: #{pixtral_attention_forward.4} parent=50 // loop_footer
                  %s350 = sadd.s32 1, %s346
                $region57: #{pixtral_attention_forward.4} parent=50 // loop_footer_branch
                  %345 = sbr.rel target = $region53
                $region58: #{pixtral_attention_forward.4} parent=50 // loop_exit
                  _
                loop: start=0, step=1, limit=1
                $region59: #{pixtral_attention_forward.4} parent=50 // loop_pre_header
                  _
                $region60: #{pixtral_attention_forward.4} parent=50 // loop_header
                  %s355 = sphi 0, %s359
                  %p356 = scmp.ge.s32.totalorder %s355, 1
                  %s360 = sphi %s311, %s311
                  %s361 = sphi %s304, %s304
                $region61: #{pixtral_attention_forward.4} parent=50 // loop_header_branch
                  %358 = sbr.rel (%p356) target = $region65
                $region62: #{pixtral_attention_forward.4} parent=50 // loop_body
                  %v362 = vld [vmem:[%s360] sm:$0xf]
                  %363 = vst [vmem:[%s361] sm:$0xf] %v362
                  %v364 = vld [vmem:[%s360 + $0x18] sm:$0xf]
                  %365 = vst [vmem:[%s361 + $0x4] sm:$0xf] %v364
                  %v366 = vld [vmem:[%s360 + $0x30] sm:$0xf]
                  %367 = vst [vmem:[%s361 + $0x8] sm:$0xf] %v366
                  %v368 = vld [vmem:[%s360 + $0x48] sm:$0xf]
                  %369 = vst [vmem:[%s361 + $0xc] sm:$0xf] %v368
                  %v370 = vld [vmem:[%s360 + $0x60] sm:$0xf]
                  %371 = vst [vmem:[%s361 + $0x10] sm:$0xf] %v370
                  %v372 = vld [vmem:[%s360 + $0x78] sm:$0xf]
                  %373 = vst [vmem:[%s361 + $0x14] sm:$0xf] %v372
                  %v374 = vld [vmem:[%s360 + $0x90] sm:$0xf]
                  %375 = vst [vmem:[%s361 + $0x18] sm:$0xf] %v374
                  %v376 = vld [vmem:[%s360 + $0xa8] sm:$0xf]
                  %377 = vst [vmem:[%s361 + $0x1c] sm:$0xf] %v376
                $region63: #{pixtral_attention_forward.4} parent=50 // loop_footer
                  %s359 = sadd.s32 1, %s355
                $region64: #{pixtral_attention_forward.4} parent=50 // loop_footer_branch
                  %354 = sbr.rel target = $region60
                $region65: #{pixtral_attention_forward.4} parent=50 // loop_exit
                  _
              $region51: #{pixtral_attention_forward.4} parent=35 // pred_fallthru
                _
            $region36: #{pixtral_attention_forward.4} parent=31 // pred_fallthru
              _
            // Predicated region
            $region37: #{pixtral_attention_forward.4} parent=31 // pred_check
              _
            $region38: #{pixtral_attention_forward.4} parent=31 // pred_check_branch
              %317 = sbr.rel (0) target = $region40
            $region39: #{pixtral_attention_forward.4} parent=31 // pred_region
              loop: start=0, step=1, limit=1
              $region41: #{pixtral_attention_forward.4} parent=39 // loop_pre_header
                _
              $region42: #{pixtral_attention_forward.4} parent=39 // loop_header
                %s320 = sphi 0, %s324
                %p321 = scmp.ge.s32.totalorder %s320, 1
                %s325 = sphi %s311, %s311
                %s326 = sphi %s304, %s304
              $region43: #{pixtral_attention_forward.4} parent=39 // loop_header_branch
                %323 = sbr.rel (%p321) target = $region47
              $region44: #{pixtral_attention_forward.4} parent=39 // loop_body
                %v327 = vld [vmem:[%s325] sm:$0xf]
                %328 = vst [vmem:[%s326] sm:$0xf] %v327
                %v329 = vld [vmem:[%s325 + $0x18] sm:$0xf]
                %330 = vst [vmem:[%s326 + $0x4] sm:$0xf] %v329
                %v331 = vld [vmem:[%s325 + $0x30] sm:$0xf]
                %332 = vst [vmem:[%s326 + $0x8] sm:$0xf] %v331
                %v333 = vld [vmem:[%s325 + $0x48] sm:$0xf]
                %334 = vst [vmem:[%s326 + $0xc] sm:$0xf] %v333
                %v335 = vld [vmem:[%s325 + $0x60] sm:$0xf]
                %336 = vst [vmem:[%s326 + $0x10] sm:$0xf] %v335
                %v337 = vld [vmem:[%s325 + $0x78] sm:$0xf]
                %338 = vst [vmem:[%s326 + $0x14] sm:$0xf] %v337
                %v339 = vld [vmem:[%s325 + $0x90] sm:$0xf]
                %340 = vst [vmem:[%s326 + $0x18] sm:$0xf] %v339
                %v341 = vld [vmem:[%s325 + $0xa8] sm:$0xf]
                %342 = vst [vmem:[%s326 + $0x1c] sm:$0xf] %v341
              $region45: #{pixtral_attention_forward.4} parent=39 // loop_footer
                %s324 = sadd.s32 1, %s320
              $region46: #{pixtral_attention_forward.4} parent=39 // loop_footer_branch
                %319 = sbr.rel target = $region42
              $region47: #{pixtral_attention_forward.4} parent=39 // loop_exit
                _
            $region40: #{pixtral_attention_forward.4} parent=31 // pred_fallthru
              _
          $region32: #{pixtral_attention_forward.4} parent=27 // pred_fallthru
            _
          %378 = vnop
        $region28: #{pixtral_attention_forward.4} parent=23 // pred_fallthru
          _
        // Predicated region
        $region66: #{pixtral_attention_forward.4} parent=23 // pred_check
          %p379 = pneg %p107
        $region67: #{pixtral_attention_forward.4} parent=23 // pred_check_branch
          %381 = sbr.rel (%p379) target = $region69
        $region68: #{pixtral_attention_forward.4} parent=23 // pred_region
          %s382 = sand.u32 %s97, 1
          %s383 = sand.u32 %s97, 1
          %s384 = smul.addr %s383, 32
          %s385 = scalar_lea.vmem [#allocation10], %s384
          %s386 = sadd.s32 %s33, 2
          %s387 = smul.u32 8, %s35
          %s388 = smul.addr %s387, 6
          %s389 = sadd.s32 %s386, %s388
          %s390 = smul.addr %s32, 48
          %s391 = sadd.s32 %s389, %s390
          %s392 = smul.addr %s391, 4
          %s393 = scalar_lea.vmem %s3, %s392
          // Predicated region
          $region70: #{pixtral_attention_forward.4} parent=68 // pred_check
            _
          $region71: #{pixtral_attention_forward.4} parent=68 // pred_check_branch
            %395 = sbr.rel (0) target = $region73
          $region72: #{pixtral_attention_forward.4} parent=68 // pred_region
            // Predicated region
            $region74: #{pixtral_attention_forward.4} parent=72 // pred_check
              _
            $region75: #{pixtral_attention_forward.4} parent=72 // pred_check_branch
              %397 = sbr.rel target = $region77
            $region76: #{pixtral_attention_forward.4} parent=72 // pred_region
              // Predicated region
              $region89: #{pixtral_attention_forward.4} parent=76 // pred_check
                _
              $region90: #{pixtral_attention_forward.4} parent=76 // pred_check_branch
                %426 = sbr.rel (0) target = $region92
              $region91: #{pixtral_attention_forward.4} parent=76 // pred_region
                loop: start=0, step=1, limit=1
                $region93: #{pixtral_attention_forward.4} parent=91 // loop_pre_header
                  _
                $region94: #{pixtral_attention_forward.4} parent=91 // loop_header
                  %s428 = sphi 0, %s432
                  %p429 = scmp.ge.s32.totalorder %s428, 1
                  %s433 = sphi %s393, %s393
                  %s434 = sphi %s385, %s385
                $region95: #{pixtral_attention_forward.4} parent=91 // loop_header_branch
                  %431 = sbr.rel (%p429) target = $region99
                $region96: #{pixtral_attention_forward.4} parent=91 // loop_body
                  _
                $region97: #{pixtral_attention_forward.4} parent=91 // loop_footer
                  %s432 = sadd.s32 1, %s428
                $region98: #{pixtral_attention_forward.4} parent=91 // loop_footer_branch
                  %427 = sbr.rel target = $region94
                $region99: #{pixtral_attention_forward.4} parent=91 // loop_exit
                  _
                loop: start=0, step=1, limit=1
                $region100: #{pixtral_attention_forward.4} parent=91 // loop_pre_header
                  _
                $region101: #{pixtral_attention_forward.4} parent=91 // loop_header
                  %s437 = sphi 0, %s441
                  %p438 = scmp.ge.s32.totalorder %s437, 1
                  %s442 = sphi %s393, %s393
                  %s443 = sphi %s385, %s385
                $region102: #{pixtral_attention_forward.4} parent=91 // loop_header_branch
                  %440 = sbr.rel (%p438) target = $region106
                $region103: #{pixtral_attention_forward.4} parent=91 // loop_body
                  %v444 = vld [vmem:[%s442] sm:$0xf]
                  %445 = vst [vmem:[%s443] sm:$0xf] %v444
                  %v446 = vld [vmem:[%s442 + $0x18] sm:$0xf]
                  %447 = vst [vmem:[%s443 + $0x4] sm:$0xf] %v446
                  %v448 = vld [vmem:[%s442 + $0x30] sm:$0xf]
                  %449 = vst [vmem:[%s443 + $0x8] sm:$0xf] %v448
                  %v450 = vld [vmem:[%s442 + $0x48] sm:$0xf]
                  %451 = vst [vmem:[%s443 + $0xc] sm:$0xf] %v450
                  %v452 = vld [vmem:[%s442 + $0x60] sm:$0xf]
                  %453 = vst [vmem:[%s443 + $0x10] sm:$0xf] %v452
                  %v454 = vld [vmem:[%s442 + $0x78] sm:$0xf]
                  %455 = vst [vmem:[%s443 + $0x14] sm:$0xf] %v454
                  %v456 = vld [vmem:[%s442 + $0x90] sm:$0xf]
                  %457 = vst [vmem:[%s443 + $0x18] sm:$0xf] %v456
                  %v458 = vld [vmem:[%s442 + $0xa8] sm:$0xf]
                  %459 = vst [vmem:[%s443 + $0x1c] sm:$0xf] %v458
                $region104: #{pixtral_attention_forward.4} parent=91 // loop_footer
                  %s441 = sadd.s32 1, %s437
                $region105: #{pixtral_attention_forward.4} parent=91 // loop_footer_branch
                  %436 = sbr.rel target = $region101
                $region106: #{pixtral_attention_forward.4} parent=91 // loop_exit
                  _
              $region92: #{pixtral_attention_forward.4} parent=76 // pred_fallthru
                _
            $region77: #{pixtral_attention_forward.4} parent=72 // pred_fallthru
              _
            // Predicated region
            $region78: #{pixtral_attention_forward.4} parent=72 // pred_check
              _
            $region79: #{pixtral_attention_forward.4} parent=72 // pred_check_branch
              %399 = sbr.rel (0) target = $region81
            $region80: #{pixtral_attention_forward.4} parent=72 // pred_region
              loop: start=0, step=1, limit=1
              $region82: #{pixtral_attention_forward.4} parent=80 // loop_pre_header
                _
              $region83: #{pixtral_attention_forward.4} parent=80 // loop_header
                %s402 = sphi 0, %s406
                %p403 = scmp.ge.s32.totalorder %s402, 1
                %s407 = sphi %s393, %s393
                %s408 = sphi %s385, %s385
              $region84: #{pixtral_attention_forward.4} parent=80 // loop_header_branch
                %405 = sbr.rel (%p403) target = $region88
              $region85: #{pixtral_attention_forward.4} parent=80 // loop_body
                %v409 = vld [vmem:[%s407] sm:$0xf]
                %410 = vst [vmem:[%s408] sm:$0xf] %v409
                %v411 = vld [vmem:[%s407 + $0x18] sm:$0xf]
                %412 = vst [vmem:[%s408 + $0x4] sm:$0xf] %v411
                %v413 = vld [vmem:[%s407 + $0x30] sm:$0xf]
                %414 = vst [vmem:[%s408 + $0x8] sm:$0xf] %v413
                %v415 = vld [vmem:[%s407 + $0x48] sm:$0xf]
                %416 = vst [vmem:[%s408 + $0xc] sm:$0xf] %v415
                %v417 = vld [vmem:[%s407 + $0x60] sm:$0xf]
                %418 = vst [vmem:[%s408 + $0x10] sm:$0xf] %v417
                %v419 = vld [vmem:[%s407 + $0x78] sm:$0xf]
                %420 = vst [vmem:[%s408 + $0x14] sm:$0xf] %v419
                %v421 = vld [vmem:[%s407 + $0x90] sm:$0xf]
                %422 = vst [vmem:[%s408 + $0x18] sm:$0xf] %v421
                %v423 = vld [vmem:[%s407 + $0xa8] sm:$0xf]
                %424 = vst [vmem:[%s408 + $0x1c] sm:$0xf] %v423
              $region86: #{pixtral_attention_forward.4} parent=80 // loop_footer
                %s406 = sadd.s32 1, %s402
              $region87: #{pixtral_attention_forward.4} parent=80 // loop_footer_branch
                %401 = sbr.rel target = $region83
              $region88: #{pixtral_attention_forward.4} parent=80 // loop_exit
                _
            $region81: #{pixtral_attention_forward.4} parent=72 // pred_fallthru
              _
          $region73: #{pixtral_attention_forward.4} parent=68 // pred_fallthru
            _
          %460 = vnop
        $region69: #{pixtral_attention_forward.4} parent=23 // pred_fallthru
          _
        // Predicated region
        $region107: #{pixtral_attention_forward.4} parent=23 // pred_check
          %p461 = pneg %p139
        $region108: #{pixtral_attention_forward.4} parent=23 // pred_check_branch
          %463 = sbr.rel (%p461) target = $region110
        $region109: #{pixtral_attention_forward.4} parent=23 // pred_region
          %s464 = sand.u32 %s129, 1
          %s465 = sand.u32 %s129, 1
          %s466 = smul.addr %s465, 32
          %s467 = scalar_lea.vmem [#allocation11], %s466
          %s468 = sadd.s32 %s33, 4
          %s469 = smul.u32 8, %s35
          %s470 = smul.addr %s469, 6
          %s471 = sadd.s32 %s468, %s470
          %s472 = smul.addr %s32, 48
          %s473 = sadd.s32 %s471, %s472
          %s474 = smul.addr %s473, 4
          %s475 = scalar_lea.vmem %s4, %s474
          // Predicated region
          $region111: #{pixtral_attention_forward.4} parent=109 // pred_check
            _
          $region112: #{pixtral_attention_forward.4} parent=109 // pred_check_branch
            %477 = sbr.rel (0) target = $region114
          $region113: #{pixtral_attention_forward.4} parent=109 // pred_region
            // Predicated region
            $region115: #{pixtral_attention_forward.4} parent=113 // pred_check
              _
            $region116: #{pixtral_attention_forward.4} parent=113 // pred_check_branch
              %479 = sbr.rel target = $region118
            $region117: #{pixtral_attention_forward.4} parent=113 // pred_region
              // Predicated region
              $region130: #{pixtral_attention_forward.4} parent=117 // pred_check
                _
              $region131: #{pixtral_attention_forward.4} parent=117 // pred_check_branch
                %508 = sbr.rel (0) target = $region133
              $region132: #{pixtral_attention_forward.4} parent=117 // pred_region
                loop: start=0, step=1, limit=1
                $region134: #{pixtral_attention_forward.4} parent=132 // loop_pre_header
                  _
                $region135: #{pixtral_attention_forward.4} parent=132 // loop_header
                  %s510 = sphi 0, %s514
                  %p511 = scmp.ge.s32.totalorder %s510, 1
                  %s515 = sphi %s475, %s475
                  %s516 = sphi %s467, %s467
                $region136: #{pixtral_attention_forward.4} parent=132 // loop_header_branch
                  %513 = sbr.rel (%p511) target = $region140
                $region137: #{pixtral_attention_forward.4} parent=132 // loop_body
                  _
                $region138: #{pixtral_attention_forward.4} parent=132 // loop_footer
                  %s514 = sadd.s32 1, %s510
                $region139: #{pixtral_attention_forward.4} parent=132 // loop_footer_branch
                  %509 = sbr.rel target = $region135
                $region140: #{pixtral_attention_forward.4} parent=132 // loop_exit
                  _
                loop: start=0, step=1, limit=1
                $region141: #{pixtral_attention_forward.4} parent=132 // loop_pre_header
                  _
                $region142: #{pixtral_attention_forward.4} parent=132 // loop_header
                  %s519 = sphi 0, %s523
                  %p520 = scmp.ge.s32.totalorder %s519, 1
                  %s524 = sphi %s475, %s475
                  %s525 = sphi %s467, %s467
                $region143: #{pixtral_attention_forward.4} parent=132 // loop_header_branch
                  %522 = sbr.rel (%p520) target = $region147
                $region144: #{pixtral_attention_forward.4} parent=132 // loop_body
                  %v526 = vld [vmem:[%s524] sm:$0xf]
                  %527 = vst [vmem:[%s525] sm:$0xf] %v526
                  %v528 = vld [vmem:[%s524 + $0x18] sm:$0xf]
                  %529 = vst [vmem:[%s525 + $0x4] sm:$0xf] %v528
                  %v530 = vld [vmem:[%s524 + $0x30] sm:$0xf]
                  %531 = vst [vmem:[%s525 + $0x8] sm:$0xf] %v530
                  %v532 = vld [vmem:[%s524 + $0x48] sm:$0xf]
                  %533 = vst [vmem:[%s525 + $0xc] sm:$0xf] %v532
                  %v534 = vld [vmem:[%s524 + $0x60] sm:$0xf]
                  %535 = vst [vmem:[%s525 + $0x10] sm:$0xf] %v534
                  %v536 = vld [vmem:[%s524 + $0x78] sm:$0xf]
                  %537 = vst [vmem:[%s525 + $0x14] sm:$0xf] %v536
                  %v538 = vld [vmem:[%s524 + $0x90] sm:$0xf]
                  %539 = vst [vmem:[%s525 + $0x18] sm:$0xf] %v538
                  %v540 = vld [vmem:[%s524 + $0xa8] sm:$0xf]
                  %541 = vst [vmem:[%s525 + $0x1c] sm:$0xf] %v540
                $region145: #{pixtral_attention_forward.4} parent=132 // loop_footer
                  %s523 = sadd.s32 1, %s519
                $region146: #{pixtral_attention_forward.4} parent=132 // loop_footer_branch
                  %518 = sbr.rel target = $region142
                $region147: #{pixtral_attention_forward.4} parent=132 // loop_exit
                  _
              $region133: #{pixtral_attention_forward.4} parent=117 // pred_fallthru
                _
            $region118: #{pixtral_attention_forward.4} parent=113 // pred_fallthru
              _
            // Predicated region
            $region119: #{pixtral_attention_forward.4} parent=113 // pred_check
              _
            $region120: #{pixtral_attention_forward.4} parent=113 // pred_check_branch
              %481 = sbr.rel (0) target = $region122
            $region121: #{pixtral_attention_forward.4} parent=113 // pred_region
              loop: start=0, step=1, limit=1
              $region123: #{pixtral_attention_forward.4} parent=121 // loop_pre_header
                _
              $region124: #{pixtral_attention_forward.4} parent=121 // loop_header
                %s484 = sphi 0, %s488
                %p485 = scmp.ge.s32.totalorder %s484, 1
                %s489 = sphi %s475, %s475
                %s490 = sphi %s467, %s467
              $region125: #{pixtral_attention_forward.4} parent=121 // loop_header_branch
                %487 = sbr.rel (%p485) target = $region129
              $region126: #{pixtral_attention_forward.4} parent=121 // loop_body
                %v491 = vld [vmem:[%s489] sm:$0xf]
                %492 = vst [vmem:[%s490] sm:$0xf] %v491
                %v493 = vld [vmem:[%s489 + $0x18] sm:$0xf]
                %494 = vst [vmem:[%s490 + $0x4] sm:$0xf] %v493
                %v495 = vld [vmem:[%s489 + $0x30] sm:$0xf]
                %496 = vst [vmem:[%s490 + $0x8] sm:$0xf] %v495
                %v497 = vld [vmem:[%s489 + $0x48] sm:$0xf]
                %498 = vst [vmem:[%s490 + $0xc] sm:$0xf] %v497
                %v499 = vld [vmem:[%s489 + $0x60] sm:$0xf]
                %500 = vst [vmem:[%s490 + $0x10] sm:$0xf] %v499
                %v501 = vld [vmem:[%s489 + $0x78] sm:$0xf]
                %502 = vst [vmem:[%s490 + $0x14] sm:$0xf] %v501
                %v503 = vld [vmem:[%s489 + $0x90] sm:$0xf]
                %504 = vst [vmem:[%s490 + $0x18] sm:$0xf] %v503
                %v505 = vld [vmem:[%s489 + $0xa8] sm:$0xf]
                %506 = vst [vmem:[%s490 + $0x1c] sm:$0xf] %v505
              $region127: #{pixtral_attention_forward.4} parent=121 // loop_footer
                %s488 = sadd.s32 1, %s484
              $region128: #{pixtral_attention_forward.4} parent=121 // loop_footer_branch
                %483 = sbr.rel target = $region124
              $region129: #{pixtral_attention_forward.4} parent=121 // loop_exit
                _
            $region122: #{pixtral_attention_forward.4} parent=113 // pred_fallthru
              _
          $region114: #{pixtral_attention_forward.4} parent=109 // pred_fallthru
            _
          %542 = vnop
        $region110: #{pixtral_attention_forward.4} parent=23 // pred_fallthru
          _
        // Predicated region
        $region148: #{pixtral_attention_forward.4} parent=23 // pred_check
          %p543 = pneg %p167
        $region149: #{pixtral_attention_forward.4} parent=23 // pred_check_branch
          %545 = sbr.rel (%p543) target = $region151
        $region150: #{pixtral_attention_forward.4} parent=23 // pred_region
          %s546 = smul.u32 8, %s34
          %p547 = scmp.lt.s32.totalorder %s32, 1
          %s548 = scalar_select %p547, %s32, 1
          %p549 = scmp.lt.s32.totalorder %s546, 7
          %s550 = scalar_select %p549, %s546, 7
          %s551 = smul.addr %s548, 8
          %s552 = sadd.s32 %s550, %s551
          %s553 = smul.addr %s552, 8
          %s554 = scalar_lea.vmem %s5, %s553
          %s555 = smul.u32 8, %s34
        $region151: #{pixtral_attention_forward.4} parent=23 // pred_fallthru
          _
        // Predicated region
        $region152: #{pixtral_attention_forward.4} parent=23 // pred_check
          %p556 = pneg %p195
        $region153: #{pixtral_attention_forward.4} parent=23 // pred_check_branch
          %558 = sbr.rel (%p556) target = $region155
        $region154: #{pixtral_attention_forward.4} parent=23 // pred_region
          %p559 = scmp.lt.s32.totalorder %s32, 1
          %s560 = scalar_select %p559, %s32, 1
          %p561 = scmp.lt.s32.totalorder %s35, 0
          %s562 = scalar_select %p561, %s35, 0
          %s563 = sadd.s32 %s562, %s560
          %s564 = smul.addr %s563, 8
          %s565 = scalar_lea.vmem %s6, %s564
        $region155: #{pixtral_attention_forward.4} parent=23 // pred_fallthru
          _
      $region24: #{pixtral_attention_forward.4} parent=5 // pred_fallthru
        _
      %p566 = scmp.le.s32.totalorder 1, %s25
      %p567 = scmp.lt.s32.totalorder %s25, 5
      %p568 = pnand %p566, %p567
      %p569 = pneg %p568
      // Predicated region
      $region156: #{pixtral_attention_forward.4} parent=5 // pred_check
        _
      $region157: #{pixtral_attention_forward.4} parent=5 // pred_check_branch
        %571 = sbr.rel (%p568) target = $region159
      $region158: #{pixtral_attention_forward.4} parent=5 // pred_region
        %s572 = ssub.s32 %s25, 1
        %s573 = sand.u32 %s68, 1
        %s574 = sand.u32 %s68, 1
        %s575 = smul.addr %s574, 32
        %s576 = scalar_lea.vmem [#allocation9], %s575
        // Predicated region
        $region160: #{pixtral_attention_forward.4} parent=158 // pred_check
          %p577 = pneg %p81
        $region161: #{pixtral_attention_forward.4} parent=158 // pred_check_branch
          %579 = sbr.rel (%p577) target = $region163
        $region162: #{pixtral_attention_forward.4} parent=158 // pred_region
          _
        $region163: #{pixtral_attention_forward.4} parent=158 // pred_fallthru
          _
        %s580 = sand.u32 %s100, 1
        %s581 = sand.u32 %s100, 1
        %s582 = smul.addr %s581, 32
        %s583 = scalar_lea.vmem [#allocation10], %s582
        // Predicated region
        $region164: #{pixtral_attention_forward.4} parent=158 // pred_check
          %p584 = pneg %p113
        $region165: #{pixtral_attention_forward.4} parent=158 // pred_check_branch
          %586 = sbr.rel (%p584) target = $region167
        $region166: #{pixtral_attention_forward.4} parent=158 // pred_region
          _
        $region167: #{pixtral_attention_forward.4} parent=158 // pred_fallthru
          _
        %s587 = sand.u32 %s132, 1
        %s588 = sand.u32 %s132, 1
        %s589 = smul.addr %s588, 32
        %s590 = scalar_lea.vmem [#allocation11], %s589
        // Predicated region
        $region168: #{pixtral_attention_forward.4} parent=158 // pred_check
          %p591 = pneg %p145
        $region169: #{pixtral_attention_forward.4} parent=158 // pred_check_branch
          %593 = sbr.rel (%p591) target = $region171
        $region170: #{pixtral_attention_forward.4} parent=158 // pred_region
          _
        $region171: #{pixtral_attention_forward.4} parent=158 // pred_fallthru
          _
        %s594 = sand.u32 %s68, 1
        %s595 = sand.u32 %s68, 1
        %s596 = smul.addr %s595, 32
        %s597 = scalar_lea.vmem [#allocation9], %s596
        %p598 = pneg %p81
        %p599 = pneg %p78
        %s600 = sand.u32 %s100, 1
        %s601 = sand.u32 %s100, 1
        %s602 = smul.addr %s601, 32
        %s603 = scalar_lea.vmem [#allocation10], %s602
        %p604 = pneg %p113
        %p605 = pneg %p110
        %s606 = sand.u32 %s132, 1
        %s607 = sand.u32 %s132, 1
        %s608 = smul.addr %s607, 32
        %s609 = scalar_lea.vmem [#allocation11], %s608
        %p610 = pneg %p145
        %p611 = pneg %p142
        %s612 = smul.u32 8, %s38
        %p613 = scmp.lt.s32.totalorder %s36, 1
        %s614 = scalar_select %p613, %s36, 1
        %p615 = scmp.lt.s32.totalorder %s612, 7
        %s616 = scalar_select %p615, %s612, 7
        %s617 = smul.addr %s614, 8
        %s618 = sadd.s32 %s616, %s617
        %s619 = smul.addr %s618, 8
        %s620 = scalar_lea.vmem %s5, %s619
        %p621 = pneg %p173
        %p622 = pneg %p170
        %p623 = scmp.lt.s32.totalorder %s36, 1
        %s624 = scalar_select %p623, %s36, 1
        %p625 = scmp.lt.s32.totalorder %s39, 0
        %s626 = scalar_select %p625, %s39, 0
        %s627 = sadd.s32 %s626, %s624
        %s628 = smul.addr %s627, 8
        %s629 = scalar_lea.vmem %s6, %s628
        %p630 = pneg %p201
        %p631 = pneg %p198
        %p632 = pneg %p222
        %p633 = pneg %p219
        %p634 = pneg %p243
        %p635 = pneg %p240
        %p636 = pneg %p273
        %p637 = pneg %p270
        %s638 = sand.u32 %s260, 1
        %s639 = sand.u32 %s260, 1
        %s640 = smul.addr %s639, 32
        %s641 = scalar_lea.vmem [#allocation12], %s640
        %s642 = smul.u32 8, %s38
        %s643 = sadd.s32 %s37, 2
        %s644 = smul.u32 8, %s39
        %s645 = sadd.s32 %s37, 4
        %s646 = smul.u32 8, %s39
        %s647 = smul.u32 8, %s38
        %p648 = scmp.lt.s32.totalorder %s36, 1
        %s649 = scalar_select %p648, %s36, 1
        %p650 = scmp.lt.s32.totalorder %s647, 7
        %s651 = scalar_select %p650, %s647, 7
        %s652 = smul.addr %s649, 8
        %s653 = sadd.s32 %s651, %s652
        %s654 = smul.addr %s653, 8
        %s655 = scalar_lea.vmem %s5, %s654
        %s656 = smul.u32 8, %s38
        %p657 = scmp.lt.s32.totalorder %s36, 1
        %s658 = scalar_select %p657, %s36, 1
        %p659 = scmp.lt.s32.totalorder %s39, 0
        %s660 = scalar_select %p659, %s39, 0
        %s661 = sadd.s32 %s660, %s658
        %s662 = smul.addr %s661, 8
        %s663 = scalar_lea.vmem %s6, %s662
        %s664 = smul.u32 8, %s38
        %s666 = sadd.s32 %s36, %s38
        %s667 = sadd.s32 %s36, %s39
        %s668 = smul.u32 %s666, 128
        %s669 = sld [smem:[#allocation7 + %s668]]
        %s670 = smul.u32 %s667, 128
        %s671 = sadd.s32 %s670, 1
        %s672 = sld [smem:[#allocation8 + %s671]]
        %p673 = scmp.le.s32.totalorder %s669, %s672
        %s674 = sld [smem:[#allocation8 + %s670]]
        %s675 = sadd.s32 %s668, 1
        %s676 = sld [smem:[#allocation7 + %s675]]
        %p677 = scmp.le.s32.totalorder %s674, %s676
        %p678 = pnand %p673, %p677
        %p679 = pneg %p678
        %p680 = scmp.eq.s32.totalorder %s39, 0
        // Predicated region
        $region172: #{pixtral_attention_forward.4} parent=158 // pred_check
          %p681 = pneg %p680
        $region173: #{pixtral_attention_forward.4} parent=158 // pred_check_branch
          %683 = sbr.rel (%p681) target = $region175
        $region174: #{pixtral_attention_forward.4} parent=158 // pred_region
          %vm684 = vcmask 7168
          %685 = vst.msk [vmem:[#allocation3] sm:$0xff] %vm684, -1e+30
          %686 = vst.msk [vmem:[#allocation3 + $0x8] sm:$0xff] %vm684, -1e+30
          %687 = vst.msk [vmem:[#allocation3 + $0x10] sm:$0xff] %vm684, -1e+30
          %688 = vst.msk [vmem:[#allocation3 + $0x18] sm:$0xff] %vm684, -1e+30
          %689 = vst.msk [vmem:[#allocation3 + $0x20] sm:$0xff] %vm684, -1e+30
          %690 = vst.msk [vmem:[#allocation3 + $0x28] sm:$0xff] %vm684, -1e+30
          %691 = vst.msk [vmem:[#allocation3 + $0x30] sm:$0xff] %vm684, -1e+30
          %692 = vst.msk [vmem:[#allocation3 + $0x38] sm:$0xff] %vm684, -1e+30
          %693 = vst.msk [vmem:[#allocation3 + $0x40] sm:$0xff] %vm684, -1e+30
          %694 = vst.msk [vmem:[#allocation3 + $0x48] sm:$0xff] %vm684, -1e+30
          %695 = vst.msk [vmem:[#allocation3 + $0x50] sm:$0xff] %vm684, -1e+30
          %696 = vst.msk [vmem:[#allocation3 + $0x58] sm:$0xff] %vm684, -1e+30
          %697 = vst.msk [vmem:[#allocation3 + $0x60] sm:$0xff] %vm684, -1e+30
          %698 = vst.msk [vmem:[#allocation3 + $0x68] sm:$0xff] %vm684, -1e+30
          %699 = vst.msk [vmem:[#allocation3 + $0x70] sm:$0xff] %vm684, -1e+30
          %700 = vst.msk [vmem:[#allocation3 + $0x78] sm:$0xff] %vm684, -1e+30
          %701 = vst.msk [vmem:[#allocation4] sm:$0xff] %vm684, 0.0
          %702 = vst.msk [vmem:[#allocation4 + $0x8] sm:$0xff] %vm684, 0.0
          %703 = vst.msk [vmem:[#allocation4 + $0x10] sm:$0xff] %vm684, 0.0
          %704 = vst.msk [vmem:[#allocation4 + $0x18] sm:$0xff] %vm684, 0.0
          %705 = vst.msk [vmem:[#allocation4 + $0x20] sm:$0xff] %vm684, 0.0
          %706 = vst.msk [vmem:[#allocation4 + $0x28] sm:$0xff] %vm684, 0.0
          %707 = vst.msk [vmem:[#allocation4 + $0x30] sm:$0xff] %vm684, 0.0
          %708 = vst.msk [vmem:[#allocation4 + $0x38] sm:$0xff] %vm684, 0.0
          %709 = vst.msk [vmem:[#allocation4 + $0x40] sm:$0xff] %vm684, 0.0
          %710 = vst.msk [vmem:[#allocation4 + $0x48] sm:$0xff] %vm684, 0.0
          %711 = vst.msk [vmem:[#allocation4 + $0x50] sm:$0xff] %vm684, 0.0
          %712 = vst.msk [vmem:[#allocation4 + $0x58] sm:$0xff] %vm684, 0.0
          %713 = vst.msk [vmem:[#allocation4 + $0x60] sm:$0xff] %vm684, 0.0
          %714 = vst.msk [vmem:[#allocation4 + $0x68] sm:$0xff] %vm684, 0.0
          %715 = vst.msk [vmem:[#allocation4 + $0x70] sm:$0xff] %vm684, 0.0
          %716 = vst.msk [vmem:[#allocation4 + $0x78] sm:$0xff] %vm684, 0.0
          %vm717 = vcmask 523264
          %718 = vst.msk [vmem:[#allocation5] sm:$0xff] %vm717, 0.0
          %719 = vst.msk [vmem:[#allocation5 + $0x8] sm:$0xff] %vm717, 0.0
          %720 = vst.msk [vmem:[#allocation5 + $0x10] sm:$0xff] %vm717, 0.0
          %721 = vst.msk [vmem:[#allocation5 + $0x18] sm:$0xff] %vm717, 0.0
          %722 = vst.msk [vmem:[#allocation5 + $0x20] sm:$0xff] %vm717, 0.0
          %723 = vst.msk [vmem:[#allocation5 + $0x28] sm:$0xff] %vm717, 0.0
          %724 = vst.msk [vmem:[#allocation5 + $0x30] sm:$0xff] %vm717, 0.0
          %725 = vst.msk [vmem:[#allocation5 + $0x38] sm:$0xff] %vm717, 0.0
          %726 = vst.msk [vmem:[#allocation5 + $0x40] sm:$0xff] %vm717, 0.0
          %727 = vst.msk [vmem:[#allocation5 + $0x48] sm:$0xff] %vm717, 0.0
          %728 = vst.msk [vmem:[#allocation5 + $0x50] sm:$0xff] %vm717, 0.0
          %729 = vst.msk [vmem:[#allocation5 + $0x58] sm:$0xff] %vm717, 0.0
          %730 = vst.msk [vmem:[#allocation5 + $0x60] sm:$0xff] %vm717, 0.0
          %731 = vst.msk [vmem:[#allocation5 + $0x68] sm:$0xff] %vm717, 0.0
          %732 = vst.msk [vmem:[#allocation5 + $0x70] sm:$0xff] %vm717, 0.0
          %733 = vst.msk [vmem:[#allocation5 + $0x78] sm:$0xff] %vm717, 0.0
          %s734 = smul.u32 %s38, 64
          %s735 = scalar_lea.vmem %s7, %s734
          %v736 = vld [vmem:[%s735] sm:$0xff]
          %v737 = vld [vmem:[%s735 + $0x8] sm:$0xff]
          %v738 = vld [vmem:[%s735 + $0x10] sm:$0xff]
          %v739 = vld [vmem:[%s735 + $0x18] sm:$0xff]
          %v740 = vld [vmem:[%s735 + $0x20] sm:$0xff]
          %v741 = vld [vmem:[%s735 + $0x28] sm:$0xff]
          %v742 = vld [vmem:[%s735 + $0x30] sm:$0xff]
          %v743 = vld [vmem:[%s735 + $0x38] sm:$0xff]
          %s744 = scalar_lea.vmem %s8, %s734
          %v745 = vld [vmem:[%s744] sm:$0xff]
          %v746 = vld [vmem:[%s744 + $0x8] sm:$0xff]
          %v747 = vld [vmem:[%s744 + $0x10] sm:$0xff]
          %v748 = vld [vmem:[%s744 + $0x18] sm:$0xff]
          %v749 = vld [vmem:[%s744 + $0x20] sm:$0xff]
          %v750 = vld [vmem:[%s744 + $0x28] sm:$0xff]
          %v751 = vld [vmem:[%s744 + $0x30] sm:$0xff]
          %v752 = vld [vmem:[%s744 + $0x38] sm:$0xff]
          %v753 = vld [vmem:[%s576] sm:$0xf]
          %v754 = vld [vmem:[%s576 + $0x4] sm:$0xf]
          %v755 = vld [vmem:[%s576 + $0x8] sm:$0xf]
          %v756 = vld [vmem:[%s576 + $0xc] sm:$0xf]
          %v757 = vld [vmem:[%s576 + $0x10] sm:$0xf]
          %v758 = vld [vmem:[%s576 + $0x14] sm:$0xf]
          %v759 = vld [vmem:[%s576 + $0x18] sm:$0xf]
          %v760 = vld [vmem:[%s576 + $0x1c] sm:$0xf]
          %v761 = vunpack.c.l.bf16 %v753
          %v762 = vunpack.c.l.bf16 %v754
          %v763 = vunpack.c.l.bf16 %v755
          %v764 = vunpack.c.l.bf16 %v756
          %v765 = vunpack.c.l.bf16 %v757
          %v766 = vunpack.c.l.bf16 %v758
          %v767 = vunpack.c.l.bf16 %v759
          %v768 = vunpack.c.l.bf16 %v760
          %v769 = vmul.f32 %v761, %v736
          %v770 = vmul.f32 %v762, %v737
          %v771 = vmul.f32 %v763, %v738
          %v772 = vmul.f32 %v764, %v739
          %v773 = vmul.f32 %v765, %v740
          %v774 = vmul.f32 %v766, %v741
          %v775 = vmul.f32 %v767, %v742
          %v776 = vmul.f32 %v768, %v743
          %v777 = vsub.f32 0.0, %v761
          %v778 = vsub.f32 0.0, %v762
          %v779 = vsub.f32 0.0, %v763
          %v780 = vsub.f32 0.0, %v764
          %v781 = vsub.f32 0.0, %v765
          %v782 = vsub.f32 0.0, %v766
          %v783 = vsub.f32 0.0, %v767
          %v784 = vsub.f32 0.0, %v768
          %793 = vrot.lane.b32.xlu0 %v777, 96
          %v794 = vpop.permute.xlu0 %793
          %795 = vrot.lane.b32.xlu0 %v778, 96
          %v796 = vpop.permute.xlu0 %795
          %797 = vrot.lane.b32.xlu0 %v779, 96
          %v798 = vpop.permute.xlu0 %797
          %799 = vrot.lane.b32.xlu0 %v780, 96
          %v800 = vpop.permute.xlu0 %799
          %801 = vrot.lane.b32.xlu0 %v781, 96
          %v802 = vpop.permute.xlu0 %801
          %803 = vrot.lane.b32.xlu0 %v782, 96
          %v804 = vpop.permute.xlu0 %803
          %805 = vrot.lane.b32.xlu0 %v783, 96
          %v806 = vpop.permute.xlu0 %805
          %807 = vrot.lane.b32.xlu0 %v784, 96
          %v808 = vpop.permute.xlu0 %807
          %825 = vrot.lane.b32.xlu0 %v761, 32
          %v826 = vpop.permute.xlu0 %825
          %827 = vrot.lane.b32.xlu0 %v762, 32
          %v828 = vpop.permute.xlu0 %827
          %829 = vrot.lane.b32.xlu0 %v763, 32
          %v830 = vpop.permute.xlu0 %829
          %831 = vrot.lane.b32.xlu0 %v764, 32
          %v832 = vpop.permute.xlu0 %831
          %833 = vrot.lane.b32.xlu0 %v765, 32
          %v834 = vpop.permute.xlu0 %833
          %835 = vrot.lane.b32.xlu0 %v766, 32
          %v836 = vpop.permute.xlu0 %835
          %837 = vrot.lane.b32.xlu0 %v767, 32
          %v838 = vpop.permute.xlu0 %837
          %839 = vrot.lane.b32.xlu0 %v768, 32
          %v840 = vpop.permute.xlu0 %839
          %vm849 = vcmask 261120
          %v850 = vsel %vm849, %v794, %v826
          %v851 = vsel %vm849, %v796, %v828
          %v852 = vsel %vm849, %v798, %v830
          %v853 = vsel %vm849, %v800, %v832
          %v854 = vsel %vm849, %v802, %v834
          %v855 = vsel %vm849, %v804, %v836
          %v856 = vsel %vm849, %v806, %v838
          %v857 = vsel %vm849, %v808, %v840
          %v858 = vsel %vm717, %v850, %v794
          %v859 = vsel %vm717, %v851, %v796
          %v860 = vsel %vm717, %v852, %v798
          %v861 = vsel %vm717, %v853, %v800
          %v862 = vsel %vm717, %v854, %v802
          %v863 = vsel %vm717, %v855, %v804
          %v864 = vsel %vm717, %v856, %v806
          %v865 = vsel %vm717, %v857, %v808
          %vm866 = vcmask 785408
          %v867 = vsel %vm866, %v858, %v826
          %v868 = vsel %vm866, %v859, %v828
          %v869 = vsel %vm866, %v860, %v830
          %v870 = vsel %vm866, %v861, %v832
          %v871 = vsel %vm866, %v862, %v834
          %v872 = vsel %vm866, %v863, %v836
          %v873 = vsel %vm866, %v864, %v838
          %v874 = vsel %vm866, %v865, %v840
          %v875 = vmul.f32 %v867, %v745
          %v876 = vmul.f32 %v868, %v746
          %v877 = vmul.f32 %v869, %v747
          %v878 = vmul.f32 %v870, %v748
          %v879 = vmul.f32 %v871, %v749
          %v880 = vmul.f32 %v872, %v750
          %v881 = vmul.f32 %v873, %v751
          %v882 = vmul.f32 %v874, %v752
          %v883 = vadd.f32 %v769, %v875
          %v884 = vadd.f32 %v770, %v876
          %v885 = vadd.f32 %v771, %v877
          %v886 = vadd.f32 %v772, %v878
          %v887 = vadd.f32 %v773, %v879
          %v888 = vadd.f32 %v774, %v880
          %v889 = vadd.f32 %v775, %v881
          %v890 = vadd.f32 %v776, %v882
          %v891 = vmul.f32 %v883, 0.125
          %v892 = vmul.f32 %v884, 0.125
          %v893 = vmul.f32 %v885, 0.125
          %v894 = vmul.f32 %v886, 0.125
          %v895 = vmul.f32 %v887, 0.125
          %v896 = vmul.f32 %v888, 0.125
          %v897 = vmul.f32 %v889, 0.125
          %v898 = vmul.f32 %v890, 0.125
          %v899 = vpack.c.bf16 %v892, %v891
          %v900 = vpack.c.bf16 %v894, %v893
          %v901 = vpack.c.bf16 %v896, %v895
          %v902 = vpack.c.bf16 %v898, %v897
          %903 = vst.msk [vmem:[#allocation2] sm:$0xff] %vm717, %v899
          %904 = vst.msk [vmem:[#allocation2 + $0x8] sm:$0xff] %vm717, %v900
          %905 = vst.msk [vmem:[#allocation2 + $0x10] sm:$0xff] %vm717, %v901
          %906 = vst.msk [vmem:[#allocation2 + $0x18] sm:$0xff] %vm717, %v902
          %911 = vrot.lane.b32.xlu0 %v899, 64
          %v912 = vpop.permute.xlu0 %911
          %913 = vrot.lane.b32.xlu0 %v900, 64
          %v914 = vpop.permute.xlu0 %913
          %915 = vrot.lane.b32.xlu0 %v901, 64
          %v916 = vpop.permute.xlu0 %915
          %917 = vrot.lane.b32.xlu0 %v902, 64
          %v918 = vpop.permute.xlu0 %917
          %s923 = scalar_lea.vmem [#allocation2], 32
          %924 = vst.msk [vmem:[%s923] sm:$0xff] %vm717, %v912
          %925 = vst.msk [vmem:[%s923 + $0x8] sm:$0xff] %vm717, %v914
          %926 = vst.msk [vmem:[%s923 + $0x10] sm:$0xff] %vm717, %v916
          %927 = vst.msk [vmem:[%s923 + $0x18] sm:$0xff] %vm717, %v918
        $region175: #{pixtral_attention_forward.4} parent=158 // pred_fallthru
          _
        // Predicated region
        $region176: #{pixtral_attention_forward.4} parent=158 // pred_check
          _
        $region177: #{pixtral_attention_forward.4} parent=158 // pred_check_branch
          %929 = sbr.rel (%p678) target = $region179
        $region178: #{pixtral_attention_forward.4} parent=158 // pred_region
          %s930 = smul.u32 %s39, 64
          %s931 = scalar_lea.vmem %s7, %s930
          %v932 = vld [vmem:[%s931] sm:$0xff]
          %v933 = vld [vmem:[%s931 + $0x8] sm:$0xff]
          %v934 = vld [vmem:[%s931 + $0x10] sm:$0xff]
          %v935 = vld [vmem:[%s931 + $0x18] sm:$0xff]
          %v936 = vld [vmem:[%s931 + $0x20] sm:$0xff]
          %v937 = vld [vmem:[%s931 + $0x28] sm:$0xff]
          %v938 = vld [vmem:[%s931 + $0x30] sm:$0xff]
          %v939 = vld [vmem:[%s931 + $0x38] sm:$0xff]
          %s940 = scalar_lea.vmem %s8, %s930
          %v941 = vld [vmem:[%s940] sm:$0xff]
          %v942 = vld [vmem:[%s940 + $0x8] sm:$0xff]
          %v943 = vld [vmem:[%s940 + $0x10] sm:$0xff]
          %v944 = vld [vmem:[%s940 + $0x18] sm:$0xff]
          %v945 = vld [vmem:[%s940 + $0x20] sm:$0xff]
          %v946 = vld [vmem:[%s940 + $0x28] sm:$0xff]
          %v947 = vld [vmem:[%s940 + $0x30] sm:$0xff]
          %v948 = vld [vmem:[%s940 + $0x38] sm:$0xff]
          %v949 = vld [vmem:[%s583] sm:$0xf]
          %v950 = vld [vmem:[%s583 + $0x4] sm:$0xf]
          %v951 = vld [vmem:[%s583 + $0x8] sm:$0xf]
          %v952 = vld [vmem:[%s583 + $0xc] sm:$0xf]
          %v953 = vld [vmem:[%s583 + $0x10] sm:$0xf]
          %v954 = vld [vmem:[%s583 + $0x14] sm:$0xf]
          %v955 = vld [vmem:[%s583 + $0x18] sm:$0xf]
          %v956 = vld [vmem:[%s583 + $0x1c] sm:$0xf]
          %v957 = vunpack.c.l.bf16 %v949
          %v958 = vunpack.c.l.bf16 %v950
          %v959 = vunpack.c.l.bf16 %v951
          %v960 = vunpack.c.l.bf16 %v952
          %v961 = vunpack.c.l.bf16 %v953
          %v962 = vunpack.c.l.bf16 %v954
          %v963 = vunpack.c.l.bf16 %v955
          %v964 = vunpack.c.l.bf16 %v956
          %v965 = vmul.f32 %v957, %v932
          %v966 = vmul.f32 %v958, %v933
          %v967 = vmul.f32 %v959, %v934
          %v968 = vmul.f32 %v960, %v935
          %v969 = vmul.f32 %v961, %v936
          %v970 = vmul.f32 %v962, %v937
          %v971 = vmul.f32 %v963, %v938
          %v972 = vmul.f32 %v964, %v939
          %v973 = vsub.f32 0.0, %v957
          %v974 = vsub.f32 0.0, %v958
          %v975 = vsub.f32 0.0, %v959
          %v976 = vsub.f32 0.0, %v960
          %v977 = vsub.f32 0.0, %v961
          %v978 = vsub.f32 0.0, %v962
          %v979 = vsub.f32 0.0, %v963
          %v980 = vsub.f32 0.0, %v964
          %989 = vrot.lane.b32.xlu0 %v973, 96
          %v990 = vpop.permute.xlu0 %989
          %991 = vrot.lane.b32.xlu0 %v974, 96
          %v992 = vpop.permute.xlu0 %991
          %993 = vrot.lane.b32.xlu0 %v975, 96
          %v994 = vpop.permute.xlu0 %993
          %995 = vrot.lane.b32.xlu0 %v976, 96
          %v996 = vpop.permute.xlu0 %995
          %997 = vrot.lane.b32.xlu0 %v977, 96
          %v998 = vpop.permute.xlu0 %997
          %999 = vrot.lane.b32.xlu0 %v978, 96
          %v1000 = vpop.permute.xlu0 %999
          %1001 = vrot.lane.b32.xlu0 %v979, 96
          %v1002 = vpop.permute.xlu0 %1001
          %1003 = vrot.lane.b32.xlu0 %v980, 96
          %v1004 = vpop.permute.xlu0 %1003
          %1021 = vrot.lane.b32.xlu0 %v957, 32
          %v1022 = vpop.permute.xlu0 %1021
          %1023 = vrot.lane.b32.xlu0 %v958, 32
          %v1024 = vpop.permute.xlu0 %1023
          %1025 = vrot.lane.b32.xlu0 %v959, 32
          %v1026 = vpop.permute.xlu0 %1025
          %1027 = vrot.lane.b32.xlu0 %v960, 32
          %v1028 = vpop.permute.xlu0 %1027
          %1029 = vrot.lane.b32.xlu0 %v961, 32
          %v1030 = vpop.permute.xlu0 %1029
          %1031 = vrot.lane.b32.xlu0 %v962, 32
          %v1032 = vpop.permute.xlu0 %1031
          %1033 = vrot.lane.b32.xlu0 %v963, 32
          %v1034 = vpop.permute.xlu0 %1033
          %1035 = vrot.lane.b32.xlu0 %v964, 32
          %v1036 = vpop.permute.xlu0 %1035
          %vm1045 = vcmask 261120
          %v1046 = vsel %vm1045, %v990, %v1022
          %v1047 = vsel %vm1045, %v992, %v1024
          %v1048 = vsel %vm1045, %v994, %v1026
          %v1049 = vsel %vm1045, %v996, %v1028
          %v1050 = vsel %vm1045, %v998, %v1030
          %v1051 = vsel %vm1045, %v1000, %v1032
          %v1052 = vsel %vm1045, %v1002, %v1034
          %v1053 = vsel %vm1045, %v1004, %v1036
          %vm1054 = vcmask 523264
          %v1055 = vsel %vm1054, %v1046, %v990
          %v1056 = vsel %vm1054, %v1047, %v992
          %v1057 = vsel %vm1054, %v1048, %v994
          %v1058 = vsel %vm1054, %v1049, %v996
          %v1059 = vsel %vm1054, %v1050, %v998
          %v1060 = vsel %vm1054, %v1051, %v1000
          %v1061 = vsel %vm1054, %v1052, %v1002
          %v1062 = vsel %vm1054, %v1053, %v1004
          %vm1063 = vcmask 785408
          %v1064 = vsel %vm1063, %v1055, %v1022
          %v1065 = vsel %vm1063, %v1056, %v1024
          %v1066 = vsel %vm1063, %v1057, %v1026
          %v1067 = vsel %vm1063, %v1058, %v1028
          %v1068 = vsel %vm1063, %v1059, %v1030
          %v1069 = vsel %vm1063, %v1060, %v1032
          %v1070 = vsel %vm1063, %v1061, %v1034
          %v1071 = vsel %vm1063, %v1062, %v1036
          %v1072 = vmul.f32 %v1064, %v941
          %v1073 = vmul.f32 %v1065, %v942
          %v1074 = vmul.f32 %v1066, %v943
          %v1075 = vmul.f32 %v1067, %v944
          %v1076 = vmul.f32 %v1068, %v945
          %v1077 = vmul.f32 %v1069, %v946
          %v1078 = vmul.f32 %v1070, %v947
          %v1079 = vmul.f32 %v1071, %v948
          %v1080 = vadd.f32 %v965, %v1072
          %v1081 = vadd.f32 %v966, %v1073
          %v1082 = vadd.f32 %v967, %v1074
          %v1083 = vadd.f32 %v968, %v1075
          %v1084 = vadd.f32 %v969, %v1076
          %v1085 = vadd.f32 %v970, %v1077
          %v1086 = vadd.f32 %v971, %v1078
          %v1087 = vadd.f32 %v972, %v1079
          %v1088 = vpack.c.bf16 %v1081, %v1080
          %v1089 = vpack.c.bf16 %v1083, %v1082
          %v1090 = vpack.c.bf16 %v1085, %v1084
          %v1091 = vpack.c.bf16 %v1087, %v1086
          %v1092 = vld [vmem:[%s590] sm:$0xf]
          %v1093 = vld [vmem:[%s590 + $0x4] sm:$0xf]
          %v1094 = vld [vmem:[%s590 + $0x8] sm:$0xf]
          %v1095 = vld [vmem:[%s590 + $0xc] sm:$0xf]
          %v1096 = vld [vmem:[%s590 + $0x10] sm:$0xf]
          %v1097 = vld [vmem:[%s590 + $0x14] sm:$0xf]
          %v1098 = vld [vmem:[%s590 + $0x18] sm:$0xf]
          %v1099 = vld [vmem:[%s590 + $0x1c] sm:$0xf]
          %v1100 = vld [vmem:[%s655] sm:$0xff]
          %v1101 = vld [vmem:[%s655 + $0x8] sm:$0xff]
          %v1102 = vld [vmem:[%s655 + $0x10] sm:$0xff]
          %v1103 = vld [vmem:[%s655 + $0x18] sm:$0xff]
          %v1104 = vld [vmem:[%s655 + $0x20] sm:$0xff]
          %v1105 = vld [vmem:[%s655 + $0x28] sm:$0xff]
          %v1106 = vld [vmem:[%s655 + $0x30] sm:$0xff]
          %v1107 = vld [vmem:[%s655 + $0x38] sm:$0xff]
          %v1108 = vld [vmem:[%s663] sm:$0xff]
          %1109 = vset.pattern.permute.xlu0 0
          %1110 = vperm.xlu0 %1109, %v1100
          %v1111 = vpop.permute.xlu0 %1110
          %1112 = vset.pattern.permute.xlu0 0
          %1113 = vperm.xlu0 %1112, %v1101
          %v1114 = vpop.permute.xlu0 %1113
          %1115 = vset.pattern.permute.xlu0 0
          %1116 = vperm.xlu0 %1115, %v1102
          %v1117 = vpop.permute.xlu0 %1116
          %1118 = vset.pattern.permute.xlu0 0
          %1119 = vperm.xlu0 %1118, %v1103
          %v1120 = vpop.permute.xlu0 %1119
          %1121 = vset.pattern.permute.xlu0 0
          %1122 = vperm.xlu0 %1121, %v1104
          %v1123 = vpop.permute.xlu0 %1122
          %1124 = vset.pattern.permute.xlu0 0
          %1125 = vperm.xlu0 %1124, %v1105
          %v1126 = vpop.permute.xlu0 %1125
          %1127 = vset.pattern.permute.xlu0 0
          %1128 = vperm.xlu0 %1127, %v1106
          %v1129 = vpop.permute.xlu0 %1128
          %1130 = vset.pattern.permute.xlu0 0
          %1131 = vperm.xlu0 %1130, %v1107
          %v1132 = vpop.permute.xlu0 %1131
          %v1133 = vlaneseq
          %v1134 = vshrl.u32 %v1133, 7
          %v1135 = vsub.s32 0, %v1134
          %v1136 = vrot.slane %v1108, %v1135
          %vm1137 = vcmp.eq.s32.totalorder %v1111, %v1136
          %vm1138 = vcmp.eq.s32.totalorder %v1114, %v1136
          %vm1139 = vcmp.eq.s32.totalorder %v1117, %v1136
          %vm1140 = vcmp.eq.s32.totalorder %v1120, %v1136
          %vm1141 = vcmp.eq.s32.totalorder %v1123, %v1136
          %vm1142 = vcmp.eq.s32.totalorder %v1126, %v1136
          %vm1143 = vcmp.eq.s32.totalorder %v1129, %v1136
          %vm1144 = vcmp.eq.s32.totalorder %v1132, %v1136
          %v1145 = vld [vmem:[#allocation2] sm:$0xff]
          %v1146 = vld [vmem:[#allocation2 + $0x8] sm:$0xff]
          %v1147 = vld [vmem:[#allocation2 + $0x10] sm:$0xff]
          %v1148 = vld [vmem:[#allocation2 + $0x18] sm:$0xff]
          %v1150 = vsel %vm1054, %v1145, 0
          %v1153 = vsel %vm1054, %v1146, 0
          %v1156 = vsel %vm1054, %v1147, 0
          %v1159 = vsel %vm1054, %v1148, 0
          %v1162 = vsel %vm1054, %v1088, 0
          %v1165 = vsel %vm1054, %v1089, 0
          %v1168 = vsel %vm1054, %v1090, 0
          %v1171 = vsel %vm1054, %v1091, 0
          %1173 = vmatprep.subr.bf16.mxu0 0
          %1174 = vmatpush1.bf16.xpose.msra.mxu0 %v1162
          %1175 = vmatprep.subr.bf16.mxu0 0
          %1176 = vmatpush1.bf16.xpose.msra.mxu0 %v1165
          %1177 = vmatprep.subr.bf16.mxu0 0
          %1178 = vmatpush1.bf16.xpose.msra.mxu0 %v1168
          %1179 = vmatprep.subr.bf16.mxu0 0
          %1180 = vmatpush1.bf16.xpose.msra.mxu0 %v1171
          %1181 = vmatprep.subr.bf16.mxu0 0
          %1182 = vmatpush1.bf16.xpose.msra.mxu0 0
          %1183 = vmatprep.subr.bf16.mxu0 0
          %1184 = vmatpush1.bf16.xpose.msra.mxu0 0
          %1185 = vmatprep.subr.bf16.mxu0 0
          %1186 = vmatpush1.bf16.xpose.msra.mxu0 0
          %1187 = vmatprep.subr.bf16.mxu0 0
          %1188 = vmatpush1.bf16.xpose.msra.mxu0 0
          %1189 = vmatprep.subr.bf16.mxu0 0
          %1190 = vmatpush1.bf16.xpose.msra.mxu0 0
          %1191 = vmatprep.subr.bf16.mxu0 0
          %1192 = vmatpush1.bf16.xpose.msra.mxu0 0
          %1193 = vmatprep.subr.bf16.mxu0 0
          %1194 = vmatpush1.bf16.xpose.msra.mxu0 0
          %1195 = vmatprep.subr.bf16.mxu0 0
          %1196 = vmatpush1.bf16.xpose.msra.mxu0 0
          %1197 = vmatprep.subr.bf16.mxu0 0
          %1198 = vmatpush1.bf16.xpose.msra.mxu0 0
          %1199 = vmatprep.subr.bf16.mxu0 0
          %1200 = vmatpush1.bf16.xpose.msra.mxu0 0
          %1201 = vmatprep.subr.bf16.mxu0 0
          %1202 = vmatpush1.bf16.xpose.msra.mxu0 0
          %1203 = vmatprep.subr.bf16.mxu0 0
          %1204 = vmatpush1.bf16.xpose.msra.mxu0 0
          %1205 = vmatprep.mubr.bf16.mxu0 0
          %1206 = vmatmul.mubr.bf16.gmra.mrb[0].mxu0 %v1150
          %v1207 = vpop.f32.mrb[0].mxu0
          %v1208 = vadd.f32 0.0, %v1207
          %v1209 = vpop.f32.mrb[0].mxu0
          %v1210 = vpop.f32.mrb[0].mxu0
          %v1211 = vadd.f32 0.0, %v1210
          %v1212 = vpop.f32.mrb[0].mxu0
          %1213 = vmatprep.mubr.bf16.mxu0 0
          %1214 = vmatmul.mubr.bf16.gmra.mrb[0].mxu0 %v1153
          %v1215 = vpop.f32.mrb[0].mxu0
          %v1216 = vadd.f32 0.0, %v1215
          %v1217 = vpop.f32.mrb[0].mxu0
          %v1218 = vpop.f32.mrb[0].mxu0
          %v1219 = vadd.f32 0.0, %v1218
          %v1220 = vpop.f32.mrb[0].mxu0
          %1221 = vmatprep.mubr.bf16.mxu0 0
          %1222 = vmatmul.mubr.bf16.gmra.mrb[0].mxu0 %v1156
          %v1223 = vpop.f32.mrb[0].mxu0
          %v1224 = vadd.f32 0.0, %v1223
          %v1225 = vpop.f32.mrb[0].mxu0
          %v1226 = vpop.f32.mrb[0].mxu0
          %v1227 = vadd.f32 0.0, %v1226
          %v1228 = vpop.f32.mrb[0].mxu0
          %1229 = vmatprep.mubr.bf16.mxu0 0
          %1230 = vmatmul.mubr.bf16.gmra.mrb[0].mxu0 %v1159
          %v1231 = vpop.f32.mrb[0].mxu0
          %v1232 = vadd.f32 0.0, %v1231
          %v1233 = vpop.f32.mrb[0].mxu0
          %v1234 = vpop.f32.mrb[0].mxu0
          %v1235 = vadd.f32 0.0, %v1234
          %v1236 = vpop.f32.mrb[0].mxu0
          %1237 = vdwg.mxu0
          %v1238 = vsel %vm1137, %v1208, -1e+30
          %v1239 = vsel %vm1138, %v1211, -1e+30
          %v1240 = vsel %vm1139, %v1216, -1e+30
          %v1241 = vsel %vm1140, %v1219, -1e+30
          %v1242 = vsel %vm1141, %v1224, -1e+30
          %v1243 = vsel %vm1142, %v1227, -1e+30
          %v1244 = vsel %vm1143, %v1232, -1e+30
          %v1245 = vsel %vm1144, %v1235, -1e+30
          %v1246 = vld [vmem:[#allocation3] sm:$0xff]
          %v1247 = vld [vmem:[#allocation3 + $0x8] sm:$0xff]
          %v1248 = vld [vmem:[#allocation3 + $0x10] sm:$0xff]
          %v1249 = vld [vmem:[#allocation3 + $0x18] sm:$0xff]
          %v1250 = vld [vmem:[#allocation3 + $0x20] sm:$0xff]
          %v1251 = vld [vmem:[#allocation3 + $0x28] sm:$0xff]
          %v1252 = vld [vmem:[#allocation3 + $0x30] sm:$0xff]
          %v1253 = vld [vmem:[#allocation3 + $0x38] sm:$0xff]
          %v1254 = vsel %vm1054, %v1238, -inf
          %1255 = vmax.xlane.f32.xlu0 %v1254
          %v1256 = vpop.xlane.xlu0 %1255
          %v1257 = vsel %vm1054, %v1239, -inf
          %1258 = vmax.xlane.f32.xlu0 %v1257
          %v1259 = vpop.xlane.xlu0 %1258
          %v1260 = vsel %vm1054, %v1240, -inf
          %1261 = vmax.xlane.f32.xlu0 %v1260
          %v1262 = vpop.xlane.xlu0 %1261
          %v1263 = vsel %vm1054, %v1241, -inf
          %1264 = vmax.xlane.f32.xlu0 %v1263
          %v1265 = vpop.xlane.xlu0 %1264
          %v1266 = vsel %vm1054, %v1242, -inf
          %1267 = vmax.xlane.f32.xlu0 %v1266
          %v1268 = vpop.xlane.xlu0 %1267
          %v1269 = vsel %vm1054, %v1243, -inf
          %1270 = vmax.xlane.f32.xlu0 %v1269
          %v1271 = vpop.xlane.xlu0 %1270
          %v1272 = vsel %vm1054, %v1244, -inf
          %1273 = vmax.xlane.f32.xlu0 %v1272
          %v1274 = vpop.xlane.xlu0 %1273
          %v1275 = vsel %vm1054, %v1245, -inf
          %1276 = vmax.xlane.f32.xlu0 %v1275
          %v1277 = vpop.xlane.xlu0 %1276
          %v1278 = vmax.f32 %v1246, %v1256
          %v1279 = vmax.f32 %v1247, %v1259
          %v1280 = vmax.f32 %v1248, %v1262
          %v1281 = vmax.f32 %v1249, %v1265
          %v1282 = vmax.f32 %v1250, %v1268
          %v1283 = vmax.f32 %v1251, %v1271
          %v1284 = vmax.f32 %v1252, %v1274
          %v1285 = vmax.f32 %v1253, %v1277
          %v1286 = vsub.f32 %v1246, %v1278
          %v1287 = vsub.f32 %v1247, %v1279
          %v1288 = vsub.f32 %v1248, %v1280
          %v1289 = vsub.f32 %v1249, %v1281
          %v1290 = vsub.f32 %v1250, %v1282
          %v1291 = vsub.f32 %v1251, %v1283
          %v1292 = vsub.f32 %v1252, %v1284
          %v1293 = vsub.f32 %v1253, %v1285
          %v1294 = vmul.f32 %v1286, 1.442695
          %v1295 = vpow.pop %v1294
          %v1296 = vmul.f32 %v1287, 1.442695
          %v1297 = vpow.pop %v1296
          %v1298 = vmul.f32 %v1288, 1.442695
          %v1299 = vpow.pop %v1298
          %v1300 = vmul.f32 %v1289, 1.442695
          %v1301 = vpow.pop %v1300
          %v1302 = vmul.f32 %v1290, 1.442695
          %v1303 = vpow.pop %v1302
          %v1304 = vmul.f32 %v1291, 1.442695
          %v1305 = vpow.pop %v1304
          %v1306 = vmul.f32 %v1292, 1.442695
          %v1307 = vpow.pop %v1306
          %v1308 = vmul.f32 %v1293, 1.442695
          %v1309 = vpow.pop %v1308
          %1311 = vset.pattern.permute.xlu0 0
          %1312 = vperm.xlu0 %1311, %v1278
          %v1313 = vpop.permute.xlu0 %1312
          %1316 = vset.pattern.permute.xlu0 0
          %1317 = vperm.xlu0 %1316, %v1279
          %v1318 = vpop.permute.xlu0 %1317
          %1321 = vset.pattern.permute.xlu0 0
          %1322 = vperm.xlu0 %1321, %v1280
          %v1323 = vpop.permute.xlu0 %1322
          %1326 = vset.pattern.permute.xlu0 0
          %1327 = vperm.xlu0 %1326, %v1281
          %v1328 = vpop.permute.xlu0 %1327
          %1331 = vset.pattern.permute.xlu0 0
          %1332 = vperm.xlu0 %1331, %v1282
          %v1333 = vpop.permute.xlu0 %1332
          %1336 = vset.pattern.permute.xlu0 0
          %1337 = vperm.xlu0 %1336, %v1283
          %v1338 = vpop.permute.xlu0 %1337
          %1341 = vset.pattern.permute.xlu0 0
          %1342 = vperm.xlu0 %1341, %v1284
          %v1343 = vpop.permute.xlu0 %1342
          %1346 = vset.pattern.permute.xlu0 0
          %1347 = vperm.xlu0 %1346, %v1285
          %v1348 = vpop.permute.xlu0 %1347
          %v1350 = vsub.f32 %v1238, %v1313
          %v1351 = vsub.f32 %v1239, %v1318
          %v1352 = vsub.f32 %v1240, %v1323
          %v1353 = vsub.f32 %v1241, %v1328
          %v1354 = vsub.f32 %v1242, %v1333
          %v1355 = vsub.f32 %v1243, %v1338
          %v1356 = vsub.f32 %v1244, %v1343
          %v1357 = vsub.f32 %v1245, %v1348
          %v1358 = vmul.f32 %v1350, 1.442695
          %v1359 = vpow.pop %v1358
          %v1360 = vmul.f32 %v1351, 1.442695
          %v1361 = vpow.pop %v1360
          %v1362 = vmul.f32 %v1352, 1.442695
          %v1363 = vpow.pop %v1362
          %v1364 = vmul.f32 %v1353, 1.442695
          %v1365 = vpow.pop %v1364
          %v1366 = vmul.f32 %v1354, 1.442695
          %v1367 = vpow.pop %v1366
          %v1368 = vmul.f32 %v1355, 1.442695
          %v1369 = vpow.pop %v1368
          %v1370 = vmul.f32 %v1356, 1.442695
          %v1371 = vpow.pop %v1370
          %v1372 = vmul.f32 %v1357, 1.442695
          %v1373 = vpow.pop %v1372
          %v1374 = vld [vmem:[#allocation4] sm:$0xff]
          %v1375 = vld [vmem:[#allocation4 + $0x8] sm:$0xff]
          %v1376 = vld [vmem:[#allocation4 + $0x10] sm:$0xff]
          %v1377 = vld [vmem:[#allocation4 + $0x18] sm:$0xff]
          %v1378 = vld [vmem:[#allocation4 + $0x20] sm:$0xff]
          %v1379 = vld [vmem:[#allocation4 + $0x28] sm:$0xff]
          %v1380 = vld [vmem:[#allocation4 + $0x30] sm:$0xff]
          %v1381 = vld [vmem:[#allocation4 + $0x38] sm:$0xff]
          %v1382 = vmul.f32 %v1295, %v1374
          %v1383 = vmul.f32 %v1297, %v1375
          %v1384 = vmul.f32 %v1299, %v1376
          %v1385 = vmul.f32 %v1301, %v1377
          %v1386 = vmul.f32 %v1303, %v1378
          %v1387 = vmul.f32 %v1305, %v1379
          %v1388 = vmul.f32 %v1307, %v1380
          %v1389 = vmul.f32 %v1309, %v1381
          %v1390 = vsel %vm1054, %v1359, 0.0
          %1391 = vadd.xlane.f32.xlu0 %v1390
          %v1392 = vpop.xlane.xlu0 %1391
          %v1393 = vsel %vm1054, %v1361, 0.0
          %1394 = vadd.xlane.f32.xlu0 %v1393
          %v1395 = vpop.xlane.xlu0 %1394
          %v1396 = vsel %vm1054, %v1363, 0.0
          %1397 = vadd.xlane.f32.xlu0 %v1396
          %v1398 = vpop.xlane.xlu0 %1397
          %v1399 = vsel %vm1054, %v1365, 0.0
          %1400 = vadd.xlane.f32.xlu0 %v1399
          %v1401 = vpop.xlane.xlu0 %1400
          %v1402 = vsel %vm1054, %v1367, 0.0
          %1403 = vadd.xlane.f32.xlu0 %v1402
          %v1404 = vpop.xlane.xlu0 %1403
          %v1405 = vsel %vm1054, %v1369, 0.0
          %1406 = vadd.xlane.f32.xlu0 %v1405
          %v1407 = vpop.xlane.xlu0 %1406
          %v1408 = vsel %vm1054, %v1371, 0.0
          %1409 = vadd.xlane.f32.xlu0 %v1408
          %v1410 = vpop.xlane.xlu0 %1409
          %v1411 = vsel %vm1054, %v1373, 0.0
          %1412 = vadd.xlane.f32.xlu0 %v1411
          %v1413 = vpop.xlane.xlu0 %1412
          %v1414 = vadd.f32 %v1382, %v1392
          %v1415 = vadd.f32 %v1383, %v1395
          %v1416 = vadd.f32 %v1384, %v1398
          %v1417 = vadd.f32 %v1385, %v1401
          %v1418 = vadd.f32 %v1386, %v1404
          %v1419 = vadd.f32 %v1387, %v1407
          %v1420 = vadd.f32 %v1388, %v1410
          %v1421 = vadd.f32 %v1389, %v1413
          %vm1422 = vcmask 7168
          %1423 = vst.msk [vmem:[#allocation4] sm:$0xff] %vm1422, %v1414
          %1424 = vst.msk [vmem:[#allocation4 + $0x8] sm:$0xff] %vm1422, %v1415
          %1425 = vst.msk [vmem:[#allocation4 + $0x10] sm:$0xff] %vm1422, %v1416
          %1426 = vst.msk [vmem:[#allocation4 + $0x18] sm:$0xff] %vm1422, %v1417
          %1427 = vst.msk [vmem:[#allocation4 + $0x20] sm:$0xff] %vm1422, %v1418
          %1428 = vst.msk [vmem:[#allocation4 + $0x28] sm:$0xff] %vm1422, %v1419
          %1429 = vst.msk [vmem:[#allocation4 + $0x30] sm:$0xff] %vm1422, %v1420
          %1430 = vst.msk [vmem:[#allocation4 + $0x38] sm:$0xff] %vm1422, %v1421
          %v1431 = vld [vmem:[#allocation5] sm:$0xff]
          %v1432 = vld [vmem:[#allocation5 + $0x8] sm:$0xff]
          %v1433 = vld [vmem:[#allocation5 + $0x10] sm:$0xff]
          %v1434 = vld [vmem:[#allocation5 + $0x18] sm:$0xff]
          %v1435 = vld [vmem:[#allocation5 + $0x20] sm:$0xff]
          %v1436 = vld [vmem:[#allocation5 + $0x28] sm:$0xff]
          %v1437 = vld [vmem:[#allocation5 + $0x30] sm:$0xff]
          %v1438 = vld [vmem:[#allocation5 + $0x38] sm:$0xff]
          %1440 = vset.pattern.permute.xlu0 0
          %1441 = vperm.xlu0 %1440, %v1295
          %v1442 = vpop.permute.xlu0 %1441
          %1445 = vset.pattern.permute.xlu0 0
          %1446 = vperm.xlu0 %1445, %v1297
          %v1447 = vpop.permute.xlu0 %1446
          %1450 = vset.pattern.permute.xlu0 0
          %1451 = vperm.xlu0 %1450, %v1299
          %v1452 = vpop.permute.xlu0 %1451
          %1455 = vset.pattern.permute.xlu0 0
          %1456 = vperm.xlu0 %1455, %v1301
          %v1457 = vpop.permute.xlu0 %1456
          %1460 = vset.pattern.permute.xlu0 0
          %1461 = vperm.xlu0 %1460, %v1303
          %v1462 = vpop.permute.xlu0 %1461
          %1465 = vset.pattern.permute.xlu0 0
          %1466 = vperm.xlu0 %1465, %v1305
          %v1467 = vpop.permute.xlu0 %1466
          %1470 = vset.pattern.permute.xlu0 0
          %1471 = vperm.xlu0 %1470, %v1307
          %v1472 = vpop.permute.xlu0 %1471
          %1475 = vset.pattern.permute.xlu0 0
          %1476 = vperm.xlu0 %1475, %v1309
          %v1477 = vpop.permute.xlu0 %1476
          %v1479 = vmul.f32 %v1442, %v1431
          %v1480 = vmul.f32 %v1447, %v1432
          %v1481 = vmul.f32 %v1452, %v1433
          %v1482 = vmul.f32 %v1457, %v1434
          %v1483 = vmul.f32 %v1462, %v1435
          %v1484 = vmul.f32 %v1467, %v1436
          %v1485 = vmul.f32 %v1472, %v1437
          %v1486 = vmul.f32 %v1477, %v1438
          %v1487 = vpack.c.bf16 %v1361, %v1359
          %v1488 = vpack.c.bf16 %v1365, %v1363
          %v1489 = vpack.c.bf16 %v1369, %v1367
          %v1490 = vpack.c.bf16 %v1373, %v1371
          %v1499 = vunpack.c.l.b16 %v1092
          %v1500 = vunpack.c.l.b16 %v1093
          %v1501 = vunpack.c.l.b16 %v1094
          %v1502 = vunpack.c.l.b16 %v1095
          %v1503 = vunpack.c.l.b16 %v1096
          %v1504 = vunpack.c.l.b16 %v1097
          %v1505 = vunpack.c.l.b16 %v1098
          %v1506 = vunpack.c.l.b16 %v1099
          %v1507 = vpack.c.b16 %v1500, %v1499
          %v1508 = vpack.c.b16 %v1502, %v1501
          %v1509 = vpack.c.b16 %v1504, %v1503
          %v1510 = vpack.c.b16 %v1506, %v1505
          %v1516 = vsel %vm1054, %v1487, 0
          %v1519 = vsel %vm1054, %v1488, 0
          %v1522 = vsel %vm1054, %v1489, 0
          %v1525 = vsel %vm1054, %v1490, 0
          %1527 = vmatprep.subr.bf16.mxu0 0
          %1528 = vmatpush1.bf16.msra.mxu0 %v1507
          %1529 = vmatprep.subr.bf16.mxu0 0
          %1530 = vmatpush1.bf16.msra.mxu0 %v1508
          %1531 = vmatprep.subr.bf16.mxu0 0
          %1532 = vmatpush1.bf16.msra.mxu0 %v1509
          %1533 = vmatprep.subr.bf16.mxu0 0
          %1534 = vmatpush1.bf16.msra.mxu0 %v1510
          %1535 = vmatprep.subr.bf16.mxu0 0
          %1536 = vmatpush1.bf16.msra.mxu0 0
          %1537 = vmatprep.subr.bf16.mxu0 0
          %1538 = vmatpush1.bf16.msra.mxu0 0
          %1539 = vmatprep.subr.bf16.mxu0 0
          %1540 = vmatpush1.bf16.msra.mxu0 0
          %1541 = vmatprep.subr.bf16.mxu0 0
          %1542 = vmatpush1.bf16.msra.mxu0 0
          %1543 = vmatprep.subr.bf16.mxu0 0
          %1544 = vmatpush1.bf16.msra.mxu0 0
          %1545 = vmatprep.subr.bf16.mxu0 0
          %1546 = vmatpush1.bf16.msra.mxu0 0
          %1547 = vmatprep.subr.bf16.mxu0 0
          %1548 = vmatpush1.bf16.msra.mxu0 0
          %1549 = vmatprep.subr.bf16.mxu0 0
          %1550 = vmatpush1.bf16.msra.mxu0 0
          %1551 = vmatprep.subr.bf16.mxu0 0
          %1552 = vmatpush1.bf16.msra.mxu0 0
          %1553 = vmatprep.subr.bf16.mxu0 0
          %1554 = vmatpush1.bf16.msra.mxu0 0
          %1555 = vmatprep.subr.bf16.mxu0 0
          %1556 = vmatpush1.bf16.msra.mxu0 0
          %1557 = vmatprep.subr.bf16.mxu0 0
          %1558 = vmatpush1.bf16.msra.mxu0 0
          %1559 = vmatprep.mubr.bf16.mxu0 0
          %1560 = vmatmul.mubr.bf16.gmra.mrb[0].mxu0 %v1516
          %v1561 = vpop.f32.mrb[0].mxu0
          %v1562 = vadd.f32 0.0, %v1561
          %v1563 = vpop.f32.mrb[0].mxu0
          %v1564 = vpop.f32.mrb[0].mxu0
          %v1565 = vadd.f32 0.0, %v1564
          %v1566 = vpop.f32.mrb[0].mxu0
          %1567 = vmatprep.mubr.bf16.mxu0 0
          %1568 = vmatmul.mubr.bf16.gmra.mrb[0].mxu0 %v1519
          %v1569 = vpop.f32.mrb[0].mxu0
          %v1570 = vadd.f32 0.0, %v1569
          %v1571 = vpop.f32.mrb[0].mxu0
          %v1572 = vpop.f32.mrb[0].mxu0
          %v1573 = vadd.f32 0.0, %v1572
          %v1574 = vpop.f32.mrb[0].mxu0
          %1575 = vmatprep.mubr.bf16.mxu0 0
          %1576 = vmatmul.mubr.bf16.gmra.mrb[0].mxu0 %v1522
          %v1577 = vpop.f32.mrb[0].mxu0
          %v1578 = vadd.f32 0.0, %v1577
          %v1579 = vpop.f32.mrb[0].mxu0
          %v1580 = vpop.f32.mrb[0].mxu0
          %v1581 = vadd.f32 0.0, %v1580
          %v1582 = vpop.f32.mrb[0].mxu0
          %1583 = vmatprep.mubr.bf16.mxu0 0
          %1584 = vmatmul.mubr.bf16.gmra.mrb[0].mxu0 %v1525
          %v1585 = vpop.f32.mrb[0].mxu0
          %v1586 = vadd.f32 0.0, %v1585
          %v1587 = vpop.f32.mrb[0].mxu0
          %v1588 = vpop.f32.mrb[0].mxu0
          %v1589 = vadd.f32 0.0, %v1588
          %v1590 = vpop.f32.mrb[0].mxu0
          %1591 = vdwg.mxu0
          %v1592 = vadd.f32 %v1479, %v1562
          %v1593 = vadd.f32 %v1480, %v1565
          %v1594 = vadd.f32 %v1481, %v1570
          %v1595 = vadd.f32 %v1482, %v1573
          %v1596 = vadd.f32 %v1483, %v1578
          %v1597 = vadd.f32 %v1484, %v1581
          %v1598 = vadd.f32 %v1485, %v1586
          %v1599 = vadd.f32 %v1486, %v1589
          %1600 = vst.msk [vmem:[#allocation5] sm:$0xff] %vm1054, %v1592
          %1601 = vst.msk [vmem:[#allocation5 + $0x8] sm:$0xff] %vm1054, %v1593
          %1602 = vst.msk [vmem:[#allocation5 + $0x10] sm:$0xff] %vm1054, %v1594
          %1603 = vst.msk [vmem:[#allocation5 + $0x18] sm:$0xff] %vm1054, %v1595
          %1604 = vst.msk [vmem:[#allocation5 + $0x20] sm:$0xff] %vm1054, %v1596
          %1605 = vst.msk [vmem:[#allocation5 + $0x28] sm:$0xff] %vm1054, %v1597
          %1606 = vst.msk [vmem:[#allocation5 + $0x30] sm:$0xff] %vm1054, %v1598
          %1607 = vst.msk [vmem:[#allocation5 + $0x38] sm:$0xff] %vm1054, %v1599
          %1608 = vst.msk [vmem:[#allocation3] sm:$0xff] %vm1422, %v1278
          %1609 = vst.msk [vmem:[#allocation3 + $0x8] sm:$0xff] %vm1422, %v1279
          %1610 = vst.msk [vmem:[#allocation3 + $0x10] sm:$0xff] %vm1422, %v1280
          %1611 = vst.msk [vmem:[#allocation3 + $0x18] sm:$0xff] %vm1422, %v1281
          %1612 = vst.msk [vmem:[#allocation3 + $0x20] sm:$0xff] %vm1422, %v1282
          %1613 = vst.msk [vmem:[#allocation3 + $0x28] sm:$0xff] %vm1422, %v1283
          %1614 = vst.msk [vmem:[#allocation3 + $0x30] sm:$0xff] %vm1422, %v1284
          %1615 = vst.msk [vmem:[#allocation3 + $0x38] sm:$0xff] %vm1422, %v1285
          %s1616 = scalar_lea.vmem [#allocation2], 32
          %v1617 = vld [vmem:[%s1616] sm:$0xff]
          %v1618 = vld [vmem:[%s1616 + $0x8] sm:$0xff]
          %v1619 = vld [vmem:[%s1616 + $0x10] sm:$0xff]
          %v1620 = vld [vmem:[%s1616 + $0x18] sm:$0xff]
          %1625 = vrot.lane.b32.xlu0 %v1088, 64
          %v1626 = vpop.permute.xlu0 %1625
          %1627 = vrot.lane.b32.xlu0 %v1089, 64
          %v1628 = vpop.permute.xlu0 %1627
          %1629 = vrot.lane.b32.xlu0 %v1090, 64
          %v1630 = vpop.permute.xlu0 %1629
          %1631 = vrot.lane.b32.xlu0 %v1091, 64
          %v1632 = vpop.permute.xlu0 %1631
          %v1634 = vsel %vm1054, %v1617, 0
          %v1637 = vsel %vm1054, %v1618, 0
          %v1640 = vsel %vm1054, %v1619, 0
          %v1643 = vsel %vm1054, %v1620, 0
          %v1646 = vsel %vm1054, %v1626, 0
          %v1649 = vsel %vm1054, %v1628, 0
          %v1652 = vsel %vm1054, %v1630, 0
          %v1655 = vsel %vm1054, %v1632, 0
          %1657 = vmatprep.subr.bf16.mxu0 0
          %1658 = vmatpush1.bf16.xpose.msra.mxu0 %v1646
          %1659 = vmatprep.subr.bf16.mxu0 0
          %1660 = vmatpush1.bf16.xpose.msra.mxu0 %v1649
          %1661 = vmatprep.subr.bf16.mxu0 0
          %1662 = vmatpush1.bf16.xpose.msra.mxu0 %v1652
          %1663 = vmatprep.subr.bf16.mxu0 0
          %1664 = vmatpush1.bf16.xpose.msra.mxu0 %v1655
          %1665 = vmatprep.subr.bf16.mxu0 0
          %1666 = vmatpush1.bf16.xpose.msra.mxu0 0
          %1667 = vmatprep.subr.bf16.mxu0 0
          %1668 = vmatpush1.bf16.xpose.msra.mxu0 0
          %1669 = vmatprep.subr.bf16.mxu0 0
          %1670 = vmatpush1.bf16.xpose.msra.mxu0 0
          %1671 = vmatprep.subr.bf16.mxu0 0
          %1672 = vmatpush1.bf16.xpose.msra.mxu0 0
          %1673 = vmatprep.subr.bf16.mxu0 0
          %1674 = vmatpush1.bf16.xpose.msra.mxu0 0
          %1675 = vmatprep.subr.bf16.mxu0 0
          %1676 = vmatpush1.bf16.xpose.msra.mxu0 0
          %1677 = vmatprep.subr.bf16.mxu0 0
          %1678 = vmatpush1.bf16.xpose.msra.mxu0 0
          %1679 = vmatprep.subr.bf16.mxu0 0
          %1680 = vmatpush1.bf16.xpose.msra.mxu0 0
          %1681 = vmatprep.subr.bf16.mxu0 0
          %1682 = vmatpush1.bf16.xpose.msra.mxu0 0
          %1683 = vmatprep.subr.bf16.mxu0 0
          %1684 = vmatpush1.bf16.xpose.msra.mxu0 0
          %1685 = vmatprep.subr.bf16.mxu0 0
          %1686 = vmatpush1.bf16.xpose.msra.mxu0 0
          %1687 = vmatprep.subr.bf16.mxu0 0
          %1688 = vmatpush1.bf16.xpose.msra.mxu0 0
          %1689 = vmatprep.mubr.bf16.mxu0 0
          %1690 = vmatmul.mubr.bf16.gmra.mrb[0].mxu0 %v1634
          %v1691 = vpop.f32.mrb[0].mxu0
          %v1692 = vadd.f32 0.0, %v1691
          %v1693 = vpop.f32.mrb[0].mxu0
          %v1694 = vpop.f32.mrb[0].mxu0
          %v1695 = vadd.f32 0.0, %v1694
          %v1696 = vpop.f32.mrb[0].mxu0
          %1697 = vmatprep.mubr.bf16.mxu0 0
          %1698 = vmatmul.mubr.bf16.gmra.mrb[0].mxu0 %v1637
          %v1699 = vpop.f32.mrb[0].mxu0
          %v1700 = vadd.f32 0.0, %v1699
          %v1701 = vpop.f32.mrb[0].mxu0
          %v1702 = vpop.f32.mrb[0].mxu0
          %v1703 = vadd.f32 0.0, %v1702
          %v1704 = vpop.f32.mrb[0].mxu0
          %1705 = vmatprep.mubr.bf16.mxu0 0
          %1706 = vmatmul.mubr.bf16.gmra.mrb[0].mxu0 %v1640
          %v1707 = vpop.f32.mrb[0].mxu0
          %v1708 = vadd.f32 0.0, %v1707
          %v1709 = vpop.f32.mrb[0].mxu0
          %v1710 = vpop.f32.mrb[0].mxu0
          %v1711 = vadd.f32 0.0, %v1710
          %v1712 = vpop.f32.mrb[0].mxu0
          %1713 = vmatprep.mubr.bf16.mxu0 0
          %1714 = vmatmul.mubr.bf16.gmra.mrb[0].mxu0 %v1643
          %v1715 = vpop.f32.mrb[0].mxu0
          %v1716 = vadd.f32 0.0, %v1715
          %v1717 = vpop.f32.mrb[0].mxu0
          %v1718 = vpop.f32.mrb[0].mxu0
          %v1719 = vadd.f32 0.0, %v1718
          %v1720 = vpop.f32.mrb[0].mxu0
          %1721 = vdwg.mxu0
          %v1722 = vsel %vm1137, %v1692, -1e+30
          %v1723 = vsel %vm1138, %v1695, -1e+30
          %v1724 = vsel %vm1139, %v1700, -1e+30
          %v1725 = vsel %vm1140, %v1703, -1e+30
          %v1726 = vsel %vm1141, %v1708, -1e+30
          %v1727 = vsel %vm1142, %v1711, -1e+30
          %v1728 = vsel %vm1143, %v1716, -1e+30
          %v1729 = vsel %vm1144, %v1719, -1e+30
          %s1730 = scalar_lea.vmem [#allocation3], 64
          %v1731 = vld [vmem:[%s1730] sm:$0xff]
          %v1732 = vld [vmem:[%s1730 + $0x8] sm:$0xff]
          %v1733 = vld [vmem:[%s1730 + $0x10] sm:$0xff]
          %v1734 = vld [vmem:[%s1730 + $0x18] sm:$0xff]
          %v1735 = vld [vmem:[%s1730 + $0x20] sm:$0xff]
          %v1736 = vld [vmem:[%s1730 + $0x28] sm:$0xff]
          %v1737 = vld [vmem:[%s1730 + $0x30] sm:$0xff]
          %v1738 = vld [vmem:[%s1730 + $0x38] sm:$0xff]
          %v1739 = vsel %vm1054, %v1722, -inf
          %1740 = vmax.xlane.f32.xlu0 %v1739
          %v1741 = vpop.xlane.xlu0 %1740
          %v1742 = vsel %vm1054, %v1723, -inf
          %1743 = vmax.xlane.f32.xlu0 %v1742
          %v1744 = vpop.xlane.xlu0 %1743
          %v1745 = vsel %vm1054, %v1724, -inf
          %1746 = vmax.xlane.f32.xlu0 %v1745
          %v1747 = vpop.xlane.xlu0 %1746
          %v1748 = vsel %vm1054, %v1725, -inf
          %1749 = vmax.xlane.f32.xlu0 %v1748
          %v1750 = vpop.xlane.xlu0 %1749
          %v1751 = vsel %vm1054, %v1726, -inf
          %1752 = vmax.xlane.f32.xlu0 %v1751
          %v1753 = vpop.xlane.xlu0 %1752
          %v1754 = vsel %vm1054, %v1727, -inf
          %1755 = vmax.xlane.f32.xlu0 %v1754
          %v1756 = vpop.xlane.xlu0 %1755
          %v1757 = vsel %vm1054, %v1728, -inf
          %1758 = vmax.xlane.f32.xlu0 %v1757
          %v1759 = vpop.xlane.xlu0 %1758
          %v1760 = vsel %vm1054, %v1729, -inf
          %1761 = vmax.xlane.f32.xlu0 %v1760
          %v1762 = vpop.xlane.xlu0 %1761
          %v1763 = vmax.f32 %v1731, %v1741
          %v1764 = vmax.f32 %v1732, %v1744
          %v1765 = vmax.f32 %v1733, %v1747
          %v1766 = vmax.f32 %v1734, %v1750
          %v1767 = vmax.f32 %v1735, %v1753
          %v1768 = vmax.f32 %v1736, %v1756
          %v1769 = vmax.f32 %v1737, %v1759
          %v1770 = vmax.f32 %v1738, %v1762
          %v1771 = vsub.f32 %v1731, %v1763
          %v1772 = vsub.f32 %v1732, %v1764
          %v1773 = vsub.f32 %v1733, %v1765
          %v1774 = vsub.f32 %v1734, %v1766
          %v1775 = vsub.f32 %v1735, %v1767
          %v1776 = vsub.f32 %v1736, %v1768
          %v1777 = vsub.f32 %v1737, %v1769
          %v1778 = vsub.f32 %v1738, %v1770
          %v1779 = vmul.f32 %v1771, 1.442695
          %v1780 = vpow.pop %v1779
          %v1781 = vmul.f32 %v1772, 1.442695
          %v1782 = vpow.pop %v1781
          %v1783 = vmul.f32 %v1773, 1.442695
          %v1784 = vpow.pop %v1783
          %v1785 = vmul.f32 %v1774, 1.442695
          %v1786 = vpow.pop %v1785
          %v1787 = vmul.f32 %v1775, 1.442695
          %v1788 = vpow.pop %v1787
          %v1789 = vmul.f32 %v1776, 1.442695
          %v1790 = vpow.pop %v1789
          %v1791 = vmul.f32 %v1777, 1.442695
          %v1792 = vpow.pop %v1791
          %v1793 = vmul.f32 %v1778, 1.442695
          %v1794 = vpow.pop %v1793
          %1796 = vset.pattern.permute.xlu0 0
          %1797 = vperm.xlu0 %1796, %v1763
          %v1798 = vpop.permute.xlu0 %1797
          %1801 = vset.pattern.permute.xlu0 0
          %1802 = vperm.xlu0 %1801, %v1764
          %v1803 = vpop.permute.xlu0 %1802
          %1806 = vset.pattern.permute.xlu0 0
          %1807 = vperm.xlu0 %1806, %v1765
          %v1808 = vpop.permute.xlu0 %1807
          %1811 = vset.pattern.permute.xlu0 0
          %1812 = vperm.xlu0 %1811, %v1766
          %v1813 = vpop.permute.xlu0 %1812
          %1816 = vset.pattern.permute.xlu0 0
          %1817 = vperm.xlu0 %1816, %v1767
          %v1818 = vpop.permute.xlu0 %1817
          %1821 = vset.pattern.permute.xlu0 0
          %1822 = vperm.xlu0 %1821, %v1768
          %v1823 = vpop.permute.xlu0 %1822
          %1826 = vset.pattern.permute.xlu0 0
          %1827 = vperm.xlu0 %1826, %v1769
          %v1828 = vpop.permute.xlu0 %1827
          %1831 = vset.pattern.permute.xlu0 0
          %1832 = vperm.xlu0 %1831, %v1770
          %v1833 = vpop.permute.xlu0 %1832
          %v1835 = vsub.f32 %v1722, %v1798
          %v1836 = vsub.f32 %v1723, %v1803
          %v1837 = vsub.f32 %v1724, %v1808
          %v1838 = vsub.f32 %v1725, %v1813
          %v1839 = vsub.f32 %v1726, %v1818
          %v1840 = vsub.f32 %v1727, %v1823
          %v1841 = vsub.f32 %v1728, %v1828
          %v1842 = vsub.f32 %v1729, %v1833
          %v1843 = vmul.f32 %v1835, 1.442695
          %v1844 = vpow.pop %v1843
          %v1845 = vmul.f32 %v1836, 1.442695
          %v1846 = vpow.pop %v1845
          %v1847 = vmul.f32 %v1837, 1.442695
          %v1848 = vpow.pop %v1847
          %v1849 = vmul.f32 %v1838, 1.442695
          %v1850 = vpow.pop %v1849
          %v1851 = vmul.f32 %v1839, 1.442695
          %v1852 = vpow.pop %v1851
          %v1853 = vmul.f32 %v1840, 1.442695
          %v1854 = vpow.pop %v1853
          %v1855 = vmul.f32 %v1841, 1.442695
          %v1856 = vpow.pop %v1855
          %v1857 = vmul.f32 %v1842, 1.442695
          %v1858 = vpow.pop %v1857
          %s1859 = scalar_lea.vmem [#allocation4], 64
          %v1860 = vld [vmem:[%s1859] sm:$0xff]
          %v1861 = vld [vmem:[%s1859 + $0x8] sm:$0xff]
          %v1862 = vld [vmem:[%s1859 + $0x10] sm:$0xff]
          %v1863 = vld [vmem:[%s1859 + $0x18] sm:$0xff]
          %v1864 = vld [vmem:[%s1859 + $0x20] sm:$0xff]
          %v1865 = vld [vmem:[%s1859 + $0x28] sm:$0xff]
          %v1866 = vld [vmem:[%s1859 + $0x30] sm:$0xff]
          %v1867 = vld [vmem:[%s1859 + $0x38] sm:$0xff]
          %v1868 = vmul.f32 %v1780, %v1860
          %v1869 = vmul.f32 %v1782, %v1861
          %v1870 = vmul.f32 %v1784, %v1862
          %v1871 = vmul.f32 %v1786, %v1863
          %v1872 = vmul.f32 %v1788, %v1864
          %v1873 = vmul.f32 %v1790, %v1865
          %v1874 = vmul.f32 %v1792, %v1866
          %v1875 = vmul.f32 %v1794, %v1867
          %v1876 = vsel %vm1054, %v1844, 0.0
          %1877 = vadd.xlane.f32.xlu0 %v1876
          %v1878 = vpop.xlane.xlu0 %1877
          %v1879 = vsel %vm1054, %v1846, 0.0
          %1880 = vadd.xlane.f32.xlu0 %v1879
          %v1881 = vpop.xlane.xlu0 %1880
          %v1882 = vsel %vm1054, %v1848, 0.0
          %1883 = vadd.xlane.f32.xlu0 %v1882
          %v1884 = vpop.xlane.xlu0 %1883
          %v1885 = vsel %vm1054, %v1850, 0.0
          %1886 = vadd.xlane.f32.xlu0 %v1885
          %v1887 = vpop.xlane.xlu0 %1886
          %v1888 = vsel %vm1054, %v1852, 0.0
          %1889 = vadd.xlane.f32.xlu0 %v1888
          %v1890 = vpop.xlane.xlu0 %1889
          %v1891 = vsel %vm1054, %v1854, 0.0
          %1892 = vadd.xlane.f32.xlu0 %v1891
          %v1893 = vpop.xlane.xlu0 %1892
          %v1894 = vsel %vm1054, %v1856, 0.0
          %1895 = vadd.xlane.f32.xlu0 %v1894
          %v1896 = vpop.xlane.xlu0 %1895
          %v1897 = vsel %vm1054, %v1858, 0.0
          %1898 = vadd.xlane.f32.xlu0 %v1897
          %v1899 = vpop.xlane.xlu0 %1898
          %v1900 = vadd.f32 %v1868, %v1878
          %v1901 = vadd.f32 %v1869, %v1881
          %v1902 = vadd.f32 %v1870, %v1884
          %v1903 = vadd.f32 %v1871, %v1887
          %v1904 = vadd.f32 %v1872, %v1890
          %v1905 = vadd.f32 %v1873, %v1893
          %v1906 = vadd.f32 %v1874, %v1896
          %v1907 = vadd.f32 %v1875, %v1899
          %1908 = vst.msk [vmem:[%s1859] sm:$0xff] %vm1422, %v1900
          %1909 = vst.msk [vmem:[%s1859 + $0x8] sm:$0xff] %vm1422, %v1901
          %1910 = vst.msk [vmem:[%s1859 + $0x10] sm:$0xff] %vm1422, %v1902
          %1911 = vst.msk [vmem:[%s1859 + $0x18] sm:$0xff] %vm1422, %v1903
          %1912 = vst.msk [vmem:[%s1859 + $0x20] sm:$0xff] %vm1422, %v1904
          %1913 = vst.msk [vmem:[%s1859 + $0x28] sm:$0xff] %vm1422, %v1905
          %1914 = vst.msk [vmem:[%s1859 + $0x30] sm:$0xff] %vm1422, %v1906
          %1915 = vst.msk [vmem:[%s1859 + $0x38] sm:$0xff] %vm1422, %v1907
          %s1916 = scalar_lea.vmem [#allocation5], 64
          %v1917 = vld [vmem:[%s1916] sm:$0xff]
          %v1918 = vld [vmem:[%s1916 + $0x8] sm:$0xff]
          %v1919 = vld [vmem:[%s1916 + $0x10] sm:$0xff]
          %v1920 = vld [vmem:[%s1916 + $0x18] sm:$0xff]
          %v1921 = vld [vmem:[%s1916 + $0x20] sm:$0xff]
          %v1922 = vld [vmem:[%s1916 + $0x28] sm:$0xff]
          %v1923 = vld [vmem:[%s1916 + $0x30] sm:$0xff]
          %v1924 = vld [vmem:[%s1916 + $0x38] sm:$0xff]
          %1926 = vset.pattern.permute.xlu0 0
          %1927 = vperm.xlu0 %1926, %v1780
          %v1928 = vpop.permute.xlu0 %1927
          %1931 = vset.pattern.permute.xlu0 0
          %1932 = vperm.xlu0 %1931, %v1782
          %v1933 = vpop.permute.xlu0 %1932
          %1936 = vset.pattern.permute.xlu0 0
          %1937 = vperm.xlu0 %1936, %v1784
          %v1938 = vpop.permute.xlu0 %1937
          %1941 = vset.pattern.permute.xlu0 0
          %1942 = vperm.xlu0 %1941, %v1786
          %v1943 = vpop.permute.xlu0 %1942
          %1946 = vset.pattern.permute.xlu0 0
          %1947 = vperm.xlu0 %1946, %v1788
          %v1948 = vpop.permute.xlu0 %1947
          %1951 = vset.pattern.permute.xlu0 0
          %1952 = vperm.xlu0 %1951, %v1790
          %v1953 = vpop.permute.xlu0 %1952
          %1956 = vset.pattern.permute.xlu0 0
          %1957 = vperm.xlu0 %1956, %v1792
          %v1958 = vpop.permute.xlu0 %1957
          %1961 = vset.pattern.permute.xlu0 0
          %1962 = vperm.xlu0 %1961, %v1794
          %v1963 = vpop.permute.xlu0 %1962
          %v1965 = vmul.f32 %v1928, %v1917
          %v1966 = vmul.f32 %v1933, %v1918
          %v1967 = vmul.f32 %v1938, %v1919
          %v1968 = vmul.f32 %v1943, %v1920
          %v1969 = vmul.f32 %v1948, %v1921
          %v1970 = vmul.f32 %v1953, %v1922
          %v1971 = vmul.f32 %v1958, %v1923
          %v1972 = vmul.f32 %v1963, %v1924
          %v1973 = vpack.c.bf16 %v1846, %v1844
          %v1974 = vpack.c.bf16 %v1850, %v1848
          %v1975 = vpack.c.bf16 %v1854, %v1852
          %v1976 = vpack.c.bf16 %v1858, %v1856
          %1977 = vrot.lane.b32.xlu0 %v1507, 64
          %v1978 = vpop.permute.xlu0 %1977
          %1979 = vrot.lane.b32.xlu0 %v1508, 64
          %v1980 = vpop.permute.xlu0 %1979
          %1981 = vrot.lane.b32.xlu0 %v1509, 64
          %v1982 = vpop.permute.xlu0 %1981
          %1983 = vrot.lane.b32.xlu0 %v1510, 64
          %v1984 = vpop.permute.xlu0 %1983
          %v1990 = vsel %vm1054, %v1973, 0
          %v1993 = vsel %vm1054, %v1974, 0
          %v1996 = vsel %vm1054, %v1975, 0
          %v1999 = vsel %vm1054, %v1976, 0
          %2001 = vmatprep.subr.bf16.mxu0 0
          %2002 = vmatpush1.bf16.msra.mxu0 %v1978
          %2003 = vmatprep.subr.bf16.mxu0 0
          %2004 = vmatpush1.bf16.msra.mxu0 %v1980
          %2005 = vmatprep.subr.bf16.mxu0 0
          %2006 = vmatpush1.bf16.msra.mxu0 %v1982
          %2007 = vmatprep.subr.bf16.mxu0 0
          %2008 = vmatpush1.bf16.msra.mxu0 %v1984
          %2009 = vmatprep.subr.bf16.mxu0 0
          %2010 = vmatpush1.bf16.msra.mxu0 0
          %2011 = vmatprep.subr.bf16.mxu0 0
          %2012 = vmatpush1.bf16.msra.mxu0 0
          %2013 = vmatprep.subr.bf16.mxu0 0
          %2014 = vmatpush1.bf16.msra.mxu0 0
          %2015 = vmatprep.subr.bf16.mxu0 0
          %2016 = vmatpush1.bf16.msra.mxu0 0
          %2017 = vmatprep.subr.bf16.mxu0 0
          %2018 = vmatpush1.bf16.msra.mxu0 0
          %2019 = vmatprep.subr.bf16.mxu0 0
          %2020 = vmatpush1.bf16.msra.mxu0 0
          %2021 = vmatprep.subr.bf16.mxu0 0
          %2022 = vmatpush1.bf16.msra.mxu0 0
          %2023 = vmatprep.subr.bf16.mxu0 0
          %2024 = vmatpush1.bf16.msra.mxu0 0
          %2025 = vmatprep.subr.bf16.mxu0 0
          %2026 = vmatpush1.bf16.msra.mxu0 0
          %2027 = vmatprep.subr.bf16.mxu0 0
          %2028 = vmatpush1.bf16.msra.mxu0 0
          %2029 = vmatprep.subr.bf16.mxu0 0
          %2030 = vmatpush1.bf16.msra.mxu0 0
          %2031 = vmatprep.subr.bf16.mxu0 0
          %2032 = vmatpush1.bf16.msra.mxu0 0
          %2033 = vmatprep.mubr.bf16.mxu0 0
          %2034 = vmatmul.mubr.bf16.gmra.mrb[0].mxu0 %v1990
          %v2035 = vpop.f32.mrb[0].mxu0
          %v2036 = vadd.f32 0.0, %v2035
          %v2037 = vpop.f32.mrb[0].mxu0
          %v2038 = vpop.f32.mrb[0].mxu0
          %v2039 = vadd.f32 0.0, %v2038
          %v2040 = vpop.f32.mrb[0].mxu0
          %2041 = vmatprep.mubr.bf16.mxu0 0
          %2042 = vmatmul.mubr.bf16.gmra.mrb[0].mxu0 %v1993
          %v2043 = vpop.f32.mrb[0].mxu0
          %v2044 = vadd.f32 0.0, %v2043
          %v2045 = vpop.f32.mrb[0].mxu0
          %v2046 = vpop.f32.mrb[0].mxu0
          %v2047 = vadd.f32 0.0, %v2046
          %v2048 = vpop.f32.mrb[0].mxu0
          %2049 = vmatprep.mubr.bf16.mxu0 0
          %2050 = vmatmul.mubr.bf16.gmra.mrb[0].mxu0 %v1996
          %v2051 = vpop.f32.mrb[0].mxu0
          %v2052 = vadd.f32 0.0, %v2051
          %v2053 = vpop.f32.mrb[0].mxu0
          %v2054 = vpop.f32.mrb[0].mxu0
          %v2055 = vadd.f32 0.0, %v2054
          %v2056 = vpop.f32.mrb[0].mxu0
          %2057 = vmatprep.mubr.bf16.mxu0 0
          %2058 = vmatmul.mubr.bf16.gmra.mrb[0].mxu0 %v1999
          %v2059 = vpop.f32.mrb[0].mxu0
          %v2060 = vadd.f32 0.0, %v2059
          %v2061 = vpop.f32.mrb[0].mxu0
          %v2062 = vpop.f32.mrb[0].mxu0
          %v2063 = vadd.f32 0.0, %v2062
          %v2064 = vpop.f32.mrb[0].mxu0
          %2065 = vdwg.mxu0
          %v2066 = vadd.f32 %v1965, %v2036
          %v2067 = vadd.f32 %v1966, %v2039
          %v2068 = vadd.f32 %v1967, %v2044
          %v2069 = vadd.f32 %v1968, %v2047
          %v2070 = vadd.f32 %v1969, %v2052
          %v2071 = vadd.f32 %v1970, %v2055
          %v2072 = vadd.f32 %v1971, %v2060
          %v2073 = vadd.f32 %v1972, %v2063
          %2074 = vst.msk [vmem:[%s1916] sm:$0xff] %vm1054, %v2066
          %2075 = vst.msk [vmem:[%s1916 + $0x8] sm:$0xff] %vm1054, %v2067
          %2076 = vst.msk [vmem:[%s1916 + $0x10] sm:$0xff] %vm1054, %v2068
          %2077 = vst.msk [vmem:[%s1916 + $0x18] sm:$0xff] %vm1054, %v2069
          %2078 = vst.msk [vmem:[%s1916 + $0x20] sm:$0xff] %vm1054, %v2070
          %2079 = vst.msk [vmem:[%s1916 + $0x28] sm:$0xff] %vm1054, %v2071
          %2080 = vst.msk [vmem:[%s1916 + $0x30] sm:$0xff] %vm1054, %v2072
          %2081 = vst.msk [vmem:[%s1916 + $0x38] sm:$0xff] %vm1054, %v2073
          %2082 = vst.msk [vmem:[%s1730] sm:$0xff] %vm1422, %v1763
          %2083 = vst.msk [vmem:[%s1730 + $0x8] sm:$0xff] %vm1422, %v1764
          %2084 = vst.msk [vmem:[%s1730 + $0x10] sm:$0xff] %vm1422, %v1765
          %2085 = vst.msk [vmem:[%s1730 + $0x18] sm:$0xff] %vm1422, %v1766
          %2086 = vst.msk [vmem:[%s1730 + $0x20] sm:$0xff] %vm1422, %v1767
          %2087 = vst.msk [vmem:[%s1730 + $0x28] sm:$0xff] %vm1422, %v1768
          %2088 = vst.msk [vmem:[%s1730 + $0x30] sm:$0xff] %vm1422, %v1769
          %2089 = vst.msk [vmem:[%s1730 + $0x38] sm:$0xff] %vm1422, %v1770
        $region179: #{pixtral_attention_forward.4} parent=158 // pred_fallthru
          _
        // Predicated region
        $region180: #{pixtral_attention_forward.4} parent=158 // pred_check
          %p2090 = pneg %p680
        $region181: #{pixtral_attention_forward.4} parent=158 // pred_check_branch
          %2092 = sbr.rel (%p2090) target = $region183
        $region182: #{pixtral_attention_forward.4} parent=158 // pred_region
          %v2093 = vld [vmem:[#allocation5] sm:$0xff]
          %v2094 = vld [vmem:[#allocation5 + $0x8] sm:$0xff]
          %v2095 = vld [vmem:[#allocation5 + $0x10] sm:$0xff]
          %v2096 = vld [vmem:[#allocation5 + $0x18] sm:$0xff]
          %v2097 = vld [vmem:[#allocation5 + $0x20] sm:$0xff]
          %v2098 = vld [vmem:[#allocation5 + $0x28] sm:$0xff]
          %v2099 = vld [vmem:[#allocation5 + $0x30] sm:$0xff]
          %v2100 = vld [vmem:[#allocation5 + $0x38] sm:$0xff]
          %v2101 = vld [vmem:[#allocation4] sm:$0xff]
          %v2102 = vld [vmem:[#allocation4 + $0x8] sm:$0xff]
          %v2103 = vld [vmem:[#allocation4 + $0x10] sm:$0xff]
          %v2104 = vld [vmem:[#allocation4 + $0x18] sm:$0xff]
          %v2105 = vld [vmem:[#allocation4 + $0x20] sm:$0xff]
          %v2106 = vld [vmem:[#allocation4 + $0x28] sm:$0xff]
          %v2107 = vld [vmem:[#allocation4 + $0x30] sm:$0xff]
          %v2108 = vld [vmem:[#allocation4 + $0x38] sm:$0xff]
          %v2109 = vrcp.pop %v2101
          %v2110 = vrcp.pop %v2102
          %v2111 = vrcp.pop %v2103
          %v2112 = vrcp.pop %v2104
          %v2113 = vrcp.pop %v2105
          %v2114 = vrcp.pop %v2106
          %v2115 = vrcp.pop %v2107
          %v2116 = vrcp.pop %v2108
          %2118 = vset.pattern.permute.xlu0 0
          %2119 = vperm.xlu0 %2118, %v2109
          %v2120 = vpop.permute.xlu0 %2119
          %2123 = vset.pattern.permute.xlu0 0
          %2124 = vperm.xlu0 %2123, %v2110
          %v2125 = vpop.permute.xlu0 %2124
          %2128 = vset.pattern.permute.xlu0 0
          %2129 = vperm.xlu0 %2128, %v2111
          %v2130 = vpop.permute.xlu0 %2129
          %2133 = vset.pattern.permute.xlu0 0
          %2134 = vperm.xlu0 %2133, %v2112
          %v2135 = vpop.permute.xlu0 %2134
          %2138 = vset.pattern.permute.xlu0 0
          %2139 = vperm.xlu0 %2138, %v2113
          %v2140 = vpop.permute.xlu0 %2139
          %2143 = vset.pattern.permute.xlu0 0
          %2144 = vperm.xlu0 %2143, %v2114
          %v2145 = vpop.permute.xlu0 %2144
          %2148 = vset.pattern.permute.xlu0 0
          %2149 = vperm.xlu0 %2148, %v2115
          %v2150 = vpop.permute.xlu0 %2149
          %2153 = vset.pattern.permute.xlu0 0
          %2154 = vperm.xlu0 %2153, %v2116
          %v2155 = vpop.permute.xlu0 %2154
          %v2157 = vmul.f32 %v2093, %v2120
          %v2158 = vmul.f32 %v2094, %v2125
          %v2159 = vmul.f32 %v2095, %v2130
          %v2160 = vmul.f32 %v2096, %v2135
          %v2161 = vmul.f32 %v2097, %v2140
          %v2162 = vmul.f32 %v2098, %v2145
          %v2163 = vmul.f32 %v2099, %v2150
          %v2164 = vmul.f32 %v2100, %v2155
          %s2165 = scalar_lea.vmem [#allocation5], 64
          %v2166 = vld [vmem:[%s2165] sm:$0xff]
          %v2167 = vld [vmem:[%s2165 + $0x8] sm:$0xff]
          %v2168 = vld [vmem:[%s2165 + $0x10] sm:$0xff]
          %v2169 = vld [vmem:[%s2165 + $0x18] sm:$0xff]
          %v2170 = vld [vmem:[%s2165 + $0x20] sm:$0xff]
          %v2171 = vld [vmem:[%s2165 + $0x28] sm:$0xff]
          %v2172 = vld [vmem:[%s2165 + $0x30] sm:$0xff]
          %v2173 = vld [vmem:[%s2165 + $0x38] sm:$0xff]
          %s2174 = scalar_lea.vmem [#allocation4], 64
          %v2175 = vld [vmem:[%s2174] sm:$0xff]
          %v2176 = vld [vmem:[%s2174 + $0x8] sm:$0xff]
          %v2177 = vld [vmem:[%s2174 + $0x10] sm:$0xff]
          %v2178 = vld [vmem:[%s2174 + $0x18] sm:$0xff]
          %v2179 = vld [vmem:[%s2174 + $0x20] sm:$0xff]
          %v2180 = vld [vmem:[%s2174 + $0x28] sm:$0xff]
          %v2181 = vld [vmem:[%s2174 + $0x30] sm:$0xff]
          %v2182 = vld [vmem:[%s2174 + $0x38] sm:$0xff]
          %v2183 = vrcp.pop %v2175
          %v2184 = vrcp.pop %v2176
          %v2185 = vrcp.pop %v2177
          %v2186 = vrcp.pop %v2178
          %v2187 = vrcp.pop %v2179
          %v2188 = vrcp.pop %v2180
          %v2189 = vrcp.pop %v2181
          %v2190 = vrcp.pop %v2182
          %2192 = vset.pattern.permute.xlu0 0
          %2193 = vperm.xlu0 %2192, %v2183
          %v2194 = vpop.permute.xlu0 %2193
          %2197 = vset.pattern.permute.xlu0 0
          %2198 = vperm.xlu0 %2197, %v2184
          %v2199 = vpop.permute.xlu0 %2198
          %2202 = vset.pattern.permute.xlu0 0
          %2203 = vperm.xlu0 %2202, %v2185
          %v2204 = vpop.permute.xlu0 %2203
          %2207 = vset.pattern.permute.xlu0 0
          %2208 = vperm.xlu0 %2207, %v2186
          %v2209 = vpop.permute.xlu0 %2208
          %2212 = vset.pattern.permute.xlu0 0
          %2213 = vperm.xlu0 %2212, %v2187
          %v2214 = vpop.permute.xlu0 %2213
          %2217 = vset.pattern.permute.xlu0 0
          %2218 = vperm.xlu0 %2217, %v2188
          %v2219 = vpop.permute.xlu0 %2218
          %2222 = vset.pattern.permute.xlu0 0
          %2223 = vperm.xlu0 %2222, %v2189
          %v2224 = vpop.permute.xlu0 %2223
          %2227 = vset.pattern.permute.xlu0 0
          %2228 = vperm.xlu0 %2227, %v2190
          %v2229 = vpop.permute.xlu0 %2228
          %v2231 = vmul.f32 %v2166, %v2194
          %v2232 = vmul.f32 %v2167, %v2199
          %v2233 = vmul.f32 %v2168, %v2204
          %v2234 = vmul.f32 %v2169, %v2209
          %v2235 = vmul.f32 %v2170, %v2214
          %v2236 = vmul.f32 %v2171, %v2219
          %v2237 = vmul.f32 %v2172, %v2224
          %v2238 = vmul.f32 %v2173, %v2229
          %2247 = vrot.lane.b32.xlu0 %v2231, 64
          %v2248 = vpop.permute.xlu0 %2247
          %2249 = vrot.lane.b32.xlu0 %v2232, 64
          %v2250 = vpop.permute.xlu0 %2249
          %2251 = vrot.lane.b32.xlu0 %v2233, 64
          %v2252 = vpop.permute.xlu0 %2251
          %2253 = vrot.lane.b32.xlu0 %v2234, 64
          %v2254 = vpop.permute.xlu0 %2253
          %2255 = vrot.lane.b32.xlu0 %v2235, 64
          %v2256 = vpop.permute.xlu0 %2255
          %2257 = vrot.lane.b32.xlu0 %v2236, 64
          %v2258 = vpop.permute.xlu0 %2257
          %2259 = vrot.lane.b32.xlu0 %v2237, 64
          %v2260 = vpop.permute.xlu0 %2259
          %2261 = vrot.lane.b32.xlu0 %v2238, 64
          %v2262 = vpop.permute.xlu0 %2261
          %vm2271 = vcmask 523264
          %v2272 = vsel %vm2271, %v2157, %v2248
          %v2273 = vsel %vm2271, %v2158, %v2250
          %v2274 = vsel %vm2271, %v2159, %v2252
          %v2275 = vsel %vm2271, %v2160, %v2254
          %v2276 = vsel %vm2271, %v2161, %v2256
          %v2277 = vsel %vm2271, %v2162, %v2258
          %v2278 = vsel %vm2271, %v2163, %v2260
          %v2279 = vsel %vm2271, %v2164, %v2262
          %v2280 = vpack.c.bf16 %v2273, %v2272
          %v2281 = vpack.c.bf16 %v2275, %v2274
          %v2282 = vpack.c.bf16 %v2277, %v2276
          %v2283 = vpack.c.bf16 %v2279, %v2278
          %v2288 = vunpack.c.l.b16 %v2280
          %v2289 = vunpack.c.h.b16 %v2280
          %v2290 = vunpack.c.l.b16 %v2281
          %v2291 = vunpack.c.h.b16 %v2281
          %v2292 = vunpack.c.l.b16 %v2282
          %v2293 = vunpack.c.h.b16 %v2282
          %v2294 = vunpack.c.l.b16 %v2283
          %v2295 = vunpack.c.h.b16 %v2283
          %v2296 = vpack.c.b16 %v2288, %v2288
          %v2297 = vpack.c.b16 %v2289, %v2289
          %v2298 = vpack.c.b16 %v2290, %v2290
          %v2299 = vpack.c.b16 %v2291, %v2291
          %v2300 = vpack.c.b16 %v2292, %v2292
          %v2301 = vpack.c.b16 %v2293, %v2293
          %v2302 = vpack.c.b16 %v2294, %v2294
          %v2303 = vpack.c.b16 %v2295, %v2295
          %2312 = vst [vmem:[%s641] sm:$0xf] %v2296
          %2313 = vst [vmem:[%s641 + $0x4] sm:$0xf] %v2297
          %2314 = vst [vmem:[%s641 + $0x8] sm:$0xf] %v2298
          %2315 = vst [vmem:[%s641 + $0xc] sm:$0xf] %v2299
          %2316 = vst [vmem:[%s641 + $0x10] sm:$0xf] %v2300
          %2317 = vst [vmem:[%s641 + $0x14] sm:$0xf] %v2301
          %2318 = vst [vmem:[%s641 + $0x18] sm:$0xf] %v2302
          %2319 = vst [vmem:[%s641 + $0x1c] sm:$0xf] %v2303
        $region183: #{pixtral_attention_forward.4} parent=158 // pred_fallthru
          _
        %s2320 = sand.u32 %s260, 1
        %s2321 = sand.u32 %s260, 1
        %s2322 = smul.addr %s2321, 32
        %s2323 = scalar_lea.vmem [#allocation12], %s2322
        // Predicated region
        $region184: #{pixtral_attention_forward.4} parent=158 // pred_check
          %p2324 = pneg %p270
        $region185: #{pixtral_attention_forward.4} parent=158 // pred_check_branch
          %2326 = sbr.rel (%p2324) target = $region187
        $region186: #{pixtral_attention_forward.4} parent=158 // pred_region
          %s2327 = smul.u32 8, %s38
          %s2328 = smul.addr %s2327, 2
          %s2329 = sadd.s32 %s37, %s2328
          %s2330 = smul.addr %s36, 16
          %s2331 = sadd.s32 %s2329, %s2330
          %s2332 = smul.addr %s2331, 4
          %s2333 = scalar_lea.vmem %s9, %s2332
          // Predicated region
          $region188: #{pixtral_attention_forward.4} parent=186 // pred_check
            _
          $region189: #{pixtral_attention_forward.4} parent=186 // pred_check_branch
            %2335 = sbr.rel (0) target = $region191
          $region190: #{pixtral_attention_forward.4} parent=186 // pred_region
            // Predicated region
            $region192: #{pixtral_attention_forward.4} parent=190 // pred_check
              _
            $region193: #{pixtral_attention_forward.4} parent=190 // pred_check_branch
              %2337 = sbr.rel target = $region195
            $region194: #{pixtral_attention_forward.4} parent=190 // pred_region
              // Predicated region
              $region207: #{pixtral_attention_forward.4} parent=194 // pred_check
                _
              $region208: #{pixtral_attention_forward.4} parent=194 // pred_check_branch
                %2366 = sbr.rel (0) target = $region210
              $region209: #{pixtral_attention_forward.4} parent=194 // pred_region
                loop: start=0, step=1, limit=1
                $region211: #{pixtral_attention_forward.4} parent=209 // loop_pre_header
                  _
                $region212: #{pixtral_attention_forward.4} parent=209 // loop_header
                  %s2368 = sphi 0, %s2372
                  %p2369 = scmp.ge.s32.totalorder %s2368, 1
                  %s2373 = sphi %s2323, %s2323
                  %s2374 = sphi %s2333, %s2333
                $region213: #{pixtral_attention_forward.4} parent=209 // loop_header_branch
                  %2371 = sbr.rel (%p2369) target = $region217
                $region214: #{pixtral_attention_forward.4} parent=209 // loop_body
                  _
                $region215: #{pixtral_attention_forward.4} parent=209 // loop_footer
                  %s2372 = sadd.s32 1, %s2368
                $region216: #{pixtral_attention_forward.4} parent=209 // loop_footer_branch
                  %2367 = sbr.rel target = $region212
                $region217: #{pixtral_attention_forward.4} parent=209 // loop_exit
                  _
                loop: start=0, step=1, limit=1
                $region218: #{pixtral_attention_forward.4} parent=209 // loop_pre_header
                  _
                $region219: #{pixtral_attention_forward.4} parent=209 // loop_header
                  %s2377 = sphi 0, %s2381
                  %p2378 = scmp.ge.s32.totalorder %s2377, 1
                  %s2382 = sphi %s2323, %s2323
                  %s2383 = sphi %s2333, %s2333
                $region220: #{pixtral_attention_forward.4} parent=209 // loop_header_branch
                  %2380 = sbr.rel (%p2378) target = $region224
                $region221: #{pixtral_attention_forward.4} parent=209 // loop_body
                  %v2384 = vld [vmem:[%s2382] sm:$0xf]
                  %2385 = vst [vmem:[%s2383] sm:$0xf] %v2384
                  %v2386 = vld [vmem:[%s2382 + $0x4] sm:$0xf]
                  %2387 = vst [vmem:[%s2383 + $0x8] sm:$0xf] %v2386
                  %v2388 = vld [vmem:[%s2382 + $0x8] sm:$0xf]
                  %2389 = vst [vmem:[%s2383 + $0x10] sm:$0xf] %v2388
                  %v2390 = vld [vmem:[%s2382 + $0xc] sm:$0xf]
                  %2391 = vst [vmem:[%s2383 + $0x18] sm:$0xf] %v2390
                  %v2392 = vld [vmem:[%s2382 + $0x10] sm:$0xf]
                  %2393 = vst [vmem:[%s2383 + $0x20] sm:$0xf] %v2392
                  %v2394 = vld [vmem:[%s2382 + $0x14] sm:$0xf]
                  %2395 = vst [vmem:[%s2383 + $0x28] sm:$0xf] %v2394
                  %v2396 = vld [vmem:[%s2382 + $0x18] sm:$0xf]
                  %2397 = vst [vmem:[%s2383 + $0x30] sm:$0xf] %v2396
                  %v2398 = vld [vmem:[%s2382 + $0x1c] sm:$0xf]
                  %2399 = vst [vmem:[%s2383 + $0x38] sm:$0xf] %v2398
                $region222: #{pixtral_attention_forward.4} parent=209 // loop_footer
                  %s2381 = sadd.s32 1, %s2377
                $region223: #{pixtral_attention_forward.4} parent=209 // loop_footer_branch
                  %2376 = sbr.rel target = $region219
                $region224: #{pixtral_attention_forward.4} parent=209 // loop_exit
                  _
              $region210: #{pixtral_attention_forward.4} parent=194 // pred_fallthru
                _
            $region195: #{pixtral_attention_forward.4} parent=190 // pred_fallthru
              _
            // Predicated region
            $region196: #{pixtral_attention_forward.4} parent=190 // pred_check
              _
            $region197: #{pixtral_attention_forward.4} parent=190 // pred_check_branch
              %2339 = sbr.rel (0) target = $region199
            $region198: #{pixtral_attention_forward.4} parent=190 // pred_region
              loop: start=0, step=1, limit=1
              $region200: #{pixtral_attention_forward.4} parent=198 // loop_pre_header
                _
              $region201: #{pixtral_attention_forward.4} parent=198 // loop_header
                %s2342 = sphi 0, %s2346
                %p2343 = scmp.ge.s32.totalorder %s2342, 1
                %s2347 = sphi %s2323, %s2323
                %s2348 = sphi %s2333, %s2333
              $region202: #{pixtral_attention_forward.4} parent=198 // loop_header_branch
                %2345 = sbr.rel (%p2343) target = $region206
              $region203: #{pixtral_attention_forward.4} parent=198 // loop_body
                %v2349 = vld [vmem:[%s2347] sm:$0xf]
                %2350 = vst [vmem:[%s2348] sm:$0xf] %v2349
                %v2351 = vld [vmem:[%s2347 + $0x4] sm:$0xf]
                %2352 = vst [vmem:[%s2348 + $0x8] sm:$0xf] %v2351
                %v2353 = vld [vmem:[%s2347 + $0x8] sm:$0xf]
                %2354 = vst [vmem:[%s2348 + $0x10] sm:$0xf] %v2353
                %v2355 = vld [vmem:[%s2347 + $0xc] sm:$0xf]
                %2356 = vst [vmem:[%s2348 + $0x18] sm:$0xf] %v2355
                %v2357 = vld [vmem:[%s2347 + $0x10] sm:$0xf]
                %2358 = vst [vmem:[%s2348 + $0x20] sm:$0xf] %v2357
                %v2359 = vld [vmem:[%s2347 + $0x14] sm:$0xf]
                %2360 = vst [vmem:[%s2348 + $0x28] sm:$0xf] %v2359
                %v2361 = vld [vmem:[%s2347 + $0x18] sm:$0xf]
                %2362 = vst [vmem:[%s2348 + $0x30] sm:$0xf] %v2361
                %v2363 = vld [vmem:[%s2347 + $0x1c] sm:$0xf]
                %2364 = vst [vmem:[%s2348 + $0x38] sm:$0xf] %v2363
              $region204: #{pixtral_attention_forward.4} parent=198 // loop_footer
                %s2346 = sadd.s32 1, %s2342
              $region205: #{pixtral_attention_forward.4} parent=198 // loop_footer_branch
                %2341 = sbr.rel target = $region201
              $region206: #{pixtral_attention_forward.4} parent=198 // loop_exit
                _
            $region199: #{pixtral_attention_forward.4} parent=190 // pred_fallthru
              _
          $region191: #{pixtral_attention_forward.4} parent=186 // pred_fallthru
            _
          %2400 = vnop
        $region187: #{pixtral_attention_forward.4} parent=158 // pred_fallthru
          _
      $region159: #{pixtral_attention_forward.4} parent=5 // pred_fallthru
        _
      %p2401 = scmp.le.s32.totalorder 2, %s25
      // Predicated region
      $region225: #{pixtral_attention_forward.4} parent=5 // pred_check
        %p2402 = pneg %p2401
      $region226: #{pixtral_attention_forward.4} parent=5 // pred_check_branch
        %2404 = sbr.rel (%p2402) target = $region228
      $region227: #{pixtral_attention_forward.4} parent=5 // pred_region
        %s2405 = ssub.s32 %s25, 2
        // Predicated region
        $region229: #{pixtral_attention_forward.4} parent=227 // pred_check
          %p2406 = pneg %p276
        $region230: #{pixtral_attention_forward.4} parent=227 // pred_check_branch
          %2408 = sbr.rel (%p2406) target = $region232
        $region231: #{pixtral_attention_forward.4} parent=227 // pred_region
          %s2409 = sand.u32 %s261, 1
          %s2410 = sand.u32 %s261, 1
          %s2411 = smul.addr %s2410, 32
          %s2412 = scalar_lea.vmem [#allocation12], %s2411
        $region232: #{pixtral_attention_forward.4} parent=227 // pred_fallthru
          _
      $region228: #{pixtral_attention_forward.4} parent=5 // pred_fallthru
        _
    $region6: #{pixtral_attention_forward.4} parent=1 // loop_footer
      %s29 = sadd.s32 1, %s25
    $region7: #{pixtral_attention_forward.4} parent=1 // loop_footer_branch
      %24 = sbr.rel target = $region3
    $region8: #{pixtral_attention_forward.4} parent=1 // loop_exit
      _

</llo_original>
